<compile_context>
chip_gen: v5e
topology: v5e:2x2
jax: 0.10.0
libtpu: 0.0.40
codegen_flags: <defaults>
</compile_context>

<pallas_src>
import jax
import jax.numpy as jnp
from jax.experimental import pallas as pl
from jax.experimental.pallas import tpu as pltpu

# ---- small synthetic shapes consistent with the module ----
N_CTX = 8                    # n_ctx context tokens (module hard-codes 8)
CTX_DIM = 128                # clip_model.ln_final.weight.shape[0]
HID = CTX_DIM // 2           # LSTM hidden size (bidirectional -> 2*HID = CTX_DIM)
N_CLS = 4                    # number of classnames
SEQ_TOTAL = 24               # synthetic tokenized-prompt length (real CLIP: 77)
N_SUFFIX = SEQ_TOTAL - 1 - N_CTX


# ---------------------------------------------------------------------------
# Fused kernel: 2-layer bidirectional LSTM + residual + prompt assembly
# ---------------------------------------------------------------------------
def _prompt_learner_kernel(ctx_ref, wih_ref, whh_ref, b_ref,
                           prefix_ref, suffix_ref, out_ref, hrows_ref):
    """ctx_ref: (L, D); wih_ref/whh_ref: (2, D, 4D) bf16 packed; b_ref: (2, 1, 4D) f32;
    prefix_ref: (n_cls, 1, D); suffix_ref: (n_cls, n_sfx, D);
    out_ref: (n_cls, 1+L+n_sfx, D); hrows_ref: (2, L, D) f32 scratch."""
    L, D = ctx_ref.shape
    H = D // 2                    # hidden per direction
    G = 4 * D                     # packed gate width (both directions)
    n_cls = prefix_ref.shape[0]

    x0 = ctx_ref[...].astype(jnp.float32)

    # lanes belonging to the backward direction inside each 128-wide gate slab
    bwd_cols = (jax.lax.broadcasted_iota(jnp.int32, (1, G), 1) % D) >= H   # (1, 4D)

    def bilstm_layer(inp, layer):
        wih = wih_ref[layer]                 # (D, 4D) bf16
        whh = whh_ref[layer]                 # (D, 4D) bf16, block-diag over dirs
        b = b_ref[layer]                     # (1, 4D) f32 (b_ih + b_hh)

        # Batched input projection: all timesteps, both directions, one MXU op.
        xp = jnp.dot(inp.astype(jnp.bfloat16), wih,
                     preferred_element_type=jnp.float32) + b               # (L, 4D)

        h = jnp.zeros((1, D), jnp.float32)   # packed [h_fwd | h_bwd]
        c = jnp.zeros((1, D), jnp.float32)
        for s in range(L):                   # statically unrolled, L = 8
            # fwd consumes timestep s, bwd consumes timestep L-1-s (static slices)
            gin = jnp.where(bwd_cols, xp[L - 1 - s:L - s, :], xp[s:s + 1, :])
            gates = gin + jnp.dot(h.astype(jnp.bfloat16), whh,
                                  preferred_element_type=jnp.float32)      # (1, 4D)
            # PyTorch gate order i, f, g, o; each slab is a full 128-lane vreg
            i_g = jax.nn.sigmoid(gates[:, 0 * D:1 * D])
            f_g = jax.nn.sigmoid(gates[:, 1 * D:2 * D])
            g_g = jnp.tanh(gates[:, 2 * D:3 * D])
            o_g = jax.nn.sigmoid(gates[:, 3 * D:4 * D])
            c = f_g * c + i_g * g_g
            h = o_g * jnp.tanh(c)
            # scatter packed hidden straight into the ordered output rows
            hrows_ref[layer, s:s + 1, 0:H] = h[:, 0:H]            # fwd -> row s
            hrows_ref[layer, L - 1 - s:L - s, H:D] = h[:, H:D]    # bwd -> row L-1-s
        return hrows_ref[layer]              # (L, D), already time-ordered

    l0 = bilstm_layer(x0, 0)
    # inter-layer dropout (p=0.05) is identity at inference time
    l1 = bilstm_layer(l0, 1)
    ctx_out = (l1 + x0).astype(out_ref.dtype)          # PromptEncoder residual

    # prompts = cat([prefix, expand(ctx), suffix], dim=1) for all classes at once
    out_ref[:, 0:1, :] = prefix_ref[...]
    out_ref[:, 1:1 + L, :] = jnp.broadcast_to(ctx_out[None, :, :], (n_cls, L, D))
    out_ref[:, 1 + L:, :] = suffix_ref[...]


def prompt_learner_forward(ctx, wih_packed, whh_packed, b_packed,
                           token_prefix, token_suffix):
    L, D = ctx.shape
    n_cls = token_prefix.shape[0]
    seq = 1 + L + token_suffix.shape[1]
    return pl.pallas_call(
        _prompt_learner_kernel,
        out_shape=jax.ShapeDtypeStruct((n_cls, seq, D), ctx.dtype),
        in_specs=[pl.BlockSpec(memory_space=pltpu.MemorySpace.VMEM)] * 6,
        out_specs=pl.BlockSpec(memory_space=pltpu.MemorySpace.VMEM),
        scratch_shapes=[pltpu.VMEM((2, L, D), jnp.float32)],   # one (L,D) slab per layer
    )(ctx, wih_packed, whh_packed, b_packed, token_prefix, token_suffix)


# ---------------------------------------------------------------------------
# Host-side packing of PyTorch-layout LSTM params into the fused kernel layout
# ---------------------------------------------------------------------------
def pack_bilstm_params(w_ih, w_hh, b_ih, b_hh):
    """w_ih: (n_layers, 2, 4H, D); w_hh: (n_layers, 2, 4H, H); b_*: (n_layers, 2, 4H).
    Returns:
      w_ih_packed: (n_layers, D, 4D) bf16, columns [i_f|i_b|f_f|f_b|g_f|g_b|o_f|o_b]
      w_hh_packed: (n_layers, D, 4D) bf16, block-diagonal over the two directions
      b_packed:    (n_layers, 1, 4D) f32,  b_ih + b_hh in the same column order
    """
    n_layers, n_dirs, fourH, D = w_ih.shape
    H = fourH // 4
    wih_l, whh_l, b_l = [], [], []
    for l in range(n_layers):
        ih_cols, hh_cols, b_cols = [], [], []
        for g in range(4):                        # PyTorch gate order i, f, g, o
            for d in range(n_dirs):               # fwd, bwd share one 128-lane slab
                ih_cols.append(w_ih[l, d, g * H:(g + 1) * H, :].T)          # (D, H)
                blk = jnp.zeros((n_dirs * H, H), w_hh.dtype)
                blk = blk.at[d * H:(d + 1) * H, :].set(
                    w_hh[l, d, g * H:(g + 1) * H, :].T)                     # (2H, H)
                hh_cols.append(blk)
                b_cols.append(b_ih[l, d, g * H:(g + 1) * H]
                              + b_hh[l, d, g * H:(g + 1) * H])
        wih_l.append(jnp.concatenate(ih_cols, axis=1))
        whh_l.append(jnp.concatenate(hh_cols, axis=1))
        b_l.append(jnp.concatenate(b_cols, axis=0)[None, :])
    return (jnp.stack(wih_l).astype(jnp.bfloat16),
            jnp.stack(whh_l).astype(jnp.bfloat16),
            jnp.stack(b_l).astype(jnp.float32))


# ---------------------------------------------------------------------------
# Pure-JAX f32 reference (standard per-direction LSTM math) for correctness
# ---------------------------------------------------------------------------
def lstm2_residual_ref(x, w_ih, w_hh, b_ih, b_hh):
    n_layers = w_ih.shape[0]
    H = w_hh.shape[-1]

    def run(inp, l, d, reverse):
        L = inp.shape[0]
        wih_t, whh_t = w_ih[l, d].T, w_hh[l, d].T
        b = (b_ih[l, d] + b_hh[l, d])[None, :]
        h = jnp.zeros((1, H), jnp.float32)
        c = jnp.zeros((1, H), jnp.float32)
        outs = [None] * L
        ts = range(L - 1, -1, -1) if reverse else range(L)
        for t in ts:
            gates = inp[t:t + 1] @ wih_t + h @ whh_t + b
            i = jax.nn.sigmoid(gates[:, :H])
            f = jax.nn.sigmoid(gates[:, H:2 * H])
            g = jnp.tanh(gates[:, 2 * H:3 * H])
            o = jax.nn.sigmoid(gates[:, 3 * H:])
            c = f * c + i * g
            h = o * jnp.tanh(c)
            outs[t] = h
        return jnp.concatenate(outs, 0)

    out = x
    for l in range(n_layers):
        out = jnp.concatenate([run(out, l, 0, False), run(out, l, 1, True)], axis=-1)
    return out + x


if __name__ == "__main__":
    key = jax.random.PRNGKey(0)
    k_ctx, k_wih, k_whh, k_bih, k_bhh, k_pre, k_suf = jax.random.split(key, 7)

    # nn.init.normal_(ctx_vectors, std=0.02)
    ctx = 0.02 * jax.random.normal(k_ctx, (N_CTX, CTX_DIM), jnp.float32)

    # PyTorch-layout LSTM params, U(-1/sqrt(H), 1/sqrt(H)), indexed [layer, dir].
    # Both layers see CTX_DIM inputs (layer-1 input = 2*HID = CTX_DIM).
    bound = 1.0 / (HID ** 0.5)
    w_ih = jax.random.uniform(k_wih, (2, 2, 4 * HID, CTX_DIM), jnp.float32, -bound, bound)
    w_hh = jax.random.uniform(k_whh, (2, 2, 4 * HID, HID), jnp.float32, -bound, bound)
    b_ih = jax.random.uniform(k_bih, (2, 2, 4 * HID), jnp.float32, -bound, bound)
    b_hh = jax.random.uniform(k_bhh, (2, 2, 4 * HID), jnp.float32, -bound, bound)

    # Synthetic CLIP token embeddings for prefix (SOS) and suffix (classname+EOS+pad).
    # TODO(synk): real module builds these with clip.tokenize + clip_model.token_embedding.
    token_prefix = jax.random.normal(k_pre, (N_CLS, 1, CTX_DIM), jnp.float32)
    token_suffix = jax.random.normal(k_suf, (N_CLS, N_SUFFIX, CTX_DIM), jnp.float32)

    wih_p, whh_p, b_p = pack_bilstm_params(w_ih, w_hh, b_ih, b_hh)

    prompts = prompt_learner_forward(ctx, wih_p, whh_p, b_p, token_prefix, token_suffix)
    prompts = jax.block_until_ready(prompts)

    # reference check (f32; bf16 MXU operands in the kernel stay well inside 2e-2)
    ctx_ref_out = lstm2_residual_ref(ctx, w_ih, w_hh, b_ih, b_hh)
    ctx_b = jnp.broadcast_to(ctx_ref_out[None], (N_CLS, N_CTX, CTX_DIM))
    prompts_ref = jnp.concatenate([token_prefix, ctx_b, token_suffix], axis=1)

    assert prompts.shape == (N_CLS, SEQ_TOTAL, CTX_DIM), prompts.shape
    err = float(jnp.max(jnp.abs(prompts - prompts_ref)))
    assert jnp.allclose(prompts, prompts_ref, atol=2e-2, rtol=2e-2), err
    print("KERNEL_OK")
</pallas_src>

<mosaic_0001>
module attributes {stable_mosaic.version = 11 : i64} {
  func.func @_prompt_learner_kernel(%arg0: memref<8x128xf32, #tpu.memory_space<vmem>>, %arg1: memref<2x128x512xbf16, #tpu.memory_space<vmem>>, %arg2: memref<2x128x512xbf16, #tpu.memory_space<vmem>>, %arg3: memref<2x1x512xf32, #tpu.memory_space<vmem>>, %arg4: memref<4x1x128xf32, #tpu.memory_space<vmem>>, %arg5: memref<4x15x128xf32, #tpu.memory_space<vmem>>, %arg6: memref<4x24x128xf32, #tpu.memory_space<vmem>>, %arg7: memref<2x8x128xf32, #tpu.memory_space<vmem>>) attributes {dimension_semantics = [], scalar_prefetch = 0 : i64, scratch_operands = 1 : i64, tpu.core_type = #tpu.core_type<tc>} {
    %c0 = arith.constant 0 : index
    %c0_0 = arith.constant 0 : index
    %0 = vector.load %arg0[%c0, %c0_0] : memref<8x128xf32, #tpu.memory_space<vmem>>, vector<8x128xf32>
    %1 = tpu.iota {dimensions = array<i32: 1>} : vector<1x512xi32>
    %c128_i32 = arith.constant 128 : i32
    %c0_i32 = arith.constant 0 : i32
    %2 = arith.cmpi eq, %c128_i32, %c0_i32 : i32
    %c1_i32 = arith.constant 1 : i32
    %3 = arith.select %2, %c1_i32, %c128_i32 : i32
    %4 = vector.broadcast %3 : i32 to vector<1x512xi32>
    %5 = arith.remsi %1, %4 : vector<1x512xi32>
    %c0_i32_1 = arith.constant 0 : i32
    %6 = vector.broadcast %c0_i32_1 : i32 to vector<1x512xi32>
    %7 = arith.cmpi ne, %5, %6 : vector<1x512xi32>
    %c0_i32_2 = arith.constant 0 : i32
    %8 = vector.broadcast %c0_i32_2 : i32 to vector<1x512xi32>
    %9 = arith.cmpi slt, %5, %8 : vector<1x512xi32>
    %c0_i32_3 = arith.constant 0 : i32
    %10 = arith.cmpi slt, %3, %c0_i32_3 : i32
    %11 = vector.broadcast %10 : i1 to vector<1x512xi1>
    %12 = vector.broadcast %11 : vector<1x512xi1> to vector<1x512xi1>
    %13 = arith.xori %9, %12 : vector<1x512xi1>
    %14 = arith.andi %13, %7 : vector<1x512xi1>
    %15 = vector.broadcast %3 : i32 to vector<1x512xi32>
    %16 = arith.addi %5, %15 : vector<1x512xi32>
    %17 = arith.select %14, %16, %5 : vector<1x512xi1>, vector<1x512xi32>
    %c64_i32 = arith.constant 64 : i32
    %18 = vector.broadcast %c64_i32 : i32 to vector<1x512xi32>
    %19 = arith.cmpi sge, %17, %18 : vector<1x512xi32>
    %c0_4 = arith.constant 0 : index
    %c0_5 = arith.constant 0 : index
    %c0_6 = arith.constant 0 : index
    %20 = vector.load %arg1[%c0_4, %c0_5, %c0_6] : memref<2x128x512xbf16, #tpu.memory_space<vmem>>, vector<1x128x512xbf16>
    %21 = vector.shape_cast %20 : vector<1x128x512xbf16> to vector<128x512xbf16>
    %c0_7 = arith.constant 0 : index
    %c0_8 = arith.constant 0 : index
    %c0_9 = arith.constant 0 : index
    %22 = vector.load %arg2[%c0_7, %c0_8, %c0_9] : memref<2x128x512xbf16, #tpu.memory_space<vmem>>, vector<1x128x512xbf16>
    %23 = vector.shape_cast %22 : vector<1x128x512xbf16> to vector<128x512xbf16>
    %c0_10 = arith.constant 0 : index
    %c0_11 = arith.constant 0 : index
    %c0_12 = arith.constant 0 : index
    %24 = vector.load %arg3[%c0_10, %c0_11, %c0_12] : memref<2x1x512xf32, #tpu.memory_space<vmem>>, vector<1x1x512xf32>
    %25 = vector.shape_cast %24 : vector<1x1x512xf32> to vector<1x512xf32>
    %26 = arith.truncf %0 : vector<8x128xf32> to vector<8x128xbf16>
    %cst = arith.constant dense<0.000000e+00> : vector<8x512xf32>
    %27 = tpu.matmul %26, %21, %cst {dimension_numbers = #tpu.dot_dimension_numbers<[1], [0], [0], [1], [0, 0, 1, 1], [], []>} : vector<8x128xbf16>, vector<128x512xbf16>, vector<8x512xf32> -> vector<8x512xf32>
    %28 = vector.broadcast %25 : vector<1x512xf32> to vector<8x512xf32>
    %29 = arith.addf %27, %28 : vector<8x512xf32>
    %cst_13 = arith.constant 0.000000e+00 : f32
    %30 = vector.broadcast %cst_13 : f32 to vector<1x128xf32>
    %cst_14 = arith.constant 0.000000e+00 : f32
    %31 = vector.broadcast %cst_14 : f32 to vector<1x128xf32>
    %32 = vector.extract_strided_slice %29 {offsets = [7, 0], sizes = [1, 512], strides = [1, 1]} : vector<8x512xf32> to vector<1x512xf32>
    %33 = vector.extract_strided_slice %29 {offsets = [0, 0], sizes = [1, 512], strides = [1, 1]} : vector<8x512xf32> to vector<1x512xf32>
    %34 = arith.select %19, %32, %33 : vector<1x512xi1>, vector<1x512xf32>
    %35 = arith.truncf %30 : vector<1x128xf32> to vector<1x128xbf16>
    %cst_15 = arith.constant dense<0.000000e+00> : vector<1x512xf32>
    %36 = tpu.matmul %35, %23, %cst_15 {dimension_numbers = #tpu.dot_dimension_numbers<[1], [0], [0], [1], [0, 0, 1, 1], [], []>} : vector<1x128xbf16>, vector<128x512xbf16>, vector<1x512xf32> -> vector<1x512xf32>
    %37 = arith.addf %34, %36 : vector<1x512xf32>
    %38 = vector.extract_strided_slice %37 {offsets = [0, 0], sizes = [1, 128], strides = [1, 1]} : vector<1x512xf32> to vector<1x128xf32>
    %39 = arith.negf %38 : vector<1x128xf32>
    %40 = math.exp %39 : vector<1x128xf32>
    %cst_16 = arith.constant 1.000000e+00 : f32
    %41 = vector.broadcast %cst_16 : f32 to vector<1x128xf32>
    %42 = arith.addf %41, %40 : vector<1x128xf32>
    %43 = arith.divf %41, %42 : vector<1x128xf32>
    %44 = vector.extract_strided_slice %37 {offsets = [0, 128], sizes = [1, 128], strides = [1, 1]} : vector<1x512xf32> to vector<1x128xf32>
    %45 = arith.negf %44 : vector<1x128xf32>
    %46 = math.exp %45 : vector<1x128xf32>
    %cst_17 = arith.constant 1.000000e+00 : f32
    %47 = vector.broadcast %cst_17 : f32 to vector<1x128xf32>
    %48 = arith.addf %47, %46 : vector<1x128xf32>
    %49 = arith.divf %47, %48 : vector<1x128xf32>
    %50 = vector.extract_strided_slice %37 {offsets = [0, 256], sizes = [1, 128], strides = [1, 1]} : vector<1x512xf32> to vector<1x128xf32>
    %51 = math.tanh %50 : vector<1x128xf32>
    %52 = vector.extract_strided_slice %37 {offsets = [0, 384], sizes = [1, 128], strides = [1, 1]} : vector<1x512xf32> to vector<1x128xf32>
    %53 = arith.negf %52 : vector<1x128xf32>
    %54 = math.exp %53 : vector<1x128xf32>
    %cst_18 = arith.constant 1.000000e+00 : f32
    %55 = vector.broadcast %cst_18 : f32 to vector<1x128xf32>
    %56 = arith.addf %55, %54 : vector<1x128xf32>
    %57 = arith.divf %55, %56 : vector<1x128xf32>
    %58 = arith.mulf %49, %31 : vector<1x128xf32>
    %59 = arith.mulf %43, %51 : vector<1x128xf32>
    %60 = arith.addf %58, %59 : vector<1x128xf32>
    %61 = math.tanh %60 : vector<1x128xf32>
    %62 = arith.mulf %57, %61 : vector<1x128xf32>
    %63 = vector.extract_strided_slice %62 {offsets = [0, 0], sizes = [1, 64], strides = [1, 1]} : vector<1x128xf32> to vector<1x64xf32>
    %c0_19 = arith.constant 0 : index
    %c0_20 = arith.constant 0 : index
    %c0_21 = arith.constant 0 : index
    %64 = vector.load %arg7[%c0_19, %c0_20, %c0_21] : memref<2x8x128xf32, #tpu.memory_space<vmem>>, vector<1x1x64xf32>
    %65 = vector.shape_cast %64 : vector<1x1x64xf32> to vector<1x64xf32>
    %66 = vector.shape_cast %63 : vector<1x64xf32> to vector<1x1x64xf32>
    tpu.vector_store %arg7[%c0_19, %c0_20, %c0_21], %66 {strides = array<i32>} : memref<2x8x128xf32, #tpu.memory_space<vmem>>, vector<1x1x64xf32>,
    %67 = vector.extract_strided_slice %62 {offsets = [0, 64], sizes = [1, 64], strides = [1, 1]} : vector<1x128xf32> to vector<1x64xf32>
    %c0_22 = arith.constant 0 : index
    %c7 = arith.constant 7 : index
    %c64 = arith.constant 64 : index
    %68 = vector.load %arg7[%c0_22, %c7, %c64] : memref<2x8x128xf32, #tpu.memory_space<vmem>>, vector<1x1x64xf32>
    %69 = vector.shape_cast %68 : vector<1x1x64xf32> to vector<1x64xf32>
    %70 = vector.shape_cast %67 : vector<1x64xf32> to vector<1x1x64xf32>
    tpu.vector_store %arg7[%c0_22, %c7, %c64], %70 {strides = array<i32>} : memref<2x8x128xf32, #tpu.memory_space<vmem>>, vector<1x1x64xf32>,
    %71 = vector.extract_strided_slice %29 {offsets = [6, 0], sizes = [1, 512], strides = [1, 1]} : vector<8x512xf32> to vector<1x512xf32>
    %72 = vector.extract_strided_slice %29 {offsets = [1, 0], sizes = [1, 512], strides = [1, 1]} : vector<8x512xf32> to vector<1x512xf32>
    %73 = arith.select %19, %71, %72 : vector<1x512xi1>, vector<1x512xf32>
    %74 = arith.truncf %62 : vector<1x128xf32> to vector<1x128xbf16>
    %cst_23 = arith.constant dense<0.000000e+00> : vector<1x512xf32>
    %75 = tpu.matmul %74, %23, %cst_23 {dimension_numbers = #tpu.dot_dimension_numbers<[1], [0], [0], [1], [0, 0, 1, 1], [], []>} : vector<1x128xbf16>, vector<128x512xbf16>, vector<1x512xf32> -> vector<1x512xf32>
    %76 = arith.addf %73, %75 : vector<1x512xf32>
    %77 = vector.extract_strided_slice %76 {offsets = [0, 0], sizes = [1, 128], strides = [1, 1]} : vector<1x512xf32> to vector<1x128xf32>
    %78 = arith.negf %77 : vector<1x128xf32>
    %79 = math.exp %78 : vector<1x128xf32>
    %cst_24 = arith.constant 1.000000e+00 : f32
    %80 = vector.broadcast %cst_24 : f32 to vector<1x128xf32>
    %81 = arith.addf %80, %79 : vector<1x128xf32>
    %82 = arith.divf %80, %81 : vector<1x128xf32>
    %83 = vector.extract_strided_slice %76 {offsets = [0, 128], sizes = [1, 128], strides = [1, 1]} : vector<1x512xf32> to vector<1x128xf32>
    %84 = arith.negf %83 : vector<1x128xf32>
    %85 = math.exp %84 : vector<1x128xf32>
    %cst_25 = arith.constant 1.000000e+00 : f32
    %86 = vector.broadcast %cst_25 : f32 to vector<1x128xf32>
    %87 = arith.addf %86, %85 : vector<1x128xf32>
    %88 = arith.divf %86, %87 : vector<1x128xf32>
    %89 = vector.extract_strided_slice %76 {offsets = [0, 256], sizes = [1, 128], strides = [1, 1]} : vector<1x512xf32> to vector<1x128xf32>
    %90 = math.tanh %89 : vector<1x128xf32>
    %91 = vector.extract_strided_slice %76 {offsets = [0, 384], sizes = [1, 128], strides = [1, 1]} : vector<1x512xf32> to vector<1x128xf32>
    %92 = arith.negf %91 : vector<1x128xf32>
    %93 = math.exp %92 : vector<1x128xf32>
    %cst_26 = arith.constant 1.000000e+00 : f32
    %94 = vector.broadcast %cst_26 : f32 to vector<1x128xf32>
    %95 = arith.addf %94, %93 : vector<1x128xf32>
    %96 = arith.divf %94, %95 : vector<1x128xf32>
    %97 = arith.mulf %88, %60 : vector<1x128xf32>
    %98 = arith.mulf %82, %90 : vector<1x128xf32>
    %99 = arith.addf %97, %98 : vector<1x128xf32>
    %100 = math.tanh %99 : vector<1x128xf32>
    %101 = arith.mulf %96, %100 : vector<1x128xf32>
    %102 = vector.extract_strided_slice %101 {offsets = [0, 0], sizes = [1, 64], strides = [1, 1]} : vector<1x128xf32> to vector<1x64xf32>
    %c0_27 = arith.constant 0 : index
    %c1 = arith.constant 1 : index
    %c0_28 = arith.constant 0 : index
    %103 = vector.load %arg7[%c0_27, %c1, %c0_28] : memref<2x8x128xf32, #tpu.memory_space<vmem>>, vector<1x1x64xf32>
    %104 = vector.shape_cast %103 : vector<1x1x64xf32> to vector<1x64xf32>
    %105 = vector.shape_cast %102 : vector<1x64xf32> to vector<1x1x64xf32>
    tpu.vector_store %arg7[%c0_27, %c1, %c0_28], %105 {strides = array<i32>} : memref<2x8x128xf32, #tpu.memory_space<vmem>>, vector<1x1x64xf32>,
    %106 = vector.extract_strided_slice %101 {offsets = [0, 64], sizes = [1, 64], strides = [1, 1]} : vector<1x128xf32> to vector<1x64xf32>
    %c0_29 = arith.constant 0 : index
    %c6 = arith.constant 6 : index
    %c64_30 = arith.constant 64 : index
    %107 = vector.load %arg7[%c0_29, %c6, %c64_30] : memref<2x8x128xf32, #tpu.memory_space<vmem>>, vector<1x1x64xf32>
    %108 = vector.shape_cast %107 : vector<1x1x64xf32> to vector<1x64xf32>
    %109 = vector.shape_cast %106 : vector<1x64xf32> to vector<1x1x64xf32>
    tpu.vector_store %arg7[%c0_29, %c6, %c64_30], %109 {strides = array<i32>} : memref<2x8x128xf32, #tpu.memory_space<vmem>>, vector<1x1x64xf32>,
    %110 = vector.extract_strided_slice %29 {offsets = [5, 0], sizes = [1, 512], strides = [1, 1]} : vector<8x512xf32> to vector<1x512xf32>
    %111 = vector.extract_strided_slice %29 {offsets = [2, 0], sizes = [1, 512], strides = [1, 1]} : vector<8x512xf32> to vector<1x512xf32>
    %112 = arith.select %19, %110, %111 : vector<1x512xi1>, vector<1x512xf32>
    %113 = arith.truncf %101 : vector<1x128xf32> to vector<1x128xbf16>
    %cst_31 = arith.constant dense<0.000000e+00> : vector<1x512xf32>
    %114 = tpu.matmul %113, %23, %cst_31 {dimension_numbers = #tpu.dot_dimension_numbers<[1], [0], [0], [1], [0, 0, 1, 1], [], []>} : vector<1x128xbf16>, vector<128x512xbf16>, vector<1x512xf32> -> vector<1x512xf32>
    %115 = arith.addf %112, %114 : vector<1x512xf32>
    %116 = vector.extract_strided_slice %115 {offsets = [0, 0], sizes = [1, 128], strides = [1, 1]} : vector<1x512xf32> to vector<1x128xf32>
    %117 = arith.negf %116 : vector<1x128xf32>
    %118 = math.exp %117 : vector<1x128xf32>
    %cst_32 = arith.constant 1.000000e+00 : f32
    %119 = vector.broadcast %cst_32 : f32 to vector<1x128xf32>
    %120 = arith.addf %119, %118 : vector<1x128xf32>
    %121 = arith.divf %119, %120 : vector<1x128xf32>
    %122 = vector.extract_strided_slice %115 {offsets = [0, 128], sizes = [1, 128], strides = [1, 1]} : vector<1x512xf32> to vector<1x128xf32>
    %123 = arith.negf %122 : vector<1x128xf32>
    %124 = math.exp %123 : vector<1x128xf32>
    %cst_33 = arith.constant 1.000000e+00 : f32
    %125 = vector.broadcast %cst_33 : f32 to vector<1x128xf32>
    %126 = arith.addf %125, %124 : vector<1x128xf32>
    %127 = arith.divf %125, %126 : vector<1x128xf32>
    %128 = vector.extract_strided_slice %115 {offsets = [0, 256], sizes = [1, 128], strides = [1, 1]} : vector<1x512xf32> to vector<1x128xf32>
    %129 = math.tanh %128 : vector<1x128xf32>
    %130 = vector.extract_strided_slice %115 {offsets = [0, 384], sizes = [1, 128], strides = [1, 1]} : vector<1x512xf32> to vector<1x128xf32>
    %131 = arith.negf %130 : vector<1x128xf32>
    %132 = math.exp %131 : vector<1x128xf32>
    %cst_34 = arith.constant 1.000000e+00 : f32
    %133 = vector.broadcast %cst_34 : f32 to vector<1x128xf32>
    %134 = arith.addf %133, %132 : vector<1x128xf32>
    %135 = arith.divf %133, %134 : vector<1x128xf32>
    %136 = arith.mulf %127, %99 : vector<1x128xf32>
    %137 = arith.mulf %121, %129 : vector<1x128xf32>
    %138 = arith.addf %136, %137 : vector<1x128xf32>
    %139 = math.tanh %138 : vector<1x128xf32>
    %140 = arith.mulf %135, %139 : vector<1x128xf32>
    %141 = vector.extract_strided_slice %140 {offsets = [0, 0], sizes = [1, 64], strides = [1, 1]} : vector<1x128xf32> to vector<1x64xf32>
    %c0_35 = arith.constant 0 : index
    %c2 = arith.constant 2 : index
    %c0_36 = arith.constant 0 : index
    %142 = vector.load %arg7[%c0_35, %c2, %c0_36] : memref<2x8x128xf32, #tpu.memory_space<vmem>>, vector<1x1x64xf32>
    %143 = vector.shape_cast %142 : vector<1x1x64xf32> to vector<1x64xf32>
    %144 = vector.shape_cast %141 : vector<1x64xf32> to vector<1x1x64xf32>
    tpu.vector_store %arg7[%c0_35, %c2, %c0_36], %144 {strides = array<i32>} : memref<2x8x128xf32, #tpu.memory_space<vmem>>, vector<1x1x64xf32>,
    %145 = vector.extract_strided_slice %140 {offsets = [0, 64], sizes = [1, 64], strides = [1, 1]} : vector<1x128xf32> to vector<1x64xf32>
    %c0_37 = arith.constant 0 : index
    %c5 = arith.constant 5 : index
    %c64_38 = arith.constant 64 : index
    %146 = vector.load %arg7[%c0_37, %c5, %c64_38] : memref<2x8x128xf32, #tpu.memory_space<vmem>>, vector<1x1x64xf32>
    %147 = vector.shape_cast %146 : vector<1x1x64xf32> to vector<1x64xf32>
    %148 = vector.shape_cast %145 : vector<1x64xf32> to vector<1x1x64xf32>
    tpu.vector_store %arg7[%c0_37, %c5, %c64_38], %148 {strides = array<i32>} : memref<2x8x128xf32, #tpu.memory_space<vmem>>, vector<1x1x64xf32>,
    %149 = vector.extract_strided_slice %29 {offsets = [4, 0], sizes = [1, 512], strides = [1, 1]} : vector<8x512xf32> to vector<1x512xf32>
    %150 = vector.extract_strided_slice %29 {offsets = [3, 0], sizes = [1, 512], strides = [1, 1]} : vector<8x512xf32> to vector<1x512xf32>
    %151 = arith.select %19, %149, %150 : vector<1x512xi1>, vector<1x512xf32>
    %152 = arith.truncf %140 : vector<1x128xf32> to vector<1x128xbf16>
    %cst_39 = arith.constant dense<0.000000e+00> : vector<1x512xf32>
    %153 = tpu.matmul %152, %23, %cst_39 {dimension_numbers = #tpu.dot_dimension_numbers<[1], [0], [0], [1], [0, 0, 1, 1], [], []>} : vector<1x128xbf16>, vector<128x512xbf16>, vector<1x512xf32> -> vector<1x512xf32>
    %154 = arith.addf %151, %153 : vector<1x512xf32>
    %155 = vector.extract_strided_slice %154 {offsets = [0, 0], sizes = [1, 128], strides = [1, 1]} : vector<1x512xf32> to vector<1x128xf32>
    %156 = arith.negf %155 : vector<1x128xf32>
    %157 = math.exp %156 : vector<1x128xf32>
    %cst_40 = arith.constant 1.000000e+00 : f32
    %158 = vector.broadcast %cst_40 : f32 to vector<1x128xf32>
    %159 = arith.addf %158, %157 : vector<1x128xf32>
    %160 = arith.divf %158, %159 : vector<1x128xf32>
    %161 = vector.extract_strided_slice %154 {offsets = [0, 128], sizes = [1, 128], strides = [1, 1]} : vector<1x512xf32> to vector<1x128xf32>
    %162 = arith.negf %161 : vector<1x128xf32>
    %163 = math.exp %162 : vector<1x128xf32>
    %cst_41 = arith.constant 1.000000e+00 : f32
    %164 = vector.broadcast %cst_41 : f32 to vector<1x128xf32>
    %165 = arith.addf %164, %163 : vector<1x128xf32>
    %166 = arith.divf %164, %165 : vector<1x128xf32>
    %167 = vector.extract_strided_slice %154 {offsets = [0, 256], sizes = [1, 128], strides = [1, 1]} : vector<1x512xf32> to vector<1x128xf32>
    %168 = math.tanh %167 : vector<1x128xf32>
    %169 = vector.extract_strided_slice %154 {offsets = [0, 384], sizes = [1, 128], strides = [1, 1]} : vector<1x512xf32> to vector<1x128xf32>
    %170 = arith.negf %169 : vector<1x128xf32>
    %171 = math.exp %170 : vector<1x128xf32>
    %cst_42 = arith.constant 1.000000e+00 : f32
    %172 = vector.broadcast %cst_42 : f32 to vector<1x128xf32>
    %173 = arith.addf %172, %171 : vector<1x128xf32>
    %174 = arith.divf %172, %173 : vector<1x128xf32>
    %175 = arith.mulf %166, %138 : vector<1x128xf32>
    %176 = arith.mulf %160, %168 : vector<1x128xf32>
    %177 = arith.addf %175, %176 : vector<1x128xf32>
    %178 = math.tanh %177 : vector<1x128xf32>
    %179 = arith.mulf %174, %178 : vector<1x128xf32>
    %180 = vector.extract_strided_slice %179 {offsets = [0, 0], sizes = [1, 64], strides = [1, 1]} : vector<1x128xf32> to vector<1x64xf32>
    %c0_43 = arith.constant 0 : index
    %c3 = arith.constant 3 : index
    %c0_44 = arith.constant 0 : index
    %181 = vector.load %arg7[%c0_43, %c3, %c0_44] : memref<2x8x128xf32, #tpu.memory_space<vmem>>, vector<1x1x64xf32>
    %182 = vector.shape_cast %181 : vector<1x1x64xf32> to vector<1x64xf32>
    %183 = vector.shape_cast %180 : vector<1x64xf32> to vector<1x1x64xf32>
    tpu.vector_store %arg7[%c0_43, %c3, %c0_44], %183 {strides = array<i32>} : memref<2x8x128xf32, #tpu.memory_space<vmem>>, vector<1x1x64xf32>,
    %184 = vector.extract_strided_slice %179 {offsets = [0, 64], sizes = [1, 64], strides = [1, 1]} : vector<1x128xf32> to vector<1x64xf32>
    %c0_45 = arith.constant 0 : index
    %c4 = arith.constant 4 : index
    %c64_46 = arith.constant 64 : index
    %185 = vector.load %arg7[%c0_45, %c4, %c64_46] : memref<2x8x128xf32, #tpu.memory_space<vmem>>, vector<1x1x64xf32>
    %186 = vector.shape_cast %185 : vector<1x1x64xf32> to vector<1x64xf32>
    %187 = vector.shape_cast %184 : vector<1x64xf32> to vector<1x1x64xf32>
    tpu.vector_store %arg7[%c0_45, %c4, %c64_46], %187 {strides = array<i32>} : memref<2x8x128xf32, #tpu.memory_space<vmem>>, vector<1x1x64xf32>,
    %188 = vector.extract_strided_slice %29 {offsets = [3, 0], sizes = [1, 512], strides = [1, 1]} : vector<8x512xf32> to vector<1x512xf32>
    %189 = vector.extract_strided_slice %29 {offsets = [4, 0], sizes = [1, 512], strides = [1, 1]} : vector<8x512xf32> to vector<1x512xf32>
    %190 = arith.select %19, %188, %189 : vector<1x512xi1>, vector<1x512xf32>
    %191 = arith.truncf %179 : vector<1x128xf32> to vector<1x128xbf16>
    %cst_47 = arith.constant dense<0.000000e+00> : vector<1x512xf32>
    %192 = tpu.matmul %191, %23, %cst_47 {dimension_numbers = #tpu.dot_dimension_numbers<[1], [0], [0], [1], [0, 0, 1, 1], [], []>} : vector<1x128xbf16>, vector<128x512xbf16>, vector<1x512xf32> -> vector<1x512xf32>
    %193 = arith.addf %190, %192 : vector<1x512xf32>
    %194 = vector.extract_strided_slice %193 {offsets = [0, 0], sizes = [1, 128], strides = [1, 1]} : vector<1x512xf32> to vector<1x128xf32>
    %195 = arith.negf %194 : vector<1x128xf32>
    %196 = math.exp %195 : vector<1x128xf32>
    %cst_48 = arith.constant 1.000000e+00 : f32
    %197 = vector.broadcast %cst_48 : f32 to vector<1x128xf32>
    %198 = arith.addf %197, %196 : vector<1x128xf32>
    %199 = arith.divf %197, %198 : vector<1x128xf32>
    %200 = vector.extract_strided_slice %193 {offsets = [0, 128], sizes = [1, 128], strides = [1, 1]} : vector<1x512xf32> to vector<1x128xf32>
    %201 = arith.negf %200 : vector<1x128xf32>
    %202 = math.exp %201 : vector<1x128xf32>
    %cst_49 = arith.constant 1.000000e+00 : f32
    %203 = vector.broadcast %cst_49 : f32 to vector<1x128xf32>
    %204 = arith.addf %203, %202 : vector<1x128xf32>
    %205 = arith.divf %203, %204 : vector<1x128xf32>
    %206 = vector.extract_strided_slice %193 {offsets = [0, 256], sizes = [1, 128], strides = [1, 1]} : vector<1x512xf32> to vector<1x128xf32>
    %207 = math.tanh %206 : vector<1x128xf32>
    %208 = vector.extract_strided_slice %193 {offsets = [0, 384], sizes = [1, 128], strides = [1, 1]} : vector<1x512xf32> to vector<1x128xf32>
    %209 = arith.negf %208 : vector<1x128xf32>
    %210 = math.exp %209 : vector<1x128xf32>
    %cst_50 = arith.constant 1.000000e+00 : f32
    %211 = vector.broadcast %cst_50 : f32 to vector<1x128xf32>
    %212 = arith.addf %211, %210 : vector<1x128xf32>
    %213 = arith.divf %211, %212 : vector<1x128xf32>
    %214 = arith.mulf %205, %177 : vector<1x128xf32>
    %215 = arith.mulf %199, %207 : vector<1x128xf32>
    %216 = arith.addf %214, %215 : vector<1x128xf32>
    %217 = math.tanh %216 : vector<1x128xf32>
    %218 = arith.mulf %213, %217 : vector<1x128xf32>
    %219 = vector.extract_strided_slice %218 {offsets = [0, 0], sizes = [1, 64], strides = [1, 1]} : vector<1x128xf32> to vector<1x64xf32>
    %c0_51 = arith.constant 0 : index
    %c4_52 = arith.constant 4 : index
    %c0_53 = arith.constant 0 : index
    %220 = vector.load %arg7[%c0_51, %c4_52, %c0_53] : memref<2x8x128xf32, #tpu.memory_space<vmem>>, vector<1x1x64xf32>
    %221 = vector.shape_cast %220 : vector<1x1x64xf32> to vector<1x64xf32>
    %222 = vector.shape_cast %219 : vector<1x64xf32> to vector<1x1x64xf32>
    tpu.vector_store %arg7[%c0_51, %c4_52, %c0_53], %222 {strides = array<i32>} : memref<2x8x128xf32, #tpu.memory_space<vmem>>, vector<1x1x64xf32>,
    %223 = vector.extract_strided_slice %218 {offsets = [0, 64], sizes = [1, 64], strides = [1, 1]} : vector<1x128xf32> to vector<1x64xf32>
    %c0_54 = arith.constant 0 : index
    %c3_55 = arith.constant 3 : index
    %c64_56 = arith.constant 64 : index
    %224 = vector.load %arg7[%c0_54, %c3_55, %c64_56] : memref<2x8x128xf32, #tpu.memory_space<vmem>>, vector<1x1x64xf32>
    %225 = vector.shape_cast %224 : vector<1x1x64xf32> to vector<1x64xf32>
    %226 = vector.shape_cast %223 : vector<1x64xf32> to vector<1x1x64xf32>
    tpu.vector_store %arg7[%c0_54, %c3_55, %c64_56], %226 {strides = array<i32>} : memref<2x8x128xf32, #tpu.memory_space<vmem>>, vector<1x1x64xf32>,
    %227 = vector.extract_strided_slice %29 {offsets = [2, 0], sizes = [1, 512], strides = [1, 1]} : vector<8x512xf32> to vector<1x512xf32>
    %228 = vector.extract_strided_slice %29 {offsets = [5, 0], sizes = [1, 512], strides = [1, 1]} : vector<8x512xf32> to vector<1x512xf32>
    %229 = arith.select %19, %227, %228 : vector<1x512xi1>, vector<1x512xf32>
    %230 = arith.truncf %218 : vector<1x128xf32> to vector<1x128xbf16>
    %cst_57 = arith.constant dense<0.000000e+00> : vector<1x512xf32>
    %231 = tpu.matmul %230, %23, %cst_57 {dimension_numbers = #tpu.dot_dimension_numbers<[1], [0], [0], [1], [0, 0, 1, 1], [], []>} : vector<1x128xbf16>, vector<128x512xbf16>, vector<1x512xf32> -> vector<1x512xf32>
    %232 = arith.addf %229, %231 : vector<1x512xf32>
    %233 = vector.extract_strided_slice %232 {offsets = [0, 0], sizes = [1, 128], strides = [1, 1]} : vector<1x512xf32> to vector<1x128xf32>
    %234 = arith.negf %233 : vector<1x128xf32>
    %235 = math.exp %234 : vector<1x128xf32>
    %cst_58 = arith.constant 1.000000e+00 : f32
    %236 = vector.broadcast %cst_58 : f32 to vector<1x128xf32>
    %237 = arith.addf %236, %235 : vector<1x128xf32>
    %238 = arith.divf %236, %237 : vector<1x128xf32>
    %239 = vector.extract_strided_slice %232 {offsets = [0, 128], sizes = [1, 128], strides = [1, 1]} : vector<1x512xf32> to vector<1x128xf32>
    %240 = arith.negf %239 : vector<1x128xf32>
    %241 = math.exp %240 : vector<1x128xf32>
    %cst_59 = arith.constant 1.000000e+00 : f32
    %242 = vector.broadcast %cst_59 : f32 to vector<1x128xf32>
    %243 = arith.addf %242, %241 : vector<1x128xf32>
    %244 = arith.divf %242, %243 : vector<1x128xf32>
    %245 = vector.extract_strided_slice %232 {offsets = [0, 256], sizes = [1, 128], strides = [1, 1]} : vector<1x512xf32> to vector<1x128xf32>
    %246 = math.tanh %245 : vector<1x128xf32>
    %247 = vector.extract_strided_slice %232 {offsets = [0, 384], sizes = [1, 128], strides = [1, 1]} : vector<1x512xf32> to vector<1x128xf32>
    %248 = arith.negf %247 : vector<1x128xf32>
    %249 = math.exp %248 : vector<1x128xf32>
    %cst_60 = arith.constant 1.000000e+00 : f32
    %250 = vector.broadcast %cst_60 : f32 to vector<1x128xf32>
    %251 = arith.addf %250, %249 : vector<1x128xf32>
    %252 = arith.divf %250, %251 : vector<1x128xf32>
    %253 = arith.mulf %244, %216 : vector<1x128xf32>
    %254 = arith.mulf %238, %246 : vector<1x128xf32>
    %255 = arith.addf %253, %254 : vector<1x128xf32>
    %256 = math.tanh %255 : vector<1x128xf32>
    %257 = arith.mulf %252, %256 : vector<1x128xf32>
    %258 = vector.extract_strided_slice %257 {offsets = [0, 0], sizes = [1, 64], strides = [1, 1]} : vector<1x128xf32> to vector<1x64xf32>
    %c0_61 = arith.constant 0 : index
    %c5_62 = arith.constant 5 : index
    %c0_63 = arith.constant 0 : index
    %259 = vector.load %arg7[%c0_61, %c5_62, %c0_63] : memref<2x8x128xf32, #tpu.memory_space<vmem>>, vector<1x1x64xf32>
    %260 = vector.shape_cast %259 : vector<1x1x64xf32> to vector<1x64xf32>
    %261 = vector.shape_cast %258 : vector<1x64xf32> to vector<1x1x64xf32>
    tpu.vector_store %arg7[%c0_61, %c5_62, %c0_63], %261 {strides = array<i32>} : memref<2x8x128xf32, #tpu.memory_space<vmem>>, vector<1x1x64xf32>,
    %262 = vector.extract_strided_slice %257 {offsets = [0, 64], sizes = [1, 64], strides = [1, 1]} : vector<1x128xf32> to vector<1x64xf32>
    %c0_64 = arith.constant 0 : index
    %c2_65 = arith.constant 2 : index
    %c64_66 = arith.constant 64 : index
    %263 = vector.load %arg7[%c0_64, %c2_65, %c64_66] : memref<2x8x128xf32, #tpu.memory_space<vmem>>, vector<1x1x64xf32>
    %264 = vector.shape_cast %263 : vector<1x1x64xf32> to vector<1x64xf32>
    %265 = vector.shape_cast %262 : vector<1x64xf32> to vector<1x1x64xf32>
    tpu.vector_store %arg7[%c0_64, %c2_65, %c64_66], %265 {strides = array<i32>} : memref<2x8x128xf32, #tpu.memory_space<vmem>>, vector<1x1x64xf32>,
    %266 = vector.extract_strided_slice %29 {offsets = [1, 0], sizes = [1, 512], strides = [1, 1]} : vector<8x512xf32> to vector<1x512xf32>
    %267 = vector.extract_strided_slice %29 {offsets = [6, 0], sizes = [1, 512], strides = [1, 1]} : vector<8x512xf32> to vector<1x512xf32>
    %268 = arith.select %19, %266, %267 : vector<1x512xi1>, vector<1x512xf32>
    %269 = arith.truncf %257 : vector<1x128xf32> to vector<1x128xbf16>
    %cst_67 = arith.constant dense<0.000000e+00> : vector<1x512xf32>
    %270 = tpu.matmul %269, %23, %cst_67 {dimension_numbers = #tpu.dot_dimension_numbers<[1], [0], [0], [1], [0, 0, 1, 1], [], []>} : vector<1x128xbf16>, vector<128x512xbf16>, vector<1x512xf32> -> vector<1x512xf32>
    %271 = arith.addf %268, %270 : vector<1x512xf32>
    %272 = vector.extract_strided_slice %271 {offsets = [0, 0], sizes = [1, 128], strides = [1, 1]} : vector<1x512xf32> to vector<1x128xf32>
    %273 = arith.negf %272 : vector<1x128xf32>
    %274 = math.exp %273 : vector<1x128xf32>
    %cst_68 = arith.constant 1.000000e+00 : f32
    %275 = vector.broadcast %cst_68 : f32 to vector<1x128xf32>
    %276 = arith.addf %275, %274 : vector<1x128xf32>
    %277 = arith.divf %275, %276 : vector<1x128xf32>
    %278 = vector.extract_strided_slice %271 {offsets = [0, 128], sizes = [1, 128], strides = [1, 1]} : vector<1x512xf32> to vector<1x128xf32>
    %279 = arith.negf %278 : vector<1x128xf32>
    %280 = math.exp %279 : vector<1x128xf32>
    %cst_69 = arith.constant 1.000000e+00 : f32
    %281 = vector.broadcast %cst_69 : f32 to vector<1x128xf32>
    %282 = arith.addf %281, %280 : vector<1x128xf32>
    %283 = arith.divf %281, %282 : vector<1x128xf32>
    %284 = vector.extract_strided_slice %271 {offsets = [0, 256], sizes = [1, 128], strides = [1, 1]} : vector<1x512xf32> to vector<1x128xf32>
    %285 = math.tanh %284 : vector<1x128xf32>
    %286 = vector.extract_strided_slice %271 {offsets = [0, 384], sizes = [1, 128], strides = [1, 1]} : vector<1x512xf32> to vector<1x128xf32>
    %287 = arith.negf %286 : vector<1x128xf32>
    %288 = math.exp %287 : vector<1x128xf32>
    %cst_70 = arith.constant 1.000000e+00 : f32
    %289 = vector.broadcast %cst_70 : f32 to vector<1x128xf32>
    %290 = arith.addf %289, %288 : vector<1x128xf32>
    %291 = arith.divf %289, %290 : vector<1x128xf32>
    %292 = arith.mulf %283, %255 : vector<1x128xf32>
    %293 = arith.mulf %277, %285 : vector<1x128xf32>
    %294 = arith.addf %292, %293 : vector<1x128xf32>
    %295 = math.tanh %294 : vector<1x128xf32>
    %296 = arith.mulf %291, %295 : vector<1x128xf32>
    %297 = vector.extract_strided_slice %296 {offsets = [0, 0], sizes = [1, 64], strides = [1, 1]} : vector<1x128xf32> to vector<1x64xf32>
    %c0_71 = arith.constant 0 : index
    %c6_72 = arith.constant 6 : index
    %c0_73 = arith.constant 0 : index
    %298 = vector.load %arg7[%c0_71, %c6_72, %c0_73] : memref<2x8x128xf32, #tpu.memory_space<vmem>>, vector<1x1x64xf32>
    %299 = vector.shape_cast %298 : vector<1x1x64xf32> to vector<1x64xf32>
    %300 = vector.shape_cast %297 : vector<1x64xf32> to vector<1x1x64xf32>
    tpu.vector_store %arg7[%c0_71, %c6_72, %c0_73], %300 {strides = array<i32>} : memref<2x8x128xf32, #tpu.memory_space<vmem>>, vector<1x1x64xf32>,
    %301 = vector.extract_strided_slice %296 {offsets = [0, 64], sizes = [1, 64], strides = [1, 1]} : vector<1x128xf32> to vector<1x64xf32>
    %c0_74 = arith.constant 0 : index
    %c1_75 = arith.constant 1 : index
    %c64_76 = arith.constant 64 : index
    %302 = vector.load %arg7[%c0_74, %c1_75, %c64_76] : memref<2x8x128xf32, #tpu.memory_space<vmem>>, vector<1x1x64xf32>
    %303 = vector.shape_cast %302 : vector<1x1x64xf32> to vector<1x64xf32>
    %304 = vector.shape_cast %301 : vector<1x64xf32> to vector<1x1x64xf32>
    tpu.vector_store %arg7[%c0_74, %c1_75, %c64_76], %304 {strides = array<i32>} : memref<2x8x128xf32, #tpu.memory_space<vmem>>, vector<1x1x64xf32>,
    %305 = vector.extract_strided_slice %29 {offsets = [0, 0], sizes = [1, 512], strides = [1, 1]} : vector<8x512xf32> to vector<1x512xf32>
    %306 = vector.extract_strided_slice %29 {offsets = [7, 0], sizes = [1, 512], strides = [1, 1]} : vector<8x512xf32> to vector<1x512xf32>
    %307 = arith.select %19, %305, %306 : vector<1x512xi1>, vector<1x512xf32>
    %308 = arith.truncf %296 : vector<1x128xf32> to vector<1x128xbf16>
    %cst_77 = arith.constant dense<0.000000e+00> : vector<1x512xf32>
    %309 = tpu.matmul %308, %23, %cst_77 {dimension_numbers = #tpu.dot_dimension_numbers<[1], [0], [0], [1], [0, 0, 1, 1], [], []>} : vector<1x128xbf16>, vector<128x512xbf16>, vector<1x512xf32> -> vector<1x512xf32>
    %310 = arith.addf %307, %309 : vector<1x512xf32>
    %311 = vector.extract_strided_slice %310 {offsets = [0, 0], sizes = [1, 128], strides = [1, 1]} : vector<1x512xf32> to vector<1x128xf32>
    %312 = arith.negf %311 : vector<1x128xf32>
    %313 = math.exp %312 : vector<1x128xf32>
    %cst_78 = arith.constant 1.000000e+00 : f32
    %314 = vector.broadcast %cst_78 : f32 to vector<1x128xf32>
    %315 = arith.addf %314, %313 : vector<1x128xf32>
    %316 = arith.divf %314, %315 : vector<1x128xf32>
    %317 = vector.extract_strided_slice %310 {offsets = [0, 128], sizes = [1, 128], strides = [1, 1]} : vector<1x512xf32> to vector<1x128xf32>
    %318 = arith.negf %317 : vector<1x128xf32>
    %319 = math.exp %318 : vector<1x128xf32>
    %cst_79 = arith.constant 1.000000e+00 : f32
    %320 = vector.broadcast %cst_79 : f32 to vector<1x128xf32>
    %321 = arith.addf %320, %319 : vector<1x128xf32>
    %322 = arith.divf %320, %321 : vector<1x128xf32>
    %323 = vector.extract_strided_slice %310 {offsets = [0, 256], sizes = [1, 128], strides = [1, 1]} : vector<1x512xf32> to vector<1x128xf32>
    %324 = math.tanh %323 : vector<1x128xf32>
    %325 = vector.extract_strided_slice %310 {offsets = [0, 384], sizes = [1, 128], strides = [1, 1]} : vector<1x512xf32> to vector<1x128xf32>
    %326 = arith.negf %325 : vector<1x128xf32>
    %327 = math.exp %326 : vector<1x128xf32>
    %cst_80 = arith.constant 1.000000e+00 : f32
    %328 = vector.broadcast %cst_80 : f32 to vector<1x128xf32>
    %329 = arith.addf %328, %327 : vector<1x128xf32>
    %330 = arith.divf %328, %329 : vector<1x128xf32>
    %331 = arith.mulf %322, %294 : vector<1x128xf32>
    %332 = arith.mulf %316, %324 : vector<1x128xf32>
    %333 = arith.addf %331, %332 : vector<1x128xf32>
    %334 = math.tanh %333 : vector<1x128xf32>
    %335 = arith.mulf %330, %334 : vector<1x128xf32>
    %336 = vector.extract_strided_slice %335 {offsets = [0, 0], sizes = [1, 64], strides = [1, 1]} : vector<1x128xf32> to vector<1x64xf32>
    %c0_81 = arith.constant 0 : index
    %c7_82 = arith.constant 7 : index
    %c0_83 = arith.constant 0 : index
    %337 = vector.load %arg7[%c0_81, %c7_82, %c0_83] : memref<2x8x128xf32, #tpu.memory_space<vmem>>, vector<1x1x64xf32>
    %338 = vector.shape_cast %337 : vector<1x1x64xf32> to vector<1x64xf32>
    %339 = vector.shape_cast %336 : vector<1x64xf32> to vector<1x1x64xf32>
    tpu.vector_store %arg7[%c0_81, %c7_82, %c0_83], %339 {strides = array<i32>} : memref<2x8x128xf32, #tpu.memory_space<vmem>>, vector<1x1x64xf32>,
    %340 = vector.extract_strided_slice %335 {offsets = [0, 64], sizes = [1, 64], strides = [1, 1]} : vector<1x128xf32> to vector<1x64xf32>
    %c0_84 = arith.constant 0 : index
    %c0_85 = arith.constant 0 : index
    %c64_86 = arith.constant 64 : index
    %341 = vector.load %arg7[%c0_84, %c0_85, %c64_86] : memref<2x8x128xf32, #tpu.memory_space<vmem>>, vector<1x1x64xf32>
    %342 = vector.shape_cast %341 : vector<1x1x64xf32> to vector<1x64xf32>
    %343 = vector.shape_cast %340 : vector<1x64xf32> to vector<1x1x64xf32>
    tpu.vector_store %arg7[%c0_84, %c0_85, %c64_86], %343 {strides = array<i32>} : memref<2x8x128xf32, #tpu.memory_space<vmem>>, vector<1x1x64xf32>,
    %c0_87 = arith.constant 0 : index
    %c0_88 = arith.constant 0 : index
    %c0_89 = arith.constant 0 : index
    %344 = vector.load %arg7[%c0_87, %c0_88, %c0_89] : memref<2x8x128xf32, #tpu.memory_space<vmem>>, vector<1x8x128xf32>
    %345 = vector.shape_cast %344 : vector<1x8x128xf32> to vector<8x128xf32>
    %c1_90 = arith.constant 1 : index
    %c0_91 = arith.constant 0 : index
    %c0_92 = arith.constant 0 : index
    %346 = vector.load %arg1[%c1_90, %c0_91, %c0_92] : memref<2x128x512xbf16, #tpu.memory_space<vmem>>, vector<1x128x512xbf16>
    %347 = vector.shape_cast %346 : vector<1x128x512xbf16> to vector<128x512xbf16>
    %c1_93 = arith.constant 1 : index
    %c0_94 = arith.constant 0 : index
    %c0_95 = arith.constant 0 : index
    %348 = vector.load %arg2[%c1_93, %c0_94, %c0_95] : memref<2x128x512xbf16, #tpu.memory_space<vmem>>, vector<1x128x512xbf16>
    %349 = vector.shape_cast %348 : vector<1x128x512xbf16> to vector<128x512xbf16>
    %c1_96 = arith.constant 1 : index
    %c0_97 = arith.constant 0 : index
    %c0_98 = arith.constant 0 : index
    %350 = vector.load %arg3[%c1_96, %c0_97, %c0_98] : memref<2x1x512xf32, #tpu.memory_space<vmem>>, vector<1x1x512xf32>
    %351 = vector.shape_cast %350 : vector<1x1x512xf32> to vector<1x512xf32>
    %352 = arith.truncf %345 : vector<8x128xf32> to vector<8x128xbf16>
    %cst_99 = arith.constant dense<0.000000e+00> : vector<8x512xf32>
    %353 = tpu.matmul %352, %347, %cst_99 {dimension_numbers = #tpu.dot_dimension_numbers<[1], [0], [0], [1], [0, 0, 1, 1], [], []>} : vector<8x128xbf16>, vector<128x512xbf16>, vector<8x512xf32> -> vector<8x512xf32>
    %354 = vector.broadcast %351 : vector<1x512xf32> to vector<8x512xf32>
    %355 = arith.addf %353, %354 : vector<8x512xf32>
    %cst_100 = arith.constant 0.000000e+00 : f32
    %356 = vector.broadcast %cst_100 : f32 to vector<1x128xf32>
    %cst_101 = arith.constant 0.000000e+00 : f32
    %357 = vector.broadcast %cst_101 : f32 to vector<1x128xf32>
    %358 = vector.extract_strided_slice %355 {offsets = [7, 0], sizes = [1, 512], strides = [1, 1]} : vector<8x512xf32> to vector<1x512xf32>
    %359 = vector.extract_strided_slice %355 {offsets = [0, 0], sizes = [1, 512], strides = [1, 1]} : vector<8x512xf32> to vector<1x512xf32>
    %360 = arith.select %19, %358, %359 : vector<1x512xi1>, vector<1x512xf32>
    %361 = arith.truncf %356 : vector<1x128xf32> to vector<1x128xbf16>
    %cst_102 = arith.constant dense<0.000000e+00> : vector<1x512xf32>
    %362 = tpu.matmul %361, %349, %cst_102 {dimension_numbers = #tpu.dot_dimension_numbers<[1], [0], [0], [1], [0, 0, 1, 1], [], []>} : vector<1x128xbf16>, vector<128x512xbf16>, vector<1x512xf32> -> vector<1x512xf32>
    %363 = arith.addf %360, %362 : vector<1x512xf32>
    %364 = vector.extract_strided_slice %363 {offsets = [0, 0], sizes = [1, 128], strides = [1, 1]} : vector<1x512xf32> to vector<1x128xf32>
    %365 = arith.negf %364 : vector<1x128xf32>
    %366 = math.exp %365 : vector<1x128xf32>
    %cst_103 = arith.constant 1.000000e+00 : f32
    %367 = vector.broadcast %cst_103 : f32 to vector<1x128xf32>
    %368 = arith.addf %367, %366 : vector<1x128xf32>
    %369 = arith.divf %367, %368 : vector<1x128xf32>
    %370 = vector.extract_strided_slice %363 {offsets = [0, 128], sizes = [1, 128], strides = [1, 1]} : vector<1x512xf32> to vector<1x128xf32>
    %371 = arith.negf %370 : vector<1x128xf32>
    %372 = math.exp %371 : vector<1x128xf32>
    %cst_104 = arith.constant 1.000000e+00 : f32
    %373 = vector.broadcast %cst_104 : f32 to vector<1x128xf32>
    %374 = arith.addf %373, %372 : vector<1x128xf32>
    %375 = arith.divf %373, %374 : vector<1x128xf32>
    %376 = vector.extract_strided_slice %363 {offsets = [0, 256], sizes = [1, 128], strides = [1, 1]} : vector<1x512xf32> to vector<1x128xf32>
    %377 = math.tanh %376 : vector<1x128xf32>
    %378 = vector.extract_strided_slice %363 {offsets = [0, 384], sizes = [1, 128], strides = [1, 1]} : vector<1x512xf32> to vector<1x128xf32>
    %379 = arith.negf %378 : vector<1x128xf32>
    %380 = math.exp %379 : vector<1x128xf32>
    %cst_105 = arith.constant 1.000000e+00 : f32
    %381 = vector.broadcast %cst_105 : f32 to vector<1x128xf32>
    %382 = arith.addf %381, %380 : vector<1x128xf32>
    %383 = arith.divf %381, %382 : vector<1x128xf32>
    %384 = arith.mulf %375, %357 : vector<1x128xf32>
    %385 = arith.mulf %369, %377 : vector<1x128xf32>
    %386 = arith.addf %384, %385 : vector<1x128xf32>
    %387 = math.tanh %386 : vector<1x128xf32>
    %388 = arith.mulf %383, %387 : vector<1x128xf32>
    %389 = vector.extract_strided_slice %388 {offsets = [0, 0], sizes = [1, 64], strides = [1, 1]} : vector<1x128xf32> to vector<1x64xf32>
    %c1_106 = arith.constant 1 : index
    %c0_107 = arith.constant 0 : index
    %c0_108 = arith.constant 0 : index
    %390 = vector.load %arg7[%c1_106, %c0_107, %c0_108] : memref<2x8x128xf32, #tpu.memory_space<vmem>>, vector<1x1x64xf32>
    %391 = vector.shape_cast %390 : vector<1x1x64xf32> to vector<1x64xf32>
    %392 = vector.shape_cast %389 : vector<1x64xf32> to vector<1x1x64xf32>
    tpu.vector_store %arg7[%c1_106, %c0_107, %c0_108], %392 {strides = array<i32>} : memref<2x8x128xf32, #tpu.memory_space<vmem>>, vector<1x1x64xf32>,
    %393 = vector.extract_strided_slice %388 {offsets = [0, 64], sizes = [1, 64], strides = [1, 1]} : vector<1x128xf32> to vector<1x64xf32>
    %c1_109 = arith.constant 1 : index
    %c7_110 = arith.constant 7 : index
    %c64_111 = arith.constant 64 : index
    %394 = vector.load %arg7[%c1_109, %c7_110, %c64_111] : memref<2x8x128xf32, #tpu.memory_space<vmem>>, vector<1x1x64xf32>
    %395 = vector.shape_cast %394 : vector<1x1x64xf32> to vector<1x64xf32>
    %396 = vector.shape_cast %393 : vector<1x64xf32> to vector<1x1x64xf32>
    tpu.vector_store %arg7[%c1_109, %c7_110, %c64_111], %396 {strides = array<i32>} : memref<2x8x128xf32, #tpu.memory_space<vmem>>, vector<1x1x64xf32>,
    %397 = vector.extract_strided_slice %355 {offsets = [6, 0], sizes = [1, 512], strides = [1, 1]} : vector<8x512xf32> to vector<1x512xf32>
    %398 = vector.extract_strided_slice %355 {offsets = [1, 0], sizes = [1, 512], strides = [1, 1]} : vector<8x512xf32> to vector<1x512xf32>
    %399 = arith.select %19, %397, %398 : vector<1x512xi1>, vector<1x512xf32>
    %400 = arith.truncf %388 : vector<1x128xf32> to vector<1x128xbf16>
    %cst_112 = arith.constant dense<0.000000e+00> : vector<1x512xf32>
    %401 = tpu.matmul %400, %349, %cst_112 {dimension_numbers = #tpu.dot_dimension_numbers<[1], [0], [0], [1], [0, 0, 1, 1], [], []>} : vector<1x128xbf16>, vector<128x512xbf16>, vector<1x512xf32> -> vector<1x512xf32>
    %402 = arith.addf %399, %401 : vector<1x512xf32>
    %403 = vector.extract_strided_slice %402 {offsets = [0, 0], sizes = [1, 128], strides = [1, 1]} : vector<1x512xf32> to vector<1x128xf32>
    %404 = arith.negf %403 : vector<1x128xf32>
    %405 = math.exp %404 : vector<1x128xf32>
    %cst_113 = arith.constant 1.000000e+00 : f32
    %406 = vector.broadcast %cst_113 : f32 to vector<1x128xf32>
    %407 = arith.addf %406, %405 : vector<1x128xf32>
    %408 = arith.divf %406, %407 : vector<1x128xf32>
    %409 = vector.extract_strided_slice %402 {offsets = [0, 128], sizes = [1, 128], strides = [1, 1]} : vector<1x512xf32> to vector<1x128xf32>
    %410 = arith.negf %409 : vector<1x128xf32>
    %411 = math.exp %410 : vector<1x128xf32>
    %cst_114 = arith.constant 1.000000e+00 : f32
    %412 = vector.broadcast %cst_114 : f32 to vector<1x128xf32>
    %413 = arith.addf %412, %411 : vector<1x128xf32>
    %414 = arith.divf %412, %413 : vector<1x128xf32>
    %415 = vector.extract_strided_slice %402 {offsets = [0, 256], sizes = [1, 128], strides = [1, 1]} : vector<1x512xf32> to vector<1x128xf32>
    %416 = math.tanh %415 : vector<1x128xf32>
    %417 = vector.extract_strided_slice %402 {offsets = [0, 384], sizes = [1, 128], strides = [1, 1]} : vector<1x512xf32> to vector<1x128xf32>
    %418 = arith.negf %417 : vector<1x128xf32>
    %419 = math.exp %418 : vector<1x128xf32>
    %cst_115 = arith.constant 1.000000e+00 : f32
    %420 = vector.broadcast %cst_115 : f32 to vector<1x128xf32>
    %421 = arith.addf %420, %419 : vector<1x128xf32>
    %422 = arith.divf %420, %421 : vector<1x128xf32>
    %423 = arith.mulf %414, %386 : vector<1x128xf32>
    %424 = arith.mulf %408, %416 : vector<1x128xf32>
    %425 = arith.addf %423, %424 : vector<1x128xf32>
    %426 = math.tanh %425 : vector<1x128xf32>
    %427 = arith.mulf %422, %426 : vector<1x128xf32>
    %428 = vector.extract_strided_slice %427 {offsets = [0, 0], sizes = [1, 64], strides = [1, 1]} : vector<1x128xf32> to vector<1x64xf32>
    %c1_116 = arith.constant 1 : index
    %c1_117 = arith.constant 1 : index
    %c0_118 = arith.constant 0 : index
    %429 = vector.load %arg7[%c1_116, %c1_117, %c0_118] : memref<2x8x128xf32, #tpu.memory_space<vmem>>, vector<1x1x64xf32>
    %430 = vector.shape_cast %429 : vector<1x1x64xf32> to vector<1x64xf32>
    %431 = vector.shape_cast %428 : vector<1x64xf32> to vector<1x1x64xf32>
    tpu.vector_store %arg7[%c1_116, %c1_117, %c0_118], %431 {strides = array<i32>} : memref<2x8x128xf32, #tpu.memory_space<vmem>>, vector<1x1x64xf32>,
    %432 = vector.extract_strided_slice %427 {offsets = [0, 64], sizes = [1, 64], strides = [1, 1]} : vector<1x128xf32> to vector<1x64xf32>
    %c1_119 = arith.constant 1 : index
    %c6_120 = arith.constant 6 : index
    %c64_121 = arith.constant 64 : index
    %433 = vector.load %arg7[%c1_119, %c6_120, %c64_121] : memref<2x8x128xf32, #tpu.memory_space<vmem>>, vector<1x1x64xf32>
    %434 = vector.shape_cast %433 : vector<1x1x64xf32> to vector<1x64xf32>
    %435 = vector.shape_cast %432 : vector<1x64xf32> to vector<1x1x64xf32>
    tpu.vector_store %arg7[%c1_119, %c6_120, %c64_121], %435 {strides = array<i32>} : memref<2x8x128xf32, #tpu.memory_space<vmem>>, vector<1x1x64xf32>,
    %436 = vector.extract_strided_slice %355 {offsets = [5, 0], sizes = [1, 512], strides = [1, 1]} : vector<8x512xf32> to vector<1x512xf32>
    %437 = vector.extract_strided_slice %355 {offsets = [2, 0], sizes = [1, 512], strides = [1, 1]} : vector<8x512xf32> to vector<1x512xf32>
    %438 = arith.select %19, %436, %437 : vector<1x512xi1>, vector<1x512xf32>
    %439 = arith.truncf %427 : vector<1x128xf32> to vector<1x128xbf16>
    %cst_122 = arith.constant dense<0.000000e+00> : vector<1x512xf32>
    %440 = tpu.matmul %439, %349, %cst_122 {dimension_numbers = #tpu.dot_dimension_numbers<[1], [0], [0], [1], [0, 0, 1, 1], [], []>} : vector<1x128xbf16>, vector<128x512xbf16>, vector<1x512xf32> -> vector<1x512xf32>
    %441 = arith.addf %438, %440 : vector<1x512xf32>
    %442 = vector.extract_strided_slice %441 {offsets = [0, 0], sizes = [1, 128], strides = [1, 1]} : vector<1x512xf32> to vector<1x128xf32>
    %443 = arith.negf %442 : vector<1x128xf32>
    %444 = math.exp %443 : vector<1x128xf32>
    %cst_123 = arith.constant 1.000000e+00 : f32
    %445 = vector.broadcast %cst_123 : f32 to vector<1x128xf32>
    %446 = arith.addf %445, %444 : vector<1x128xf32>
    %447 = arith.divf %445, %446 : vector<1x128xf32>
    %448 = vector.extract_strided_slice %441 {offsets = [0, 128], sizes = [1, 128], strides = [1, 1]} : vector<1x512xf32> to vector<1x128xf32>
    %449 = arith.negf %448 : vector<1x128xf32>
    %450 = math.exp %449 : vector<1x128xf32>
    %cst_124 = arith.constant 1.000000e+00 : f32
    %451 = vector.broadcast %cst_124 : f32 to vector<1x128xf32>
    %452 = arith.addf %451, %450 : vector<1x128xf32>
    %453 = arith.divf %451, %452 : vector<1x128xf32>
    %454 = vector.extract_strided_slice %441 {offsets = [0, 256], sizes = [1, 128], strides = [1, 1]} : vector<1x512xf32> to vector<1x128xf32>
    %455 = math.tanh %454 : vector<1x128xf32>
    %456 = vector.extract_strided_slice %441 {offsets = [0, 384], sizes = [1, 128], strides = [1, 1]} : vector<1x512xf32> to vector<1x128xf32>
    %457 = arith.negf %456 : vector<1x128xf32>
    %458 = math.exp %457 : vector<1x128xf32>
    %cst_125 = arith.constant 1.000000e+00 : f32
    %459 = vector.broadcast %cst_125 : f32 to vector<1x128xf32>
    %460 = arith.addf %459, %458 : vector<1x128xf32>
    %461 = arith.divf %459, %460 : vector<1x128xf32>
    %462 = arith.mulf %453, %425 : vector<1x128xf32>
    %463 = arith.mulf %447, %455 : vector<1x128xf32>
    %464 = arith.addf %462, %463 : vector<1x128xf32>
    %465 = math.tanh %464 : vector<1x128xf32>
    %466 = arith.mulf %461, %465 : vector<1x128xf32>
    %467 = vector.extract_strided_slice %466 {offsets = [0, 0], sizes = [1, 64], strides = [1, 1]} : vector<1x128xf32> to vector<1x64xf32>
    %c1_126 = arith.constant 1 : index
    %c2_127 = arith.constant 2 : index
    %c0_128 = arith.constant 0 : index
    %468 = vector.load %arg7[%c1_126, %c2_127, %c0_128] : memref<2x8x128xf32, #tpu.memory_space<vmem>>, vector<1x1x64xf32>
    %469 = vector.shape_cast %468 : vector<1x1x64xf32> to vector<1x64xf32>
    %470 = vector.shape_cast %467 : vector<1x64xf32> to vector<1x1x64xf32>
    tpu.vector_store %arg7[%c1_126, %c2_127, %c0_128], %470 {strides = array<i32>} : memref<2x8x128xf32, #tpu.memory_space<vmem>>, vector<1x1x64xf32>,
    %471 = vector.extract_strided_slice %466 {offsets = [0, 64], sizes = [1, 64], strides = [1, 1]} : vector<1x128xf32> to vector<1x64xf32>
    %c1_129 = arith.constant 1 : index
    %c5_130 = arith.constant 5 : index
    %c64_131 = arith.constant 64 : index
    %472 = vector.load %arg7[%c1_129, %c5_130, %c64_131] : memref<2x8x128xf32, #tpu.memory_space<vmem>>, vector<1x1x64xf32>
    %473 = vector.shape_cast %472 : vector<1x1x64xf32> to vector<1x64xf32>
    %474 = vector.shape_cast %471 : vector<1x64xf32> to vector<1x1x64xf32>
    tpu.vector_store %arg7[%c1_129, %c5_130, %c64_131], %474 {strides = array<i32>} : memref<2x8x128xf32, #tpu.memory_space<vmem>>, vector<1x1x64xf32>,
    %475 = vector.extract_strided_slice %355 {offsets = [4, 0], sizes = [1, 512], strides = [1, 1]} : vector<8x512xf32> to vector<1x512xf32>
    %476 = vector.extract_strided_slice %355 {offsets = [3, 0], sizes = [1, 512], strides = [1, 1]} : vector<8x512xf32> to vector<1x512xf32>
    %477 = arith.select %19, %475, %476 : vector<1x512xi1>, vector<1x512xf32>
    %478 = arith.truncf %466 : vector<1x128xf32> to vector<1x128xbf16>
    %cst_132 = arith.constant dense<0.000000e+00> : vector<1x512xf32>
    %479 = tpu.matmul %478, %349, %cst_132 {dimension_numbers = #tpu.dot_dimension_numbers<[1], [0], [0], [1], [0, 0, 1, 1], [], []>} : vector<1x128xbf16>, vector<128x512xbf16>, vector<1x512xf32> -> vector<1x512xf32>
    %480 = arith.addf %477, %479 : vector<1x512xf32>
    %481 = vector.extract_strided_slice %480 {offsets = [0, 0], sizes = [1, 128], strides = [1, 1]} : vector<1x512xf32> to vector<1x128xf32>
    %482 = arith.negf %481 : vector<1x128xf32>
    %483 = math.exp %482 : vector<1x128xf32>
    %cst_133 = arith.constant 1.000000e+00 : f32
    %484 = vector.broadcast %cst_133 : f32 to vector<1x128xf32>
    %485 = arith.addf %484, %483 : vector<1x128xf32>
    %486 = arith.divf %484, %485 : vector<1x128xf32>
    %487 = vector.extract_strided_slice %480 {offsets = [0, 128], sizes = [1, 128], strides = [1, 1]} : vector<1x512xf32> to vector<1x128xf32>
    %488 = arith.negf %487 : vector<1x128xf32>
    %489 = math.exp %488 : vector<1x128xf32>
    %cst_134 = arith.constant 1.000000e+00 : f32
    %490 = vector.broadcast %cst_134 : f32 to vector<1x128xf32>
    %491 = arith.addf %490, %489 : vector<1x128xf32>
    %492 = arith.divf %490, %491 : vector<1x128xf32>
    %493 = vector.extract_strided_slice %480 {offsets = [0, 256], sizes = [1, 128], strides = [1, 1]} : vector<1x512xf32> to vector<1x128xf32>
    %494 = math.tanh %493 : vector<1x128xf32>
    %495 = vector.extract_strided_slice %480 {offsets = [0, 384], sizes = [1, 128], strides = [1, 1]} : vector<1x512xf32> to vector<1x128xf32>
    %496 = arith.negf %495 : vector<1x128xf32>
    %497 = math.exp %496 : vector<1x128xf32>
    %cst_135 = arith.constant 1.000000e+00 : f32
    %498 = vector.broadcast %cst_135 : f32 to vector<1x128xf32>
    %499 = arith.addf %498, %497 : vector<1x128xf32>
    %500 = arith.divf %498, %499 : vector<1x128xf32>
    %501 = arith.mulf %492, %464 : vector<1x128xf32>
    %502 = arith.mulf %486, %494 : vector<1x128xf32>
    %503 = arith.addf %501, %502 : vector<1x128xf32>
    %504 = math.tanh %503 : vector<1x128xf32>
    %505 = arith.mulf %500, %504 : vector<1x128xf32>
    %506 = vector.extract_strided_slice %505 {offsets = [0, 0], sizes = [1, 64], strides = [1, 1]} : vector<1x128xf32> to vector<1x64xf32>
    %c1_136 = arith.constant 1 : index
    %c3_137 = arith.constant 3 : index
    %c0_138 = arith.constant 0 : index
    %507 = vector.load %arg7[%c1_136, %c3_137, %c0_138] : memref<2x8x128xf32, #tpu.memory_space<vmem>>, vector<1x1x64xf32>
    %508 = vector.shape_cast %507 : vector<1x1x64xf32> to vector<1x64xf32>
    %509 = vector.shape_cast %506 : vector<1x64xf32> to vector<1x1x64xf32>
    tpu.vector_store %arg7[%c1_136, %c3_137, %c0_138], %509 {strides = array<i32>} : memref<2x8x128xf32, #tpu.memory_space<vmem>>, vector<1x1x64xf32>,
    %510 = vector.extract_strided_slice %505 {offsets = [0, 64], sizes = [1, 64], strides = [1, 1]} : vector<1x128xf32> to vector<1x64xf32>
    %c1_139 = arith.constant 1 : index
    %c4_140 = arith.constant 4 : index
    %c64_141 = arith.constant 64 : index
    %511 = vector.load %arg7[%c1_139, %c4_140, %c64_141] : memref<2x8x128xf32, #tpu.memory_space<vmem>>, vector<1x1x64xf32>
    %512 = vector.shape_cast %511 : vector<1x1x64xf32> to vector<1x64xf32>
    %513 = vector.shape_cast %510 : vector<1x64xf32> to vector<1x1x64xf32>
    tpu.vector_store %arg7[%c1_139, %c4_140, %c64_141], %513 {strides = array<i32>} : memref<2x8x128xf32, #tpu.memory_space<vmem>>, vector<1x1x64xf32>,
    %514 = vector.extract_strided_slice %355 {offsets = [3, 0], sizes = [1, 512], strides = [1, 1]} : vector<8x512xf32> to vector<1x512xf32>
    %515 = vector.extract_strided_slice %355 {offsets = [4, 0], sizes = [1, 512], strides = [1, 1]} : vector<8x512xf32> to vector<1x512xf32>
    %516 = arith.select %19, %514, %515 : vector<1x512xi1>, vector<1x512xf32>
    %517 = arith.truncf %505 : vector<1x128xf32> to vector<1x128xbf16>
    %cst_142 = arith.constant dense<0.000000e+00> : vector<1x512xf32>
    %518 = tpu.matmul %517, %349, %cst_142 {dimension_numbers = #tpu.dot_dimension_numbers<[1], [0], [0], [1], [0, 0, 1, 1], [], []>} : vector<1x128xbf16>, vector<128x512xbf16>, vector<1x512xf32> -> vector<1x512xf32>
    %519 = arith.addf %516, %518 : vector<1x512xf32>
    %520 = vector.extract_strided_slice %519 {offsets = [0, 0], sizes = [1, 128], strides = [1, 1]} : vector<1x512xf32> to vector<1x128xf32>
    %521 = arith.negf %520 : vector<1x128xf32>
    %522 = math.exp %521 : vector<1x128xf32>
    %cst_143 = arith.constant 1.000000e+00 : f32
    %523 = vector.broadcast %cst_143 : f32 to vector<1x128xf32>
    %524 = arith.addf %523, %522 : vector<1x128xf32>
    %525 = arith.divf %523, %524 : vector<1x128xf32>
    %526 = vector.extract_strided_slice %519 {offsets = [0, 128], sizes = [1, 128], strides = [1, 1]} : vector<1x512xf32> to vector<1x128xf32>
    %527 = arith.negf %526 : vector<1x128xf32>
    %528 = math.exp %527 : vector<1x128xf32>
    %cst_144 = arith.constant 1.000000e+00 : f32
    %529 = vector.broadcast %cst_144 : f32 to vector<1x128xf32>
    %530 = arith.addf %529, %528 : vector<1x128xf32>
    %531 = arith.divf %529, %530 : vector<1x128xf32>
    %532 = vector.extract_strided_slice %519 {offsets = [0, 256], sizes = [1, 128], strides = [1, 1]} : vector<1x512xf32> to vector<1x128xf32>
    %533 = math.tanh %532 : vector<1x128xf32>
    %534 = vector.extract_strided_slice %519 {offsets = [0, 384], sizes = [1, 128], strides = [1, 1]} : vector<1x512xf32> to vector<1x128xf32>
    %535 = arith.negf %534 : vector<1x128xf32>
    %536 = math.exp %535 : vector<1x128xf32>
    %cst_145 = arith.constant 1.000000e+00 : f32
    %537 = vector.broadcast %cst_145 : f32 to vector<1x128xf32>
    %538 = arith.addf %537, %536 : vector<1x128xf32>
    %539 = arith.divf %537, %538 : vector<1x128xf32>
    %540 = arith.mulf %531, %503 : vector<1x128xf32>
    %541 = arith.mulf %525, %533 : vector<1x128xf32>
    %542 = arith.addf %540, %541 : vector<1x128xf32>
    %543 = math.tanh %542 : vector<1x128xf32>
    %544 = arith.mulf %539, %543 : vector<1x128xf32>
    %545 = vector.extract_strided_slice %544 {offsets = [0, 0], sizes = [1, 64], strides = [1, 1]} : vector<1x128xf32> to vector<1x64xf32>
    %c1_146 = arith.constant 1 : index
    %c4_147 = arith.constant 4 : index
    %c0_148 = arith.constant 0 : index
    %546 = vector.load %arg7[%c1_146, %c4_147, %c0_148] : memref<2x8x128xf32, #tpu.memory_space<vmem>>, vector<1x1x64xf32>
    %547 = vector.shape_cast %546 : vector<1x1x64xf32> to vector<1x64xf32>
    %548 = vector.shape_cast %545 : vector<1x64xf32> to vector<1x1x64xf32>
    tpu.vector_store %arg7[%c1_146, %c4_147, %c0_148], %548 {strides = array<i32>} : memref<2x8x128xf32, #tpu.memory_space<vmem>>, vector<1x1x64xf32>,
    %549 = vector.extract_strided_slice %544 {offsets = [0, 64], sizes = [1, 64], strides = [1, 1]} : vector<1x128xf32> to vector<1x64xf32>
    %c1_149 = arith.constant 1 : index
    %c3_150 = arith.constant 3 : index
    %c64_151 = arith.constant 64 : index
    %550 = vector.load %arg7[%c1_149, %c3_150, %c64_151] : memref<2x8x128xf32, #tpu.memory_space<vmem>>, vector<1x1x64xf32>
    %551 = vector.shape_cast %550 : vector<1x1x64xf32> to vector<1x64xf32>
    %552 = vector.shape_cast %549 : vector<1x64xf32> to vector<1x1x64xf32>
    tpu.vector_store %arg7[%c1_149, %c3_150, %c64_151], %552 {strides = array<i32>} : memref<2x8x128xf32, #tpu.memory_space<vmem>>, vector<1x1x64xf32>,
    %553 = vector.extract_strided_slice %355 {offsets = [2, 0], sizes = [1, 512], strides = [1, 1]} : vector<8x512xf32> to vector<1x512xf32>
    %554 = vector.extract_strided_slice %355 {offsets = [5, 0], sizes = [1, 512], strides = [1, 1]} : vector<8x512xf32> to vector<1x512xf32>
    %555 = arith.select %19, %553, %554 : vector<1x512xi1>, vector<1x512xf32>
    %556 = arith.truncf %544 : vector<1x128xf32> to vector<1x128xbf16>
    %cst_152 = arith.constant dense<0.000000e+00> : vector<1x512xf32>
    %557 = tpu.matmul %556, %349, %cst_152 {dimension_numbers = #tpu.dot_dimension_numbers<[1], [0], [0], [1], [0, 0, 1, 1], [], []>} : vector<1x128xbf16>, vector<128x512xbf16>, vector<1x512xf32> -> vector<1x512xf32>
    %558 = arith.addf %555, %557 : vector<1x512xf32>
    %559 = vector.extract_strided_slice %558 {offsets = [0, 0], sizes = [1, 128], strides = [1, 1]} : vector<1x512xf32> to vector<1x128xf32>
    %560 = arith.negf %559 : vector<1x128xf32>
    %561 = math.exp %560 : vector<1x128xf32>
    %cst_153 = arith.constant 1.000000e+00 : f32
    %562 = vector.broadcast %cst_153 : f32 to vector<1x128xf32>
    %563 = arith.addf %562, %561 : vector<1x128xf32>
    %564 = arith.divf %562, %563 : vector<1x128xf32>
    %565 = vector.extract_strided_slice %558 {offsets = [0, 128], sizes = [1, 128], strides = [1, 1]} : vector<1x512xf32> to vector<1x128xf32>
    %566 = arith.negf %565 : vector<1x128xf32>
    %567 = math.exp %566 : vector<1x128xf32>
    %cst_154 = arith.constant 1.000000e+00 : f32
    %568 = vector.broadcast %cst_154 : f32 to vector<1x128xf32>
    %569 = arith.addf %568, %567 : vector<1x128xf32>
    %570 = arith.divf %568, %569 : vector<1x128xf32>
    %571 = vector.extract_strided_slice %558 {offsets = [0, 256], sizes = [1, 128], strides = [1, 1]} : vector<1x512xf32> to vector<1x128xf32>
    %572 = math.tanh %571 : vector<1x128xf32>
    %573 = vector.extract_strided_slice %558 {offsets = [0, 384], sizes = [1, 128], strides = [1, 1]} : vector<1x512xf32> to vector<1x128xf32>
    %574 = arith.negf %573 : vector<1x128xf32>
    %575 = math.exp %574 : vector<1x128xf32>
    %cst_155 = arith.constant 1.000000e+00 : f32
    %576 = vector.broadcast %cst_155 : f32 to vector<1x128xf32>
    %577 = arith.addf %576, %575 : vector<1x128xf32>
    %578 = arith.divf %576, %577 : vector<1x128xf32>
    %579 = arith.mulf %570, %542 : vector<1x128xf32>
    %580 = arith.mulf %564, %572 : vector<1x128xf32>
    %581 = arith.addf %579, %580 : vector<1x128xf32>
    %582 = math.tanh %581 : vector<1x128xf32>
    %583 = arith.mulf %578, %582 : vector<1x128xf32>
    %584 = vector.extract_strided_slice %583 {offsets = [0, 0], sizes = [1, 64], strides = [1, 1]} : vector<1x128xf32> to vector<1x64xf32>
    %c1_156 = arith.constant 1 : index
    %c5_157 = arith.constant 5 : index
    %c0_158 = arith.constant 0 : index
    %585 = vector.load %arg7[%c1_156, %c5_157, %c0_158] : memref<2x8x128xf32, #tpu.memory_space<vmem>>, vector<1x1x64xf32>
    %586 = vector.shape_cast %585 : vector<1x1x64xf32> to vector<1x64xf32>
    %587 = vector.shape_cast %584 : vector<1x64xf32> to vector<1x1x64xf32>
    tpu.vector_store %arg7[%c1_156, %c5_157, %c0_158], %587 {strides = array<i32>} : memref<2x8x128xf32, #tpu.memory_space<vmem>>, vector<1x1x64xf32>,
    %588 = vector.extract_strided_slice %583 {offsets = [0, 64], sizes = [1, 64], strides = [1, 1]} : vector<1x128xf32> to vector<1x64xf32>
    %c1_159 = arith.constant 1 : index
    %c2_160 = arith.constant 2 : index
    %c64_161 = arith.constant 64 : index
    %589 = vector.load %arg7[%c1_159, %c2_160, %c64_161] : memref<2x8x128xf32, #tpu.memory_space<vmem>>, vector<1x1x64xf32>
    %590 = vector.shape_cast %589 : vector<1x1x64xf32> to vector<1x64xf32>
    %591 = vector.shape_cast %588 : vector<1x64xf32> to vector<1x1x64xf32>
    tpu.vector_store %arg7[%c1_159, %c2_160, %c64_161], %591 {strides = array<i32>} : memref<2x8x128xf32, #tpu.memory_space<vmem>>, vector<1x1x64xf32>,
    %592 = vector.extract_strided_slice %355 {offsets = [1, 0], sizes = [1, 512], strides = [1, 1]} : vector<8x512xf32> to vector<1x512xf32>
    %593 = vector.extract_strided_slice %355 {offsets = [6, 0], sizes = [1, 512], strides = [1, 1]} : vector<8x512xf32> to vector<1x512xf32>
    %594 = arith.select %19, %592, %593 : vector<1x512xi1>, vector<1x512xf32>
    %595 = arith.truncf %583 : vector<1x128xf32> to vector<1x128xbf16>
    %cst_162 = arith.constant dense<0.000000e+00> : vector<1x512xf32>
    %596 = tpu.matmul %595, %349, %cst_162 {dimension_numbers = #tpu.dot_dimension_numbers<[1], [0], [0], [1], [0, 0, 1, 1], [], []>} : vector<1x128xbf16>, vector<128x512xbf16>, vector<1x512xf32> -> vector<1x512xf32>
    %597 = arith.addf %594, %596 : vector<1x512xf32>
    %598 = vector.extract_strided_slice %597 {offsets = [0, 0], sizes = [1, 128], strides = [1, 1]} : vector<1x512xf32> to vector<1x128xf32>
    %599 = arith.negf %598 : vector<1x128xf32>
    %600 = math.exp %599 : vector<1x128xf32>
    %cst_163 = arith.constant 1.000000e+00 : f32
    %601 = vector.broadcast %cst_163 : f32 to vector<1x128xf32>
    %602 = arith.addf %601, %600 : vector<1x128xf32>
    %603 = arith.divf %601, %602 : vector<1x128xf32>
    %604 = vector.extract_strided_slice %597 {offsets = [0, 128], sizes = [1, 128], strides = [1, 1]} : vector<1x512xf32> to vector<1x128xf32>
    %605 = arith.negf %604 : vector<1x128xf32>
    %606 = math.exp %605 : vector<1x128xf32>
    %cst_164 = arith.constant 1.000000e+00 : f32
    %607 = vector.broadcast %cst_164 : f32 to vector<1x128xf32>
    %608 = arith.addf %607, %606 : vector<1x128xf32>
    %609 = arith.divf %607, %608 : vector<1x128xf32>
    %610 = vector.extract_strided_slice %597 {offsets = [0, 256], sizes = [1, 128], strides = [1, 1]} : vector<1x512xf32> to vector<1x128xf32>
    %611 = math.tanh %610 : vector<1x128xf32>
    %612 = vector.extract_strided_slice %597 {offsets = [0, 384], sizes = [1, 128], strides = [1, 1]} : vector<1x512xf32> to vector<1x128xf32>
    %613 = arith.negf %612 : vector<1x128xf32>
    %614 = math.exp %613 : vector<1x128xf32>
    %cst_165 = arith.constant 1.000000e+00 : f32
    %615 = vector.broadcast %cst_165 : f32 to vector<1x128xf32>
    %616 = arith.addf %615, %614 : vector<1x128xf32>
    %617 = arith.divf %615, %616 : vector<1x128xf32>
    %618 = arith.mulf %609, %581 : vector<1x128xf32>
    %619 = arith.mulf %603, %611 : vector<1x128xf32>
    %620 = arith.addf %618, %619 : vector<1x128xf32>
    %621 = math.tanh %620 : vector<1x128xf32>
    %622 = arith.mulf %617, %621 : vector<1x128xf32>
    %623 = vector.extract_strided_slice %622 {offsets = [0, 0], sizes = [1, 64], strides = [1, 1]} : vector<1x128xf32> to vector<1x64xf32>
    %c1_166 = arith.constant 1 : index
    %c6_167 = arith.constant 6 : index
    %c0_168 = arith.constant 0 : index
    %624 = vector.load %arg7[%c1_166, %c6_167, %c0_168] : memref<2x8x128xf32, #tpu.memory_space<vmem>>, vector<1x1x64xf32>
    %625 = vector.shape_cast %624 : vector<1x1x64xf32> to vector<1x64xf32>
    %626 = vector.shape_cast %623 : vector<1x64xf32> to vector<1x1x64xf32>
    tpu.vector_store %arg7[%c1_166, %c6_167, %c0_168], %626 {strides = array<i32>} : memref<2x8x128xf32, #tpu.memory_space<vmem>>, vector<1x1x64xf32>,
    %627 = vector.extract_strided_slice %622 {offsets = [0, 64], sizes = [1, 64], strides = [1, 1]} : vector<1x128xf32> to vector<1x64xf32>
    %c1_169 = arith.constant 1 : index
    %c1_170 = arith.constant 1 : index
    %c64_171 = arith.constant 64 : index
    %628 = vector.load %arg7[%c1_169, %c1_170, %c64_171] : memref<2x8x128xf32, #tpu.memory_space<vmem>>, vector<1x1x64xf32>
    %629 = vector.shape_cast %628 : vector<1x1x64xf32> to vector<1x64xf32>
    %630 = vector.shape_cast %627 : vector<1x64xf32> to vector<1x1x64xf32>
    tpu.vector_store %arg7[%c1_169, %c1_170, %c64_171], %630 {strides = array<i32>} : memref<2x8x128xf32, #tpu.memory_space<vmem>>, vector<1x1x64xf32>,
    %631 = vector.extract_strided_slice %355 {offsets = [0, 0], sizes = [1, 512], strides = [1, 1]} : vector<8x512xf32> to vector<1x512xf32>
    %632 = vector.extract_strided_slice %355 {offsets = [7, 0], sizes = [1, 512], strides = [1, 1]} : vector<8x512xf32> to vector<1x512xf32>
    %633 = arith.select %19, %631, %632 : vector<1x512xi1>, vector<1x512xf32>
    %634 = arith.truncf %622 : vector<1x128xf32> to vector<1x128xbf16>
    %cst_172 = arith.constant dense<0.000000e+00> : vector<1x512xf32>
    %635 = tpu.matmul %634, %349, %cst_172 {dimension_numbers = #tpu.dot_dimension_numbers<[1], [0], [0], [1], [0, 0, 1, 1], [], []>} : vector<1x128xbf16>, vector<128x512xbf16>, vector<1x512xf32> -> vector<1x512xf32>
    %636 = arith.addf %633, %635 : vector<1x512xf32>
    %637 = vector.extract_strided_slice %636 {offsets = [0, 0], sizes = [1, 128], strides = [1, 1]} : vector<1x512xf32> to vector<1x128xf32>
    %638 = arith.negf %637 : vector<1x128xf32>
    %639 = math.exp %638 : vector<1x128xf32>
    %cst_173 = arith.constant 1.000000e+00 : f32
    %640 = vector.broadcast %cst_173 : f32 to vector<1x128xf32>
    %641 = arith.addf %640, %639 : vector<1x128xf32>
    %642 = arith.divf %640, %641 : vector<1x128xf32>
    %643 = vector.extract_strided_slice %636 {offsets = [0, 128], sizes = [1, 128], strides = [1, 1]} : vector<1x512xf32> to vector<1x128xf32>
    %644 = arith.negf %643 : vector<1x128xf32>
    %645 = math.exp %644 : vector<1x128xf32>
    %cst_174 = arith.constant 1.000000e+00 : f32
    %646 = vector.broadcast %cst_174 : f32 to vector<1x128xf32>
    %647 = arith.addf %646, %645 : vector<1x128xf32>
    %648 = arith.divf %646, %647 : vector<1x128xf32>
    %649 = vector.extract_strided_slice %636 {offsets = [0, 256], sizes = [1, 128], strides = [1, 1]} : vector<1x512xf32> to vector<1x128xf32>
    %650 = math.tanh %649 : vector<1x128xf32>
    %651 = vector.extract_strided_slice %636 {offsets = [0, 384], sizes = [1, 128], strides = [1, 1]} : vector<1x512xf32> to vector<1x128xf32>
    %652 = arith.negf %651 : vector<1x128xf32>
    %653 = math.exp %652 : vector<1x128xf32>
    %cst_175 = arith.constant 1.000000e+00 : f32
    %654 = vector.broadcast %cst_175 : f32 to vector<1x128xf32>
    %655 = arith.addf %654, %653 : vector<1x128xf32>
    %656 = arith.divf %654, %655 : vector<1x128xf32>
    %657 = arith.mulf %648, %620 : vector<1x128xf32>
    %658 = arith.mulf %642, %650 : vector<1x128xf32>
    %659 = arith.addf %657, %658 : vector<1x128xf32>
    %660 = math.tanh %659 : vector<1x128xf32>
    %661 = arith.mulf %656, %660 : vector<1x128xf32>
    %662 = vector.extract_strided_slice %661 {offsets = [0, 0], sizes = [1, 64], strides = [1, 1]} : vector<1x128xf32> to vector<1x64xf32>
    %c1_176 = arith.constant 1 : index
    %c7_177 = arith.constant 7 : index
    %c0_178 = arith.constant 0 : index
    %663 = vector.load %arg7[%c1_176, %c7_177, %c0_178] : memref<2x8x128xf32, #tpu.memory_space<vmem>>, vector<1x1x64xf32>
    %664 = vector.shape_cast %663 : vector<1x1x64xf32> to vector<1x64xf32>
    %665 = vector.shape_cast %662 : vector<1x64xf32> to vector<1x1x64xf32>
    tpu.vector_store %arg7[%c1_176, %c7_177, %c0_178], %665 {strides = array<i32>} : memref<2x8x128xf32, #tpu.memory_space<vmem>>, vector<1x1x64xf32>,
    %666 = vector.extract_strided_slice %661 {offsets = [0, 64], sizes = [1, 64], strides = [1, 1]} : vector<1x128xf32> to vector<1x64xf32>
    %c1_179 = arith.constant 1 : index
    %c0_180 = arith.constant 0 : index
    %c64_181 = arith.constant 64 : index
    %667 = vector.load %arg7[%c1_179, %c0_180, %c64_181] : memref<2x8x128xf32, #tpu.memory_space<vmem>>, vector<1x1x64xf32>
    %668 = vector.shape_cast %667 : vector<1x1x64xf32> to vector<1x64xf32>
    %669 = vector.shape_cast %666 : vector<1x64xf32> to vector<1x1x64xf32>
    tpu.vector_store %arg7[%c1_179, %c0_180, %c64_181], %669 {strides = array<i32>} : memref<2x8x128xf32, #tpu.memory_space<vmem>>, vector<1x1x64xf32>,
    %c1_182 = arith.constant 1 : index
    %c0_183 = arith.constant 0 : index
    %c0_184 = arith.constant 0 : index
    %670 = vector.load %arg7[%c1_182, %c0_183, %c0_184] : memref<2x8x128xf32, #tpu.memory_space<vmem>>, vector<1x8x128xf32>
    %671 = vector.shape_cast %670 : vector<1x8x128xf32> to vector<8x128xf32>
    %672 = arith.addf %671, %0 : vector<8x128xf32>
    %c0_185 = arith.constant 0 : index
    %c0_186 = arith.constant 0 : index
    %c0_187 = arith.constant 0 : index
    %673 = vector.load %arg4[%c0_185, %c0_186, %c0_187] : memref<4x1x128xf32, #tpu.memory_space<vmem>>, vector<4x1x128xf32>
    %c0_188 = arith.constant 0 : index
    %c0_189 = arith.constant 0 : index
    %c0_190 = arith.constant 0 : index
    %674 = vector.load %arg6[%c0_188, %c0_189, %c0_190] : memref<4x24x128xf32, #tpu.memory_space<vmem>>, vector<4x1x128xf32>
    tpu.vector_store %arg6[%c0_188, %c0_189, %c0_190], %673 {strides = array<i32>} : memref<4x24x128xf32, #tpu.memory_space<vmem>>, vector<4x1x128xf32>,
    %675 = vector.shape_cast %672 : vector<8x128xf32> to vector<1x8x128xf32>
    %676 = vector.shape_cast %675 : vector<1x8x128xf32> to vector<1x8x128xf32>
    %677 = vector.broadcast %676 : vector<1x8x128xf32> to vector<4x8x128xf32>
    %c0_191 = arith.constant 0 : index
    %c1_192 = arith.constant 1 : index
    %c0_193 = arith.constant 0 : index
    %678 = vector.load %arg6[%c0_191, %c1_192, %c0_193] : memref<4x24x128xf32, #tpu.memory_space<vmem>>, vector<4x8x128xf32>
    tpu.vector_store %arg6[%c0_191, %c1_192, %c0_193], %677 {strides = array<i32>} : memref<4x24x128xf32, #tpu.memory_space<vmem>>, vector<4x8x128xf32>,
    %c0_194 = arith.constant 0 : index
    %c0_195 = arith.constant 0 : index
    %c0_196 = arith.constant 0 : index
    %679 = vector.load %arg5[%c0_194, %c0_195, %c0_196] : memref<4x15x128xf32, #tpu.memory_space<vmem>>, vector<4x15x128xf32>
    %c0_197 = arith.constant 0 : index
    %c9 = arith.constant 9 : index
    %c0_198 = arith.constant 0 : index
    %680 = vector.load %arg6[%c0_197, %c9, %c0_198] : memref<4x24x128xf32, #tpu.memory_space<vmem>>, vector<4x15x128xf32>
    tpu.vector_store %arg6[%c0_197, %c9, %c0_198], %679 {strides = array<i32>} : memref<4x24x128xf32, #tpu.memory_space<vmem>>, vector<4x15x128xf32>,
    return
  }
}

</mosaic_0001>

<llo_original>
// kernel: tpu_custom_call.1
$region0: #{tpu_custom_call.1}
  #allocation0 [shape = 'u32[]', space=smem, size = 0x4, offset = 0x4, fixed_abs, tag = 'smem constant byte address 0x4 - core index']
  #allocation1 [shape = 'u32[72,128]{1,0:T(1,128)}', space=vmem, size = 0x9000, scoped, tag = 'internal scratch']
  #allocation2 [shape = 'f32[2,8,128]{2,1,0:T(8,128)}', space=vmem, size = 0x2000, scoped, tag = 'scratch operand']
  %s0 = inlined_call_operand.vmem [shape: f32[8,128], index: 0, kind: input, shape index: {}]
  %s1 = inlined_call_operand.hbm [shape: bf16[2,128,512], index: 1, kind: input, shape index: {}]
  %s2 = inlined_call_operand.hbm [shape: bf16[2,128,512], index: 2, kind: input, shape index: {}]
  %s3 = inlined_call_operand.vmem [shape: f32[2,1,512], index: 3, kind: input, shape index: {}]
  %s4 = inlined_call_operand.vmem [shape: f32[4,1,128], index: 4, kind: input, shape index: {}]
  %s5 = inlined_call_operand.vmem [shape: f32[4,15,128], index: 5, kind: input, shape index: {}]
  %s6 = inlined_call_operand.hbm [shape: f32[4,24,128], index: 6, kind: output, shape index: {}]
  %s7 = sld [smem:[#allocation0]]
  $region42: #{tpu_custom_call.1} parent=0
    _
  %s9 = ssub.s32 1, %s7
  %s10 = scalar_select 0, %s9, %s7
  $region1: #{tpu_custom_call.1} parent=0
    #allocation3 [shape = 'u8[262144]{0}', space=vmem, size = 0x40000, scoped, tag = 'input window, operand 1, single buffered']
    #allocation4 [shape = 's32[1]{0}', space=sflag, size = 0x4, scoped, tag = 'scoped memory for tpu_custom_call.1']
    #allocation5 [shape = 's32[1]{0}', space=sflag, size = 0x4, scoped, tag = 'scoped memory for tpu_custom_call.1']
    #allocation6 [shape = 'u8[262144]{0}', space=vmem, size = 0x40000, scoped, tag = 'input window, operand 2, single buffered']
    #allocation7 [shape = 's32[1]{0}', space=sflag, size = 0x4, scoped, tag = 'scoped memory for tpu_custom_call.1']
    #allocation8 [shape = 'u8[49152]{0}', space=vmem, size = 0xc000, scoped, tag = 'output window, operand 0, single buffered']
    %11 = vsyncpa [#allocation4], 0
    %12 = vsyncpa [#allocation7], 0
    %13 = vsyncpa [#allocation5], 0
    // Predicated region
    $region2: #{tpu_custom_call.1} parent=1 // pred_check
      _
    $region3: #{tpu_custom_call.1} parent=1 // pred_check_branch
      %15 = sbr.rel (0) target = $region5
    $region4: #{tpu_custom_call.1} parent=1 // pred_region
      _
    $region5: #{tpu_custom_call.1} parent=1 // pred_fallthru
      _
    // Predicated region
    $region6: #{tpu_custom_call.1} parent=1 // pred_check
      _
    $region7: #{tpu_custom_call.1} parent=1 // pred_check_branch
      %17 = sbr.rel (0) target = $region9
    $region8: #{tpu_custom_call.1} parent=1 // pred_region
      %19 = vsyncadd [#allocation4], 0
      %s20 = sshll.u32 %s1, 4
      %s21 = int_to_ptr.hbm [resolvable:$true] %s20
      %s22 = sshll.u32 [#allocation3], 4
      %s23 = int_to_ptr.vmem [resolvable:$true] %s22
      %28 = dma.hbm_to_vmem [thread:$0]  %s21, 8192, %s23, [#allocation4], 256, 256, 16
    $region9: #{tpu_custom_call.1} parent=1 // pred_fallthru
      _
    // Predicated region
    $region10: #{tpu_custom_call.1} parent=1 // pred_check
      _
    $region11: #{tpu_custom_call.1} parent=1 // pred_check_branch
      %30 = sbr.rel (0) target = $region13
    $region12: #{tpu_custom_call.1} parent=1 // pred_region
      %32 = vsyncadd [#allocation7], 0
      %s33 = sshll.u32 %s2, 4
      %s34 = int_to_ptr.hbm [resolvable:$true] %s33
      %s35 = sshll.u32 [#allocation6], 4
      %s36 = int_to_ptr.vmem [resolvable:$true] %s35
      %41 = dma.hbm_to_vmem [thread:$0]  %s34, 8192, %s36, [#allocation7], 256, 256, 16
    $region13: #{tpu_custom_call.1} parent=1 // pred_fallthru
      _
    // Predicated region
    $region14: #{tpu_custom_call.1} parent=1 // pred_check
      _
    $region15: #{tpu_custom_call.1} parent=1 // pred_check_branch
      %43 = sbr.rel (0) target = $region17
    $region16: #{tpu_custom_call.1} parent=1 // pred_region
      _
    $region17: #{tpu_custom_call.1} parent=1 // pred_fallthru
      _
    // Predicated region
    $region18: #{tpu_custom_call.1} parent=1 // pred_check
      _
    $region19: #{tpu_custom_call.1} parent=1 // pred_check_branch
      %45 = sbr.rel (0) target = $region21
    $region20: #{tpu_custom_call.1} parent=1 // pred_region
      _
    $region21: #{tpu_custom_call.1} parent=1 // pred_fallthru
      _
    // Predicated region
    $region22: #{tpu_custom_call.1} parent=1 // pred_check
      _
    $region23: #{tpu_custom_call.1} parent=1 // pred_check_branch
      %47 = sbr.rel (0) target = $region25
    $region24: #{tpu_custom_call.1} parent=1 // pred_region
      _
    $region25: #{tpu_custom_call.1} parent=1 // pred_fallthru
      _
    // Predicated region
    $region26: #{tpu_custom_call.1} parent=1 // pred_check
      _
    $region27: #{tpu_custom_call.1} parent=1 // pred_check_branch
      %49 = sbr.rel (0) target = $region29
    $region28: #{tpu_custom_call.1} parent=1 // pred_region
      %51 = dma.done [#allocation4], 8192
    $region29: #{tpu_custom_call.1} parent=1 // pred_fallthru
      _
    // Predicated region
    $region30: #{tpu_custom_call.1} parent=1 // pred_check
      _
    $region31: #{tpu_custom_call.1} parent=1 // pred_check_branch
      %53 = sbr.rel (0) target = $region33
    $region32: #{tpu_custom_call.1} parent=1 // pred_region
      %55 = dma.done [#allocation7], 8192
    $region33: #{tpu_custom_call.1} parent=1 // pred_fallthru
      _
    %v57 = vld [vmem:[%s0] sm:$0xff]
    %v58 = vlaneseq
    %v59 = vand.u32 %v58, 127
    %v60 = vadd.s32 %v59, 128
    %v61 = vadd.s32 %v59, 256
    %v62 = vadd.s32 %v59, 384
    %vm63 = vcmp.lt.s32.totalorder %v59, 0
    %v64 = vsub.s32 0, %v59
    %v65 = vsel %vm63, %v64, %v59
    %v66 = vshrl.u32 %v65, 7
    %v67 = vand.u32 %v65, 127
    %v68 = vsub.s32 0, %v67
    %v69 = vsel %vm63, %v68, %v67
    %vm70 = vcmp.lt.s32.totalorder %v60, 0
    %v71 = vsub.s32 0, %v60
    %v72 = vsel %vm70, %v71, %v60
    %v73 = vshrl.u32 %v72, 7
    %v74 = vand.u32 %v72, 127
    %v75 = vsub.s32 0, %v74
    %v76 = vsel %vm70, %v75, %v74
    %vm77 = vcmp.lt.s32.totalorder %v61, 0
    %v78 = vsub.s32 0, %v61
    %v79 = vsel %vm77, %v78, %v61
    %v80 = vshrl.u32 %v79, 7
    %v81 = vand.u32 %v79, 127
    %v82 = vsub.s32 0, %v81
    %v83 = vsel %vm77, %v82, %v81
    %vm84 = vcmp.lt.s32.totalorder %v62, 0
    %v85 = vsub.s32 0, %v62
    %v86 = vsel %vm84, %v85, %v62
    %v87 = vshrl.u32 %v86, 7
    %v88 = vand.u32 %v86, 127
    %v89 = vsub.s32 0, %v88
    %v90 = vsel %vm84, %v89, %v88
    %vm91 = vcmp.ne.s32.totalorder %v69, 0
    %vm92 = vcmp.ne.s32.totalorder %v76, 0
    %vm93 = vcmp.ne.s32.totalorder %v83, 0
    %vm94 = vcmp.ne.s32.totalorder %v90, 0
    %vm95 = vcmp.lt.s32.totalorder %v69, 0
    %vm96 = vcmp.lt.s32.totalorder %v76, 0
    %vm97 = vcmp.lt.s32.totalorder %v83, 0
    %vm98 = vcmp.lt.s32.totalorder %v90, 0
    %vm99 = vmand %vm95, %vm91
    %vm100 = vmand %vm96, %vm92
    %vm101 = vmand %vm97, %vm93
    %vm102 = vmand %vm98, %vm94
    %v103 = vadd.s32 %v69, 128
    %v104 = vadd.s32 %v76, 128
    %v105 = vadd.s32 %v83, 128
    %v106 = vadd.s32 %v90, 128
    %v107 = vsel %vm99, %v103, %v69
    %v108 = vsel %vm100, %v104, %v76
    %v109 = vsel %vm101, %v105, %v83
    %v110 = vsel %vm102, %v106, %v90
    %vm111 = vcmp.ge.s32.totalorder %v107, 64
    %vm112 = vcmp.ge.s32.totalorder %v108, 64
    %vm113 = vcmp.ge.s32.totalorder %v109, 64
    %vm114 = vcmp.ge.s32.totalorder %v110, 64
    %v115 = vld [vmem:[#allocation3] sm:$0xff]
    %v116 = vld [vmem:[#allocation3 + $0x8] sm:$0xff]
    %v117 = vld [vmem:[#allocation3 + $0x10] sm:$0xff]
    %v118 = vld [vmem:[#allocation3 + $0x18] sm:$0xff]
    %v119 = vld [vmem:[#allocation3 + $0x20] sm:$0xff]
    %v120 = vld [vmem:[#allocation3 + $0x28] sm:$0xff]
    %v121 = vld [vmem:[#allocation3 + $0x30] sm:$0xff]
    %v122 = vld [vmem:[#allocation3 + $0x38] sm:$0xff]
    %v123 = vld [vmem:[#allocation3 + $0x40] sm:$0xff]
    %v124 = vld [vmem:[#allocation3 + $0x48] sm:$0xff]
    %v125 = vld [vmem:[#allocation3 + $0x50] sm:$0xff]
    %v126 = vld [vmem:[#allocation3 + $0x58] sm:$0xff]
    %v127 = vld [vmem:[#allocation3 + $0x60] sm:$0xff]
    %v128 = vld [vmem:[#allocation3 + $0x68] sm:$0xff]
    %v129 = vld [vmem:[#allocation3 + $0x70] sm:$0xff]
    %v130 = vld [vmem:[#allocation3 + $0x78] sm:$0xff]
    %v131 = vld [vmem:[#allocation3 + $0x80] sm:$0xff]
    %v132 = vld [vmem:[#allocation3 + $0x88] sm:$0xff]
    %v133 = vld [vmem:[#allocation3 + $0x90] sm:$0xff]
    %v134 = vld [vmem:[#allocation3 + $0x98] sm:$0xff]
    %v135 = vld [vmem:[#allocation3 + $0xa0] sm:$0xff]
    %v136 = vld [vmem:[#allocation3 + $0xa8] sm:$0xff]
    %v137 = vld [vmem:[#allocation3 + $0xb0] sm:$0xff]
    %v138 = vld [vmem:[#allocation3 + $0xb8] sm:$0xff]
    %v139 = vld [vmem:[#allocation3 + $0xc0] sm:$0xff]
    %v140 = vld [vmem:[#allocation3 + $0xc8] sm:$0xff]
    %v141 = vld [vmem:[#allocation3 + $0xd0] sm:$0xff]
    %v142 = vld [vmem:[#allocation3 + $0xd8] sm:$0xff]
    %v143 = vld [vmem:[#allocation3 + $0xe0] sm:$0xff]
    %v144 = vld [vmem:[#allocation3 + $0xe8] sm:$0xff]
    %v145 = vld [vmem:[#allocation3 + $0xf0] sm:$0xff]
    %v146 = vld [vmem:[#allocation3 + $0xf8] sm:$0xff]
    %v147 = vld [vmem:[#allocation6] sm:$0xff]
    %v148 = vld [vmem:[#allocation6 + $0x8] sm:$0xff]
    %v149 = vld [vmem:[#allocation6 + $0x10] sm:$0xff]
    %v150 = vld [vmem:[#allocation6 + $0x18] sm:$0xff]
    %v151 = vld [vmem:[#allocation6 + $0x20] sm:$0xff]
    %v152 = vld [vmem:[#allocation6 + $0x28] sm:$0xff]
    %v153 = vld [vmem:[#allocation6 + $0x30] sm:$0xff]
    %v154 = vld [vmem:[#allocation6 + $0x38] sm:$0xff]
    %v155 = vld [vmem:[#allocation6 + $0x40] sm:$0xff]
    %v156 = vld [vmem:[#allocation6 + $0x48] sm:$0xff]
    %v157 = vld [vmem:[#allocation6 + $0x50] sm:$0xff]
    %v158 = vld [vmem:[#allocation6 + $0x58] sm:$0xff]
    %v159 = vld [vmem:[#allocation6 + $0x60] sm:$0xff]
    %v160 = vld [vmem:[#allocation6 + $0x68] sm:$0xff]
    %v161 = vld [vmem:[#allocation6 + $0x70] sm:$0xff]
    %v162 = vld [vmem:[#allocation6 + $0x78] sm:$0xff]
    %v163 = vld [vmem:[#allocation6 + $0x80] sm:$0xff]
    %v164 = vld [vmem:[#allocation6 + $0x88] sm:$0xff]
    %v165 = vld [vmem:[#allocation6 + $0x90] sm:$0xff]
    %v166 = vld [vmem:[#allocation6 + $0x98] sm:$0xff]
    %v167 = vld [vmem:[#allocation6 + $0xa0] sm:$0xff]
    %v168 = vld [vmem:[#allocation6 + $0xa8] sm:$0xff]
    %v169 = vld [vmem:[#allocation6 + $0xb0] sm:$0xff]
    %v170 = vld [vmem:[#allocation6 + $0xb8] sm:$0xff]
    %v171 = vld [vmem:[#allocation6 + $0xc0] sm:$0xff]
    %v172 = vld [vmem:[#allocation6 + $0xc8] sm:$0xff]
    %v173 = vld [vmem:[#allocation6 + $0xd0] sm:$0xff]
    %v174 = vld [vmem:[#allocation6 + $0xd8] sm:$0xff]
    %v175 = vld [vmem:[#allocation6 + $0xe0] sm:$0xff]
    %v176 = vld [vmem:[#allocation6 + $0xe8] sm:$0xff]
    %v177 = vld [vmem:[#allocation6 + $0xf0] sm:$0xff]
    %v178 = vld [vmem:[#allocation6 + $0xf8] sm:$0xff]
    %v179 = vld [vmem:[%s3] sm:$0xf]
    %v180 = vpack.c.bf16 %v57, %v57
    %v182 = vperm.slane %v179, 0
    %v183 = vperm.slane %v179, 1
    %v184 = vperm.slane %v179, 2
    %v185 = vperm.slane %v179, 3
    %v222 = vunpack.c.l.b16 %v115
    %v223 = vunpack.c.h.b16 %v115
    %v224 = vunpack.c.l.b16 %v116
    %v225 = vunpack.c.h.b16 %v116
    %v226 = vunpack.c.l.b16 %v117
    %v227 = vunpack.c.h.b16 %v117
    %v228 = vunpack.c.l.b16 %v118
    %v229 = vunpack.c.h.b16 %v118
    %v230 = vunpack.c.l.b16 %v119
    %v231 = vunpack.c.h.b16 %v119
    %v232 = vunpack.c.l.b16 %v120
    %v233 = vunpack.c.h.b16 %v120
    %v234 = vunpack.c.l.b16 %v121
    %v235 = vunpack.c.h.b16 %v121
    %v236 = vunpack.c.l.b16 %v122
    %v237 = vunpack.c.h.b16 %v122
    %v238 = vunpack.c.l.b16 %v123
    %v239 = vunpack.c.h.b16 %v123
    %v240 = vunpack.c.l.b16 %v124
    %v241 = vunpack.c.h.b16 %v124
    %v242 = vunpack.c.l.b16 %v125
    %v243 = vunpack.c.h.b16 %v125
    %v244 = vunpack.c.l.b16 %v126
    %v245 = vunpack.c.h.b16 %v126
    %v246 = vunpack.c.l.b16 %v127
    %v247 = vunpack.c.h.b16 %v127
    %v248 = vunpack.c.l.b16 %v128
    %v249 = vunpack.c.h.b16 %v128
    %v250 = vunpack.c.l.b16 %v129
    %v251 = vunpack.c.h.b16 %v129
    %v252 = vunpack.c.l.b16 %v130
    %v253 = vunpack.c.h.b16 %v130
    %v254 = vunpack.c.l.b16 %v131
    %v255 = vunpack.c.h.b16 %v131
    %v256 = vunpack.c.l.b16 %v132
    %v257 = vunpack.c.h.b16 %v132
    %v258 = vunpack.c.l.b16 %v133
    %v259 = vunpack.c.h.b16 %v133
    %v260 = vunpack.c.l.b16 %v134
    %v261 = vunpack.c.h.b16 %v134
    %v262 = vunpack.c.l.b16 %v135
    %v263 = vunpack.c.h.b16 %v135
    %v264 = vunpack.c.l.b16 %v136
    %v265 = vunpack.c.h.b16 %v136
    %v266 = vunpack.c.l.b16 %v137
    %v267 = vunpack.c.h.b16 %v137
    %v268 = vunpack.c.l.b16 %v138
    %v269 = vunpack.c.h.b16 %v138
    %v270 = vunpack.c.l.b16 %v139
    %v271 = vunpack.c.h.b16 %v139
    %v272 = vunpack.c.l.b16 %v140
    %v273 = vunpack.c.h.b16 %v140
    %v274 = vunpack.c.l.b16 %v141
    %v275 = vunpack.c.h.b16 %v141
    %v276 = vunpack.c.l.b16 %v142
    %v277 = vunpack.c.h.b16 %v142
    %v278 = vunpack.c.l.b16 %v143
    %v279 = vunpack.c.h.b16 %v143
    %v280 = vunpack.c.l.b16 %v144
    %v281 = vunpack.c.h.b16 %v144
    %v282 = vunpack.c.l.b16 %v145
    %v283 = vunpack.c.h.b16 %v145
    %v284 = vunpack.c.l.b16 %v146
    %v285 = vunpack.c.h.b16 %v146
    %v286 = vpack.c.b16 %v226, %v222
    %v287 = vpack.c.b16 %v227, %v223
    %v288 = vpack.c.b16 %v228, %v224
    %v289 = vpack.c.b16 %v229, %v225
    %v290 = vpack.c.b16 %v234, %v230
    %v291 = vpack.c.b16 %v235, %v231
    %v292 = vpack.c.b16 %v236, %v232
    %v293 = vpack.c.b16 %v237, %v233
    %v294 = vpack.c.b16 %v242, %v238
    %v295 = vpack.c.b16 %v243, %v239
    %v296 = vpack.c.b16 %v244, %v240
    %v297 = vpack.c.b16 %v245, %v241
    %v298 = vpack.c.b16 %v250, %v246
    %v299 = vpack.c.b16 %v251, %v247
    %v300 = vpack.c.b16 %v252, %v248
    %v301 = vpack.c.b16 %v253, %v249
    %v302 = vpack.c.b16 %v258, %v254
    %v303 = vpack.c.b16 %v259, %v255
    %v304 = vpack.c.b16 %v260, %v256
    %v305 = vpack.c.b16 %v261, %v257
    %v306 = vpack.c.b16 %v266, %v262
    %v307 = vpack.c.b16 %v267, %v263
    %v308 = vpack.c.b16 %v268, %v264
    %v309 = vpack.c.b16 %v269, %v265
    %v310 = vpack.c.b16 %v274, %v270
    %v311 = vpack.c.b16 %v275, %v271
    %v312 = vpack.c.b16 %v276, %v272
    %v313 = vpack.c.b16 %v277, %v273
    %v314 = vpack.c.b16 %v282, %v278
    %v315 = vpack.c.b16 %v283, %v279
    %v316 = vpack.c.b16 %v284, %v280
    %v317 = vpack.c.b16 %v285, %v281
    %350 = vmatpush.bf16.msra.mxu0 %v314
    %351 = vmatpush.bf16.msra.mxu0 %v310
    %352 = vmatpush.bf16.msra.mxu0 %v306
    %353 = vmatpush.bf16.msra.mxu0 %v302
    %354 = vmatpush.bf16.msra.mxu0 %v298
    %355 = vmatpush.bf16.msra.mxu0 %v294
    %356 = vmatpush.bf16.msra.mxu0 %v290
    %357 = vmatpush.bf16.msra.mxu0 %v286
    %358 = vmatmul.bf16.gmra.mxu0 %v180
    %v359 = vpop.f32.mrf.mxu0
    %v360 = vadd.f32 %v182, %v359
    %v361 = vpop.f32.mrf.mxu0
    %362 = vdwg.mxu0
    %363 = vmatpush.bf16.msra.mxu0 %v315
    %364 = vmatpush.bf16.msra.mxu0 %v311
    %365 = vmatpush.bf16.msra.mxu0 %v307
    %366 = vmatpush.bf16.msra.mxu0 %v303
    %367 = vmatpush.bf16.msra.mxu0 %v299
    %368 = vmatpush.bf16.msra.mxu0 %v295
    %369 = vmatpush.bf16.msra.mxu0 %v291
    %370 = vmatpush.bf16.msra.mxu0 %v287
    %371 = vmatmul.bf16.gmra.mxu0 %v180
    %v372 = vpop.f32.mrf.mxu0
    %v373 = vadd.f32 %v183, %v372
    %v374 = vpop.f32.mrf.mxu0
    %375 = vdwg.mxu0
    %376 = vmatpush.bf16.msra.mxu0 %v316
    %377 = vmatpush.bf16.msra.mxu0 %v312
    %378 = vmatpush.bf16.msra.mxu0 %v308
    %379 = vmatpush.bf16.msra.mxu0 %v304
    %380 = vmatpush.bf16.msra.mxu0 %v300
    %381 = vmatpush.bf16.msra.mxu0 %v296
    %382 = vmatpush.bf16.msra.mxu0 %v292
    %383 = vmatpush.bf16.msra.mxu0 %v288
    %384 = vmatmul.bf16.gmra.mxu0 %v180
    %v385 = vpop.f32.mrf.mxu0
    %v386 = vadd.f32 %v184, %v385
    %v387 = vpop.f32.mrf.mxu0
    %388 = vdwg.mxu0
    %389 = vmatpush.bf16.msra.mxu0 %v317
    %390 = vmatpush.bf16.msra.mxu0 %v313
    %391 = vmatpush.bf16.msra.mxu0 %v309
    %392 = vmatpush.bf16.msra.mxu0 %v305
    %393 = vmatpush.bf16.msra.mxu0 %v301
    %394 = vmatpush.bf16.msra.mxu0 %v297
    %395 = vmatpush.bf16.msra.mxu0 %v293
    %396 = vmatpush.bf16.msra.mxu0 %v289
    %397 = vmatmul.bf16.gmra.mxu0 %v180
    %v398 = vpop.f32.mrf.mxu0
    %v399 = vadd.f32 %v185, %v398
    %v400 = vpop.f32.mrf.mxu0
    %401 = vdwg.mxu0
    %v406 = vrot.slane %v360, 1
    %v407 = vrot.slane %v373, 1
    %v408 = vrot.slane %v386, 1
    %v409 = vrot.slane %v399, 1
    %v414 = vsel %vm111, %v360, %v406
    %v415 = vsel %vm112, %v373, %v407
    %v416 = vsel %vm113, %v386, %v408
    %v417 = vsel %vm114, %v399, %v409
    %v450 = vunpack.c.l.b16 %v147
    %v451 = vunpack.c.h.b16 %v147
    %v452 = vunpack.c.l.b16 %v148
    %v453 = vunpack.c.h.b16 %v148
    %v454 = vunpack.c.l.b16 %v149
    %v455 = vunpack.c.h.b16 %v149
    %v456 = vunpack.c.l.b16 %v150
    %v457 = vunpack.c.h.b16 %v150
    %v458 = vunpack.c.l.b16 %v151
    %v459 = vunpack.c.h.b16 %v151
    %v460 = vunpack.c.l.b16 %v152
    %v461 = vunpack.c.h.b16 %v152
    %v462 = vunpack.c.l.b16 %v153
    %v463 = vunpack.c.h.b16 %v153
    %v464 = vunpack.c.l.b16 %v154
    %v465 = vunpack.c.h.b16 %v154
    %v466 = vunpack.c.l.b16 %v155
    %v467 = vunpack.c.h.b16 %v155
    %v468 = vunpack.c.l.b16 %v156
    %v469 = vunpack.c.h.b16 %v156
    %v470 = vunpack.c.l.b16 %v157
    %v471 = vunpack.c.h.b16 %v157
    %v472 = vunpack.c.l.b16 %v158
    %v473 = vunpack.c.h.b16 %v158
    %v474 = vunpack.c.l.b16 %v159
    %v475 = vunpack.c.h.b16 %v159
    %v476 = vunpack.c.l.b16 %v160
    %v477 = vunpack.c.h.b16 %v160
    %v478 = vunpack.c.l.b16 %v161
    %v479 = vunpack.c.h.b16 %v161
    %v480 = vunpack.c.l.b16 %v162
    %v481 = vunpack.c.h.b16 %v162
    %v482 = vunpack.c.l.b16 %v163
    %v483 = vunpack.c.h.b16 %v163
    %v484 = vunpack.c.l.b16 %v164
    %v485 = vunpack.c.h.b16 %v164
    %v486 = vunpack.c.l.b16 %v165
    %v487 = vunpack.c.h.b16 %v165
    %v488 = vunpack.c.l.b16 %v166
    %v489 = vunpack.c.h.b16 %v166
    %v490 = vunpack.c.l.b16 %v167
    %v491 = vunpack.c.h.b16 %v167
    %v492 = vunpack.c.l.b16 %v168
    %v493 = vunpack.c.h.b16 %v168
    %v494 = vunpack.c.l.b16 %v169
    %v495 = vunpack.c.h.b16 %v169
    %v496 = vunpack.c.l.b16 %v170
    %v497 = vunpack.c.h.b16 %v170
    %v498 = vunpack.c.l.b16 %v171
    %v499 = vunpack.c.h.b16 %v171
    %v500 = vunpack.c.l.b16 %v172
    %v501 = vunpack.c.h.b16 %v172
    %v502 = vunpack.c.l.b16 %v173
    %v503 = vunpack.c.h.b16 %v173
    %v504 = vunpack.c.l.b16 %v174
    %v505 = vunpack.c.h.b16 %v174
    %v506 = vunpack.c.l.b16 %v175
    %v507 = vunpack.c.h.b16 %v175
    %v508 = vunpack.c.l.b16 %v176
    %v509 = vunpack.c.h.b16 %v176
    %v510 = vunpack.c.l.b16 %v177
    %v511 = vunpack.c.h.b16 %v177
    %v512 = vunpack.c.l.b16 %v178
    %v513 = vunpack.c.h.b16 %v178
    %v514 = vpack.c.b16 %v454, %v450
    %v515 = vpack.c.b16 %v455, %v451
    %v516 = vpack.c.b16 %v456, %v452
    %v517 = vpack.c.b16 %v457, %v453
    %v518 = vpack.c.b16 %v462, %v458
    %v519 = vpack.c.b16 %v463, %v459
    %v520 = vpack.c.b16 %v464, %v460
    %v521 = vpack.c.b16 %v465, %v461
    %v522 = vpack.c.b16 %v470, %v466
    %v523 = vpack.c.b16 %v471, %v467
    %v524 = vpack.c.b16 %v472, %v468
    %v525 = vpack.c.b16 %v473, %v469
    %v526 = vpack.c.b16 %v478, %v474
    %v527 = vpack.c.b16 %v479, %v475
    %v528 = vpack.c.b16 %v480, %v476
    %v529 = vpack.c.b16 %v481, %v477
    %v530 = vpack.c.b16 %v486, %v482
    %v531 = vpack.c.b16 %v487, %v483
    %v532 = vpack.c.b16 %v488, %v484
    %v533 = vpack.c.b16 %v489, %v485
    %v534 = vpack.c.b16 %v494, %v490
    %v535 = vpack.c.b16 %v495, %v491
    %v536 = vpack.c.b16 %v496, %v492
    %v537 = vpack.c.b16 %v497, %v493
    %v538 = vpack.c.b16 %v502, %v498
    %v539 = vpack.c.b16 %v503, %v499
    %v540 = vpack.c.b16 %v504, %v500
    %v541 = vpack.c.b16 %v505, %v501
    %v542 = vpack.c.b16 %v510, %v506
    %v543 = vpack.c.b16 %v511, %v507
    %v544 = vpack.c.b16 %v512, %v508
    %v545 = vpack.c.b16 %v513, %v509
    %578 = vmatpush.bf16.msra.mxu0 %v542
    %579 = vmatpush.bf16.msra.mxu0 %v538
    %580 = vmatpush.bf16.msra.mxu0 %v534
    %581 = vmatpush.bf16.msra.mxu0 %v530
    %582 = vmatpush.bf16.msra.mxu0 %v526
    %583 = vmatpush.bf16.msra.mxu0 %v522
    %584 = vmatpush.bf16.msra.mxu0 %v518
    %585 = vmatpush.bf16.msra.mxu0 %v514
    %586 = vmatmul.bf16.gmra.mxu0 0
    %v587 = vpop.f32.mrf.mxu0
    %v588 = vadd.f32 0.0, %v587
    %v589 = vpop.f32.mrf.mxu0
    %590 = vdwg.mxu0
    %591 = vmatpush.bf16.msra.mxu0 %v543
    %592 = vmatpush.bf16.msra.mxu0 %v539
    %593 = vmatpush.bf16.msra.mxu0 %v535
    %594 = vmatpush.bf16.msra.mxu0 %v531
    %595 = vmatpush.bf16.msra.mxu0 %v527
    %596 = vmatpush.bf16.msra.mxu0 %v523
    %597 = vmatpush.bf16.msra.mxu0 %v519
    %598 = vmatpush.bf16.msra.mxu0 %v515
    %599 = vmatmul.bf16.gmra.mxu0 0
    %v600 = vpop.f32.mrf.mxu0
    %v601 = vadd.f32 0.0, %v600
    %v602 = vpop.f32.mrf.mxu0
    %603 = vdwg.mxu0
    %604 = vmatpush.bf16.msra.mxu0 %v544
    %605 = vmatpush.bf16.msra.mxu0 %v540
    %606 = vmatpush.bf16.msra.mxu0 %v536
    %607 = vmatpush.bf16.msra.mxu0 %v532
    %608 = vmatpush.bf16.msra.mxu0 %v528
    %609 = vmatpush.bf16.msra.mxu0 %v524
    %610 = vmatpush.bf16.msra.mxu0 %v520
    %611 = vmatpush.bf16.msra.mxu0 %v516
    %612 = vmatmul.bf16.gmra.mxu0 0
    %v613 = vpop.f32.mrf.mxu0
    %v614 = vadd.f32 0.0, %v613
    %v615 = vpop.f32.mrf.mxu0
    %616 = vdwg.mxu0
    %617 = vmatpush.bf16.msra.mxu0 %v545
    %618 = vmatpush.bf16.msra.mxu0 %v541
    %619 = vmatpush.bf16.msra.mxu0 %v537
    %620 = vmatpush.bf16.msra.mxu0 %v533
    %621 = vmatpush.bf16.msra.mxu0 %v529
    %622 = vmatpush.bf16.msra.mxu0 %v525
    %623 = vmatpush.bf16.msra.mxu0 %v521
    %624 = vmatpush.bf16.msra.mxu0 %v517
    %625 = vmatmul.bf16.gmra.mxu0 0
    %v626 = vpop.f32.mrf.mxu0
    %v627 = vadd.f32 0.0, %v626
    %v628 = vpop.f32.mrf.mxu0
    %629 = vdwg.mxu0
    %v634 = vrot.slane %v588, 1
    %v635 = vrot.slane %v601, 1
    %v636 = vrot.slane %v614, 1
    %v637 = vrot.slane %v627, 1
    %v642 = vadd.f32 %v414, %v634
    %v643 = vadd.f32 %v415, %v635
    %v644 = vadd.f32 %v416, %v636
    %v645 = vadd.f32 %v417, %v637
    %v646 = vxor.u32 %v642, 2147483648
    %v647 = vmul.f32 %v646, 1.442695
    %v648 = vpow.pop %v647
    %v649 = vadd.f32 %v648, 1.0
    %v650 = vrcp.pop %v649
    %v651 = vmul.f32 %v649, %v650
    %v652 = vsub.f32 1.0, %v651
    %v653 = vmul.f32 %v650, %v652
    %v654 = vadd.f32 %v650, %v653
    %vm655 = vweird.f32 %v649
    %vm656 = vweird.f32 %v650
    %vm657 = vmor %vm655, %vm656
    %v658 = vsel %vm657, %v650, %v654
    %v659 = vand.u32 2147483647, %v649
    %vm660 = vcmp.eq.f32.partialorder %v659, 8.507059e+37
    %v661 = vand.u32 %v649, 2147483648
    %v662 = vor.u32 1.1754944e-38, %v661
    %v663 = vsel %vm660, %v662, %v658
    %v664 = vmul.f32 1.0, %v663
    %v665 = vxor.u32 %v643, 2147483648
    %v666 = vmul.f32 %v665, 1.442695
    %v667 = vpow.pop %v666
    %v668 = vadd.f32 %v667, 1.0
    %v669 = vrcp.pop %v668
    %v670 = vmul.f32 %v668, %v669
    %v671 = vsub.f32 1.0, %v670
    %v672 = vmul.f32 %v669, %v671
    %v673 = vadd.f32 %v669, %v672
    %vm674 = vweird.f32 %v668
    %vm675 = vweird.f32 %v669
    %vm676 = vmor %vm674, %vm675
    %v677 = vsel %vm676, %v669, %v673
    %v678 = vand.u32 2147483647, %v668
    %vm679 = vcmp.eq.f32.partialorder %v678, 8.507059e+37
    %v680 = vand.u32 %v668, 2147483648
    %v681 = vor.u32 1.1754944e-38, %v680
    %v682 = vsel %vm679, %v681, %v677
    %v683 = vmul.f32 1.0, %v682
    %v684 = vtanh.pop %v644
    %v685 = vxor.u32 %v645, 2147483648
    %v686 = vmul.f32 %v685, 1.442695
    %v687 = vpow.pop %v686
    %v688 = vadd.f32 %v687, 1.0
    %v689 = vrcp.pop %v688
    %v690 = vmul.f32 %v688, %v689
    %v691 = vsub.f32 1.0, %v690
    %v692 = vmul.f32 %v689, %v691
    %v693 = vadd.f32 %v689, %v692
    %vm694 = vweird.f32 %v688
    %vm695 = vweird.f32 %v689
    %vm696 = vmor %vm694, %vm695
    %v697 = vsel %vm696, %v689, %v693
    %v698 = vand.u32 2147483647, %v688
    %vm699 = vcmp.eq.f32.partialorder %v698, 8.507059e+37
    %v700 = vand.u32 %v688, 2147483648
    %v701 = vor.u32 1.1754944e-38, %v700
    %v702 = vsel %vm699, %v701, %v697
    %v703 = vmul.f32 1.0, %v702
    %v704 = vmul.f32 %v683, 0.0
    %v705 = vmul.f32 %v664, %v684
    %v706 = vadd.f32 %v704, %v705
    %v707 = vtanh.pop %v706
    %v708 = vmul.f32 %v703, %v707
    %vm709 = vcmask 523271
    %710 = vst.msk [vmem:[#allocation2 - $0x7] sm:$0x80] %vm709, %v708
    %vm711 = vcmask 1048071
    %712 = vst.msk [vmem:[#allocation2] sm:$0x80] %vm711, %v708
    %v713 = vrot.slane %v360, 3
    %v714 = vrot.slane %v373, 3
    %v715 = vrot.slane %v386, 3
    %v716 = vrot.slane %v399, 3
    %v721 = vsel %vm111, %v360, %v713
    %v722 = vsel %vm112, %v373, %v714
    %v723 = vsel %vm113, %v386, %v715
    %v724 = vsel %vm114, %v399, %v716
    %v725 = vpack.c.bf16 %v708, %v708
    %v727 = vshrl.u32 %v725, 16
    %v729 = vrot.slane %v727, 3
    %731 = vmatpush.bf16.msra.mxu0 %v542
    %732 = vmatpush.bf16.msra.mxu0 %v538
    %733 = vmatpush.bf16.msra.mxu0 %v534
    %734 = vmatpush.bf16.msra.mxu0 %v530
    %735 = vmatpush.bf16.msra.mxu0 %v526
    %736 = vmatpush.bf16.msra.mxu0 %v522
    %737 = vmatpush.bf16.msra.mxu0 %v518
    %738 = vmatpush.bf16.msra.mxu0 %v514
    %739 = vmatmul.bf16.gmra.mxu0 %v729
    %v740 = vpop.f32.mrf.mxu0
    %v741 = vadd.f32 0.0, %v740
    %v742 = vpop.f32.mrf.mxu0
    %743 = vdwg.mxu0
    %744 = vmatpush.bf16.msra.mxu0 %v543
    %745 = vmatpush.bf16.msra.mxu0 %v539
    %746 = vmatpush.bf16.msra.mxu0 %v535
    %747 = vmatpush.bf16.msra.mxu0 %v531
    %748 = vmatpush.bf16.msra.mxu0 %v527
    %749 = vmatpush.bf16.msra.mxu0 %v523
    %750 = vmatpush.bf16.msra.mxu0 %v519
    %751 = vmatpush.bf16.msra.mxu0 %v515
    %752 = vmatmul.bf16.gmra.mxu0 %v729
    %v753 = vpop.f32.mrf.mxu0
    %v754 = vadd.f32 0.0, %v753
    %v755 = vpop.f32.mrf.mxu0
    %756 = vdwg.mxu0
    %757 = vmatpush.bf16.msra.mxu0 %v544
    %758 = vmatpush.bf16.msra.mxu0 %v540
    %759 = vmatpush.bf16.msra.mxu0 %v536
    %760 = vmatpush.bf16.msra.mxu0 %v532
    %761 = vmatpush.bf16.msra.mxu0 %v528
    %762 = vmatpush.bf16.msra.mxu0 %v524
    %763 = vmatpush.bf16.msra.mxu0 %v520
    %764 = vmatpush.bf16.msra.mxu0 %v516
    %765 = vmatmul.bf16.gmra.mxu0 %v729
    %v766 = vpop.f32.mrf.mxu0
    %v767 = vadd.f32 0.0, %v766
    %v768 = vpop.f32.mrf.mxu0
    %769 = vdwg.mxu0
    %770 = vmatpush.bf16.msra.mxu0 %v545
    %771 = vmatpush.bf16.msra.mxu0 %v541
    %772 = vmatpush.bf16.msra.mxu0 %v537
    %773 = vmatpush.bf16.msra.mxu0 %v533
    %774 = vmatpush.bf16.msra.mxu0 %v529
    %775 = vmatpush.bf16.msra.mxu0 %v525
    %776 = vmatpush.bf16.msra.mxu0 %v521
    %777 = vmatpush.bf16.msra.mxu0 %v517
    %778 = vmatmul.bf16.gmra.mxu0 %v729
    %v779 = vpop.f32.mrf.mxu0
    %v780 = vadd.f32 0.0, %v779
    %v781 = vpop.f32.mrf.mxu0
    %782 = vdwg.mxu0
    %v787 = vrot.slane %v741, 2
    %v788 = vrot.slane %v754, 2
    %v789 = vrot.slane %v767, 2
    %v790 = vrot.slane %v780, 2
    %v795 = vadd.f32 %v721, %v787
    %v796 = vadd.f32 %v722, %v788
    %v797 = vadd.f32 %v723, %v789
    %v798 = vadd.f32 %v724, %v790
    %v799 = vxor.u32 %v795, 2147483648
    %v800 = vmul.f32 %v799, 1.442695
    %v801 = vpow.pop %v800
    %v802 = vadd.f32 %v801, 1.0
    %v803 = vrcp.pop %v802
    %v804 = vmul.f32 %v802, %v803
    %v805 = vsub.f32 1.0, %v804
    %v806 = vmul.f32 %v803, %v805
    %v807 = vadd.f32 %v803, %v806
    %vm808 = vweird.f32 %v802
    %vm809 = vweird.f32 %v803
    %vm810 = vmor %vm808, %vm809
    %v811 = vsel %vm810, %v803, %v807
    %v812 = vand.u32 2147483647, %v802
    %vm813 = vcmp.eq.f32.partialorder %v812, 8.507059e+37
    %v814 = vand.u32 %v802, 2147483648
    %v815 = vor.u32 1.1754944e-38, %v814
    %v816 = vsel %vm813, %v815, %v811
    %v817 = vmul.f32 1.0, %v816
    %v818 = vxor.u32 %v796, 2147483648
    %v819 = vmul.f32 %v818, 1.442695
    %v820 = vpow.pop %v819
    %v821 = vadd.f32 %v820, 1.0
    %v822 = vrcp.pop %v821
    %v823 = vmul.f32 %v821, %v822
    %v824 = vsub.f32 1.0, %v823
    %v825 = vmul.f32 %v822, %v824
    %v826 = vadd.f32 %v822, %v825
    %vm827 = vweird.f32 %v821
    %vm828 = vweird.f32 %v822
    %vm829 = vmor %vm827, %vm828
    %v830 = vsel %vm829, %v822, %v826
    %v831 = vand.u32 2147483647, %v821
    %vm832 = vcmp.eq.f32.partialorder %v831, 8.507059e+37
    %v833 = vand.u32 %v821, 2147483648
    %v834 = vor.u32 1.1754944e-38, %v833
    %v835 = vsel %vm832, %v834, %v830
    %v836 = vmul.f32 1.0, %v835
    %v837 = vtanh.pop %v797
    %v838 = vxor.u32 %v798, 2147483648
    %v839 = vmul.f32 %v838, 1.442695
    %v840 = vpow.pop %v839
    %v841 = vadd.f32 %v840, 1.0
    %v842 = vrcp.pop %v841
    %v843 = vmul.f32 %v841, %v842
    %v844 = vsub.f32 1.0, %v843
    %v845 = vmul.f32 %v842, %v844
    %v846 = vadd.f32 %v842, %v845
    %vm847 = vweird.f32 %v841
    %vm848 = vweird.f32 %v842
    %vm849 = vmor %vm847, %vm848
    %v850 = vsel %vm849, %v842, %v846
    %v851 = vand.u32 2147483647, %v841
    %vm852 = vcmp.eq.f32.partialorder %v851, 8.507059e+37
    %v853 = vand.u32 %v841, 2147483648
    %v854 = vor.u32 1.1754944e-38, %v853
    %v855 = vsel %vm852, %v854, %v850
    %v856 = vmul.f32 1.0, %v855
    %v858 = vrot.slane %v706, 1
    %v860 = vmul.f32 %v836, %v858
    %v861 = vmul.f32 %v817, %v837
    %v862 = vadd.f32 %v860, %v861
    %v863 = vtanh.pop %v862
    %v864 = vmul.f32 %v856, %v863
    %vm865 = vcmask 522246
    %866 = vst.msk [vmem:[#allocation2 - $0x5] sm:$0x40] %vm865, %v864
    %vm867 = vcmask 1047046
    %868 = vst.msk [vmem:[#allocation2] sm:$0x40] %vm867, %v864
    %v869 = vrot.slane %v360, 5
    %v870 = vrot.slane %v373, 5
    %v871 = vrot.slane %v386, 5
    %v872 = vrot.slane %v399, 5
    %v877 = vsel %vm111, %v360, %v869
    %v878 = vsel %vm112, %v373, %v870
    %v879 = vsel %vm113, %v386, %v871
    %v880 = vsel %vm114, %v399, %v872
    %v881 = vpack.c.bf16 %v864, %v864
    %v883 = vrot.slane %v881, 3
    %885 = vmatpush.bf16.msra.mxu0 %v542
    %886 = vmatpush.bf16.msra.mxu0 %v538
    %887 = vmatpush.bf16.msra.mxu0 %v534
    %888 = vmatpush.bf16.msra.mxu0 %v530
    %889 = vmatpush.bf16.msra.mxu0 %v526
    %890 = vmatpush.bf16.msra.mxu0 %v522
    %891 = vmatpush.bf16.msra.mxu0 %v518
    %892 = vmatpush.bf16.msra.mxu0 %v514
    %893 = vmatmul.bf16.gmra.mxu0 %v883
    %v894 = vpop.f32.mrf.mxu0
    %v895 = vadd.f32 0.0, %v894
    %v896 = vpop.f32.mrf.mxu0
    %897 = vdwg.mxu0
    %898 = vmatpush.bf16.msra.mxu0 %v543
    %899 = vmatpush.bf16.msra.mxu0 %v539
    %900 = vmatpush.bf16.msra.mxu0 %v535
    %901 = vmatpush.bf16.msra.mxu0 %v531
    %902 = vmatpush.bf16.msra.mxu0 %v527
    %903 = vmatpush.bf16.msra.mxu0 %v523
    %904 = vmatpush.bf16.msra.mxu0 %v519
    %905 = vmatpush.bf16.msra.mxu0 %v515
    %906 = vmatmul.bf16.gmra.mxu0 %v883
    %v907 = vpop.f32.mrf.mxu0
    %v908 = vadd.f32 0.0, %v907
    %v909 = vpop.f32.mrf.mxu0
    %910 = vdwg.mxu0
    %911 = vmatpush.bf16.msra.mxu0 %v544
    %912 = vmatpush.bf16.msra.mxu0 %v540
    %913 = vmatpush.bf16.msra.mxu0 %v536
    %914 = vmatpush.bf16.msra.mxu0 %v532
    %915 = vmatpush.bf16.msra.mxu0 %v528
    %916 = vmatpush.bf16.msra.mxu0 %v524
    %917 = vmatpush.bf16.msra.mxu0 %v520
    %918 = vmatpush.bf16.msra.mxu0 %v516
    %919 = vmatmul.bf16.gmra.mxu0 %v883
    %v920 = vpop.f32.mrf.mxu0
    %v921 = vadd.f32 0.0, %v920
    %v922 = vpop.f32.mrf.mxu0
    %923 = vdwg.mxu0
    %924 = vmatpush.bf16.msra.mxu0 %v545
    %925 = vmatpush.bf16.msra.mxu0 %v541
    %926 = vmatpush.bf16.msra.mxu0 %v537
    %927 = vmatpush.bf16.msra.mxu0 %v533
    %928 = vmatpush.bf16.msra.mxu0 %v529
    %929 = vmatpush.bf16.msra.mxu0 %v525
    %930 = vmatpush.bf16.msra.mxu0 %v521
    %931 = vmatpush.bf16.msra.mxu0 %v517
    %932 = vmatmul.bf16.gmra.mxu0 %v883
    %v933 = vpop.f32.mrf.mxu0
    %v934 = vadd.f32 0.0, %v933
    %v935 = vpop.f32.mrf.mxu0
    %936 = vdwg.mxu0
    %v941 = vrot.slane %v895, 3
    %v942 = vrot.slane %v908, 3
    %v943 = vrot.slane %v921, 3
    %v944 = vrot.slane %v934, 3
    %v949 = vadd.f32 %v877, %v941
    %v950 = vadd.f32 %v878, %v942
    %v951 = vadd.f32 %v879, %v943
    %v952 = vadd.f32 %v880, %v944
    %v953 = vxor.u32 %v949, 2147483648
    %v954 = vmul.f32 %v953, 1.442695
    %v955 = vpow.pop %v954
    %v956 = vadd.f32 %v955, 1.0
    %v957 = vrcp.pop %v956
    %v958 = vmul.f32 %v956, %v957
    %v959 = vsub.f32 1.0, %v958
    %v960 = vmul.f32 %v957, %v959
    %v961 = vadd.f32 %v957, %v960
    %vm962 = vweird.f32 %v956
    %vm963 = vweird.f32 %v957
    %vm964 = vmor %vm962, %vm963
    %v965 = vsel %vm964, %v957, %v961
    %v966 = vand.u32 2147483647, %v956
    %vm967 = vcmp.eq.f32.partialorder %v966, 8.507059e+37
    %v968 = vand.u32 %v956, 2147483648
    %v969 = vor.u32 1.1754944e-38, %v968
    %v970 = vsel %vm967, %v969, %v965
    %v971 = vmul.f32 1.0, %v970
    %v972 = vxor.u32 %v950, 2147483648
    %v973 = vmul.f32 %v972, 1.442695
    %v974 = vpow.pop %v973
    %v975 = vadd.f32 %v974, 1.0
    %v976 = vrcp.pop %v975
    %v977 = vmul.f32 %v975, %v976
    %v978 = vsub.f32 1.0, %v977
    %v979 = vmul.f32 %v976, %v978
    %v980 = vadd.f32 %v976, %v979
    %vm981 = vweird.f32 %v975
    %vm982 = vweird.f32 %v976
    %vm983 = vmor %vm981, %vm982
    %v984 = vsel %vm983, %v976, %v980
    %v985 = vand.u32 2147483647, %v975
    %vm986 = vcmp.eq.f32.partialorder %v985, 8.507059e+37
    %v987 = vand.u32 %v975, 2147483648
    %v988 = vor.u32 1.1754944e-38, %v987
    %v989 = vsel %vm986, %v988, %v984
    %v990 = vmul.f32 1.0, %v989
    %v991 = vtanh.pop %v951
    %v992 = vxor.u32 %v952, 2147483648
    %v993 = vmul.f32 %v992, 1.442695
    %v994 = vpow.pop %v993
    %v995 = vadd.f32 %v994, 1.0
    %v996 = vrcp.pop %v995
    %v997 = vmul.f32 %v995, %v996
    %v998 = vsub.f32 1.0, %v997
    %v999 = vmul.f32 %v996, %v998
    %v1000 = vadd.f32 %v996, %v999
    %vm1001 = vweird.f32 %v995
    %vm1002 = vweird.f32 %v996
    %vm1003 = vmor %vm1001, %vm1002
    %v1004 = vsel %vm1003, %v996, %v1000
    %v1005 = vand.u32 2147483647, %v995
    %vm1006 = vcmp.eq.f32.partialorder %v1005, 8.507059e+37
    %v1007 = vand.u32 %v995, 2147483648
    %v1008 = vor.u32 1.1754944e-38, %v1007
    %v1009 = vsel %vm1006, %v1008, %v1004
    %v1010 = vmul.f32 1.0, %v1009
    %v1012 = vrot.slane %v862, 1
    %v1014 = vmul.f32 %v990, %v1012
    %v1015 = vmul.f32 %v971, %v991
    %v1016 = vadd.f32 %v1014, %v1015
    %v1017 = vtanh.pop %v1016
    %v1018 = vmul.f32 %v1010, %v1017
    %vm1019 = vcmask 521221
    %1020 = vst.msk [vmem:[#allocation2 - $0x3] sm:$0x20] %vm1019, %v1018
    %vm1021 = vcmask 1046021
    %1022 = vst.msk [vmem:[#allocation2] sm:$0x20] %vm1021, %v1018
    %v1023 = vrot.slane %v360, 7
    %v1024 = vrot.slane %v373, 7
    %v1025 = vrot.slane %v386, 7
    %v1026 = vrot.slane %v399, 7
    %v1031 = vsel %vm111, %v360, %v1023
    %v1032 = vsel %vm112, %v373, %v1024
    %v1033 = vsel %vm113, %v386, %v1025
    %v1034 = vsel %vm114, %v399, %v1026
    %v1035 = vpack.c.bf16 %v1018, %v1018
    %v1037 = vshrl.u32 %v1035, 16
    %v1039 = vrot.slane %v1037, 2
    %1041 = vmatpush.bf16.msra.mxu0 %v542
    %1042 = vmatpush.bf16.msra.mxu0 %v538
    %1043 = vmatpush.bf16.msra.mxu0 %v534
    %1044 = vmatpush.bf16.msra.mxu0 %v530
    %1045 = vmatpush.bf16.msra.mxu0 %v526
    %1046 = vmatpush.bf16.msra.mxu0 %v522
    %1047 = vmatpush.bf16.msra.mxu0 %v518
    %1048 = vmatpush.bf16.msra.mxu0 %v514
    %1049 = vmatmul.bf16.gmra.mxu0 %v1039
    %v1050 = vpop.f32.mrf.mxu0
    %v1051 = vadd.f32 0.0, %v1050
    %v1052 = vpop.f32.mrf.mxu0
    %1053 = vdwg.mxu0
    %1054 = vmatpush.bf16.msra.mxu0 %v543
    %1055 = vmatpush.bf16.msra.mxu0 %v539
    %1056 = vmatpush.bf16.msra.mxu0 %v535
    %1057 = vmatpush.bf16.msra.mxu0 %v531
    %1058 = vmatpush.bf16.msra.mxu0 %v527
    %1059 = vmatpush.bf16.msra.mxu0 %v523
    %1060 = vmatpush.bf16.msra.mxu0 %v519
    %1061 = vmatpush.bf16.msra.mxu0 %v515
    %1062 = vmatmul.bf16.gmra.mxu0 %v1039
    %v1063 = vpop.f32.mrf.mxu0
    %v1064 = vadd.f32 0.0, %v1063
    %v1065 = vpop.f32.mrf.mxu0
    %1066 = vdwg.mxu0
    %1067 = vmatpush.bf16.msra.mxu0 %v544
    %1068 = vmatpush.bf16.msra.mxu0 %v540
    %1069 = vmatpush.bf16.msra.mxu0 %v536
    %1070 = vmatpush.bf16.msra.mxu0 %v532
    %1071 = vmatpush.bf16.msra.mxu0 %v528
    %1072 = vmatpush.bf16.msra.mxu0 %v524
    %1073 = vmatpush.bf16.msra.mxu0 %v520
    %1074 = vmatpush.bf16.msra.mxu0 %v516
    %1075 = vmatmul.bf16.gmra.mxu0 %v1039
    %v1076 = vpop.f32.mrf.mxu0
    %v1077 = vadd.f32 0.0, %v1076
    %v1078 = vpop.f32.mrf.mxu0
    %1079 = vdwg.mxu0
    %1080 = vmatpush.bf16.msra.mxu0 %v545
    %1081 = vmatpush.bf16.msra.mxu0 %v541
    %1082 = vmatpush.bf16.msra.mxu0 %v537
    %1083 = vmatpush.bf16.msra.mxu0 %v533
    %1084 = vmatpush.bf16.msra.mxu0 %v529
    %1085 = vmatpush.bf16.msra.mxu0 %v525
    %1086 = vmatpush.bf16.msra.mxu0 %v521
    %1087 = vmatpush.bf16.msra.mxu0 %v517
    %1088 = vmatmul.bf16.gmra.mxu0 %v1039
    %v1089 = vpop.f32.mrf.mxu0
    %v1090 = vadd.f32 0.0, %v1089
    %v1091 = vpop.f32.mrf.mxu0
    %1092 = vdwg.mxu0
    %v1097 = vrot.slane %v1051, 4
    %v1098 = vrot.slane %v1064, 4
    %v1099 = vrot.slane %v1077, 4
    %v1100 = vrot.slane %v1090, 4
    %v1105 = vadd.f32 %v1031, %v1097
    %v1106 = vadd.f32 %v1032, %v1098
    %v1107 = vadd.f32 %v1033, %v1099
    %v1108 = vadd.f32 %v1034, %v1100
    %v1109 = vxor.u32 %v1105, 2147483648
    %v1110 = vmul.f32 %v1109, 1.442695
    %v1111 = vpow.pop %v1110
    %v1112 = vadd.f32 %v1111, 1.0
    %v1113 = vrcp.pop %v1112
    %v1114 = vmul.f32 %v1112, %v1113
    %v1115 = vsub.f32 1.0, %v1114
    %v1116 = vmul.f32 %v1113, %v1115
    %v1117 = vadd.f32 %v1113, %v1116
    %vm1118 = vweird.f32 %v1112
    %vm1119 = vweird.f32 %v1113
    %vm1120 = vmor %vm1118, %vm1119
    %v1121 = vsel %vm1120, %v1113, %v1117
    %v1122 = vand.u32 2147483647, %v1112
    %vm1123 = vcmp.eq.f32.partialorder %v1122, 8.507059e+37
    %v1124 = vand.u32 %v1112, 2147483648
    %v1125 = vor.u32 1.1754944e-38, %v1124
    %v1126 = vsel %vm1123, %v1125, %v1121
    %v1127 = vmul.f32 1.0, %v1126
    %v1128 = vxor.u32 %v1106, 2147483648
    %v1129 = vmul.f32 %v1128, 1.442695
    %v1130 = vpow.pop %v1129
    %v1131 = vadd.f32 %v1130, 1.0
    %v1132 = vrcp.pop %v1131
    %v1133 = vmul.f32 %v1131, %v1132
    %v1134 = vsub.f32 1.0, %v1133
    %v1135 = vmul.f32 %v1132, %v1134
    %v1136 = vadd.f32 %v1132, %v1135
    %vm1137 = vweird.f32 %v1131
    %vm1138 = vweird.f32 %v1132
    %vm1139 = vmor %vm1137, %vm1138
    %v1140 = vsel %vm1139, %v1132, %v1136
    %v1141 = vand.u32 2147483647, %v1131
    %vm1142 = vcmp.eq.f32.partialorder %v1141, 8.507059e+37
    %v1143 = vand.u32 %v1131, 2147483648
    %v1144 = vor.u32 1.1754944e-38, %v1143
    %v1145 = vsel %vm1142, %v1144, %v1140
    %v1146 = vmul.f32 1.0, %v1145
    %v1147 = vtanh.pop %v1107
    %v1148 = vxor.u32 %v1108, 2147483648
    %v1149 = vmul.f32 %v1148, 1.442695
    %v1150 = vpow.pop %v1149
    %v1151 = vadd.f32 %v1150, 1.0
    %v1152 = vrcp.pop %v1151
    %v1153 = vmul.f32 %v1151, %v1152
    %v1154 = vsub.f32 1.0, %v1153
    %v1155 = vmul.f32 %v1152, %v1154
    %v1156 = vadd.f32 %v1152, %v1155
    %vm1157 = vweird.f32 %v1151
    %vm1158 = vweird.f32 %v1152
    %vm1159 = vmor %vm1157, %vm1158
    %v1160 = vsel %vm1159, %v1152, %v1156
    %v1161 = vand.u32 2147483647, %v1151
    %vm1162 = vcmp.eq.f32.partialorder %v1161, 8.507059e+37
    %v1163 = vand.u32 %v1151, 2147483648
    %v1164 = vor.u32 1.1754944e-38, %v1163
    %v1165 = vsel %vm1162, %v1164, %v1160
    %v1166 = vmul.f32 1.0, %v1165
    %v1168 = vrot.slane %v1016, 1
    %v1170 = vmul.f32 %v1146, %v1168
    %v1171 = vmul.f32 %v1127, %v1147
    %v1172 = vadd.f32 %v1170, %v1171
    %v1173 = vtanh.pop %v1172
    %v1174 = vmul.f32 %v1166, %v1173
    %vm1175 = vcmask 520196
    %1176 = vst.msk [vmem:[#allocation2 - $0x1] sm:$0x10] %vm1175, %v1174
    %vm1177 = vcmask 1044996
    %1178 = vst.msk [vmem:[#allocation2] sm:$0x10] %vm1177, %v1174
    %v1179 = vpack.c.bf16 %v1174, %v1174
    %v1181 = vrot.slane %v1179, 2
    %1183 = vmatpush.bf16.msra.mxu0 %v542
    %1184 = vmatpush.bf16.msra.mxu0 %v538
    %1185 = vmatpush.bf16.msra.mxu0 %v534
    %1186 = vmatpush.bf16.msra.mxu0 %v530
    %1187 = vmatpush.bf16.msra.mxu0 %v526
    %1188 = vmatpush.bf16.msra.mxu0 %v522
    %1189 = vmatpush.bf16.msra.mxu0 %v518
    %1190 = vmatpush.bf16.msra.mxu0 %v514
    %1191 = vmatmul.bf16.gmra.mxu0 %v1181
    %v1192 = vpop.f32.mrf.mxu0
    %v1193 = vadd.f32 0.0, %v1192
    %v1194 = vpop.f32.mrf.mxu0
    %1195 = vdwg.mxu0
    %1196 = vmatpush.bf16.msra.mxu0 %v543
    %1197 = vmatpush.bf16.msra.mxu0 %v539
    %1198 = vmatpush.bf16.msra.mxu0 %v535
    %1199 = vmatpush.bf16.msra.mxu0 %v531
    %1200 = vmatpush.bf16.msra.mxu0 %v527
    %1201 = vmatpush.bf16.msra.mxu0 %v523
    %1202 = vmatpush.bf16.msra.mxu0 %v519
    %1203 = vmatpush.bf16.msra.mxu0 %v515
    %1204 = vmatmul.bf16.gmra.mxu0 %v1181
    %v1205 = vpop.f32.mrf.mxu0
    %v1206 = vadd.f32 0.0, %v1205
    %v1207 = vpop.f32.mrf.mxu0
    %1208 = vdwg.mxu0
    %1209 = vmatpush.bf16.msra.mxu0 %v544
    %1210 = vmatpush.bf16.msra.mxu0 %v540
    %1211 = vmatpush.bf16.msra.mxu0 %v536
    %1212 = vmatpush.bf16.msra.mxu0 %v532
    %1213 = vmatpush.bf16.msra.mxu0 %v528
    %1214 = vmatpush.bf16.msra.mxu0 %v524
    %1215 = vmatpush.bf16.msra.mxu0 %v520
    %1216 = vmatpush.bf16.msra.mxu0 %v516
    %1217 = vmatmul.bf16.gmra.mxu0 %v1181
    %v1218 = vpop.f32.mrf.mxu0
    %v1219 = vadd.f32 0.0, %v1218
    %v1220 = vpop.f32.mrf.mxu0
    %1221 = vdwg.mxu0
    %1222 = vmatpush.bf16.msra.mxu0 %v545
    %1223 = vmatpush.bf16.msra.mxu0 %v541
    %1224 = vmatpush.bf16.msra.mxu0 %v537
    %1225 = vmatpush.bf16.msra.mxu0 %v533
    %1226 = vmatpush.bf16.msra.mxu0 %v529
    %1227 = vmatpush.bf16.msra.mxu0 %v525
    %1228 = vmatpush.bf16.msra.mxu0 %v521
    %1229 = vmatpush.bf16.msra.mxu0 %v517
    %1230 = vmatmul.bf16.gmra.mxu0 %v1181
    %v1231 = vpop.f32.mrf.mxu0
    %v1232 = vadd.f32 0.0, %v1231
    %v1233 = vpop.f32.mrf.mxu0
    %1234 = vdwg.mxu0
    %v1239 = vrot.slane %v1193, 5
    %v1240 = vrot.slane %v1206, 5
    %v1241 = vrot.slane %v1219, 5
    %v1242 = vrot.slane %v1232, 5
    %v1247 = vadd.f32 %v414, %v1239
    %v1248 = vadd.f32 %v415, %v1240
    %v1249 = vadd.f32 %v416, %v1241
    %v1250 = vadd.f32 %v417, %v1242
    %v1251 = vxor.u32 %v1247, 2147483648
    %v1252 = vmul.f32 %v1251, 1.442695
    %v1253 = vpow.pop %v1252
    %v1254 = vadd.f32 %v1253, 1.0
    %v1255 = vrcp.pop %v1254
    %v1256 = vmul.f32 %v1254, %v1255
    %v1257 = vsub.f32 1.0, %v1256
    %v1258 = vmul.f32 %v1255, %v1257
    %v1259 = vadd.f32 %v1255, %v1258
    %vm1260 = vweird.f32 %v1254
    %vm1261 = vweird.f32 %v1255
    %vm1262 = vmor %vm1260, %vm1261
    %v1263 = vsel %vm1262, %v1255, %v1259
    %v1264 = vand.u32 2147483647, %v1254
    %vm1265 = vcmp.eq.f32.partialorder %v1264, 8.507059e+37
    %v1266 = vand.u32 %v1254, 2147483648
    %v1267 = vor.u32 1.1754944e-38, %v1266
    %v1268 = vsel %vm1265, %v1267, %v1263
    %v1269 = vmul.f32 1.0, %v1268
    %v1270 = vxor.u32 %v1248, 2147483648
    %v1271 = vmul.f32 %v1270, 1.442695
    %v1272 = vpow.pop %v1271
    %v1273 = vadd.f32 %v1272, 1.0
    %v1274 = vrcp.pop %v1273
    %v1275 = vmul.f32 %v1273, %v1274
    %v1276 = vsub.f32 1.0, %v1275
    %v1277 = vmul.f32 %v1274, %v1276
    %v1278 = vadd.f32 %v1274, %v1277
    %vm1279 = vweird.f32 %v1273
    %vm1280 = vweird.f32 %v1274
    %vm1281 = vmor %vm1279, %vm1280
    %v1282 = vsel %vm1281, %v1274, %v1278
    %v1283 = vand.u32 2147483647, %v1273
    %vm1284 = vcmp.eq.f32.partialorder %v1283, 8.507059e+37
    %v1285 = vand.u32 %v1273, 2147483648
    %v1286 = vor.u32 1.1754944e-38, %v1285
    %v1287 = vsel %vm1284, %v1286, %v1282
    %v1288 = vmul.f32 1.0, %v1287
    %v1289 = vtanh.pop %v1249
    %v1290 = vxor.u32 %v1250, 2147483648
    %v1291 = vmul.f32 %v1290, 1.442695
    %v1292 = vpow.pop %v1291
    %v1293 = vadd.f32 %v1292, 1.0
    %v1294 = vrcp.pop %v1293
    %v1295 = vmul.f32 %v1293, %v1294
    %v1296 = vsub.f32 1.0, %v1295
    %v1297 = vmul.f32 %v1294, %v1296
    %v1298 = vadd.f32 %v1294, %v1297
    %vm1299 = vweird.f32 %v1293
    %vm1300 = vweird.f32 %v1294
    %vm1301 = vmor %vm1299, %vm1300
    %v1302 = vsel %vm1301, %v1294, %v1298
    %v1303 = vand.u32 2147483647, %v1293
    %vm1304 = vcmp.eq.f32.partialorder %v1303, 8.507059e+37
    %v1305 = vand.u32 %v1293, 2147483648
    %v1306 = vor.u32 1.1754944e-38, %v1305
    %v1307 = vsel %vm1304, %v1306, %v1302
    %v1308 = vmul.f32 1.0, %v1307
    %v1310 = vrot.slane %v1172, 1
    %v1312 = vmul.f32 %v1288, %v1310
    %v1313 = vmul.f32 %v1269, %v1289
    %v1314 = vadd.f32 %v1312, %v1313
    %v1315 = vtanh.pop %v1314
    %v1316 = vmul.f32 %v1308, %v1315
    %vm1317 = vcmask 519171
    %1318 = vst.msk [vmem:[#allocation2 + $0x1] sm:$0x8] %vm1317, %v1316
    %vm1319 = vcmask 1043971
    %1320 = vst.msk [vmem:[#allocation2] sm:$0x8] %vm1319, %v1316
    %v1321 = vpack.c.bf16 %v1316, %v1316
    %v1323 = vshrl.u32 %v1321, 16
    %v1325 = vrot.slane %v1323, 1
    %1327 = vmatpush.bf16.msra.mxu0 %v542
    %1328 = vmatpush.bf16.msra.mxu0 %v538
    %1329 = vmatpush.bf16.msra.mxu0 %v534
    %1330 = vmatpush.bf16.msra.mxu0 %v530
    %1331 = vmatpush.bf16.msra.mxu0 %v526
    %1332 = vmatpush.bf16.msra.mxu0 %v522
    %1333 = vmatpush.bf16.msra.mxu0 %v518
    %1334 = vmatpush.bf16.msra.mxu0 %v514
    %1335 = vmatmul.bf16.gmra.mxu0 %v1325
    %v1336 = vpop.f32.mrf.mxu0
    %v1337 = vadd.f32 0.0, %v1336
    %v1338 = vpop.f32.mrf.mxu0
    %1339 = vdwg.mxu0
    %1340 = vmatpush.bf16.msra.mxu0 %v543
    %1341 = vmatpush.bf16.msra.mxu0 %v539
    %1342 = vmatpush.bf16.msra.mxu0 %v535
    %1343 = vmatpush.bf16.msra.mxu0 %v531
    %1344 = vmatpush.bf16.msra.mxu0 %v527
    %1345 = vmatpush.bf16.msra.mxu0 %v523
    %1346 = vmatpush.bf16.msra.mxu0 %v519
    %1347 = vmatpush.bf16.msra.mxu0 %v515
    %1348 = vmatmul.bf16.gmra.mxu0 %v1325
    %v1349 = vpop.f32.mrf.mxu0
    %v1350 = vadd.f32 0.0, %v1349
    %v1351 = vpop.f32.mrf.mxu0
    %1352 = vdwg.mxu0
    %1353 = vmatpush.bf16.msra.mxu0 %v544
    %1354 = vmatpush.bf16.msra.mxu0 %v540
    %1355 = vmatpush.bf16.msra.mxu0 %v536
    %1356 = vmatpush.bf16.msra.mxu0 %v532
    %1357 = vmatpush.bf16.msra.mxu0 %v528
    %1358 = vmatpush.bf16.msra.mxu0 %v524
    %1359 = vmatpush.bf16.msra.mxu0 %v520
    %1360 = vmatpush.bf16.msra.mxu0 %v516
    %1361 = vmatmul.bf16.gmra.mxu0 %v1325
    %v1362 = vpop.f32.mrf.mxu0
    %v1363 = vadd.f32 0.0, %v1362
    %v1364 = vpop.f32.mrf.mxu0
    %1365 = vdwg.mxu0
    %1366 = vmatpush.bf16.msra.mxu0 %v545
    %1367 = vmatpush.bf16.msra.mxu0 %v541
    %1368 = vmatpush.bf16.msra.mxu0 %v537
    %1369 = vmatpush.bf16.msra.mxu0 %v533
    %1370 = vmatpush.bf16.msra.mxu0 %v529
    %1371 = vmatpush.bf16.msra.mxu0 %v525
    %1372 = vmatpush.bf16.msra.mxu0 %v521
    %1373 = vmatpush.bf16.msra.mxu0 %v517
    %1374 = vmatmul.bf16.gmra.mxu0 %v1325
    %v1375 = vpop.f32.mrf.mxu0
    %v1376 = vadd.f32 0.0, %v1375
    %v1377 = vpop.f32.mrf.mxu0
    %1378 = vdwg.mxu0
    %v1383 = vrot.slane %v1337, 6
    %v1384 = vrot.slane %v1350, 6
    %v1385 = vrot.slane %v1363, 6
    %v1386 = vrot.slane %v1376, 6
    %v1391 = vadd.f32 %v721, %v1383
    %v1392 = vadd.f32 %v722, %v1384
    %v1393 = vadd.f32 %v723, %v1385
    %v1394 = vadd.f32 %v724, %v1386
    %v1395 = vxor.u32 %v1391, 2147483648
    %v1396 = vmul.f32 %v1395, 1.442695
    %v1397 = vpow.pop %v1396
    %v1398 = vadd.f32 %v1397, 1.0
    %v1399 = vrcp.pop %v1398
    %v1400 = vmul.f32 %v1398, %v1399
    %v1401 = vsub.f32 1.0, %v1400
    %v1402 = vmul.f32 %v1399, %v1401
    %v1403 = vadd.f32 %v1399, %v1402
    %vm1404 = vweird.f32 %v1398
    %vm1405 = vweird.f32 %v1399
    %vm1406 = vmor %vm1404, %vm1405
    %v1407 = vsel %vm1406, %v1399, %v1403
    %v1408 = vand.u32 2147483647, %v1398
    %vm1409 = vcmp.eq.f32.partialorder %v1408, 8.507059e+37
    %v1410 = vand.u32 %v1398, 2147483648
    %v1411 = vor.u32 1.1754944e-38, %v1410
    %v1412 = vsel %vm1409, %v1411, %v1407
    %v1413 = vmul.f32 1.0, %v1412
    %v1414 = vxor.u32 %v1392, 2147483648
    %v1415 = vmul.f32 %v1414, 1.442695
    %v1416 = vpow.pop %v1415
    %v1417 = vadd.f32 %v1416, 1.0
    %v1418 = vrcp.pop %v1417
    %v1419 = vmul.f32 %v1417, %v1418
    %v1420 = vsub.f32 1.0, %v1419
    %v1421 = vmul.f32 %v1418, %v1420
    %v1422 = vadd.f32 %v1418, %v1421
    %vm1423 = vweird.f32 %v1417
    %vm1424 = vweird.f32 %v1418
    %vm1425 = vmor %vm1423, %vm1424
    %v1426 = vsel %vm1425, %v1418, %v1422
    %v1427 = vand.u32 2147483647, %v1417
    %vm1428 = vcmp.eq.f32.partialorder %v1427, 8.507059e+37
    %v1429 = vand.u32 %v1417, 2147483648
    %v1430 = vor.u32 1.1754944e-38, %v1429
    %v1431 = vsel %vm1428, %v1430, %v1426
    %v1432 = vmul.f32 1.0, %v1431
    %v1433 = vtanh.pop %v1393
    %v1434 = vxor.u32 %v1394, 2147483648
    %v1435 = vmul.f32 %v1434, 1.442695
    %v1436 = vpow.pop %v1435
    %v1437 = vadd.f32 %v1436, 1.0
    %v1438 = vrcp.pop %v1437
    %v1439 = vmul.f32 %v1437, %v1438
    %v1440 = vsub.f32 1.0, %v1439
    %v1441 = vmul.f32 %v1438, %v1440
    %v1442 = vadd.f32 %v1438, %v1441
    %vm1443 = vweird.f32 %v1437
    %vm1444 = vweird.f32 %v1438
    %vm1445 = vmor %vm1443, %vm1444
    %v1446 = vsel %vm1445, %v1438, %v1442
    %v1447 = vand.u32 2147483647, %v1437
    %vm1448 = vcmp.eq.f32.partialorder %v1447, 8.507059e+37
    %v1449 = vand.u32 %v1437, 2147483648
    %v1450 = vor.u32 1.1754944e-38, %v1449
    %v1451 = vsel %vm1448, %v1450, %v1446
    %v1452 = vmul.f32 1.0, %v1451
    %v1454 = vrot.slane %v1314, 1
    %v1456 = vmul.f32 %v1432, %v1454
    %v1457 = vmul.f32 %v1413, %v1433
    %v1458 = vadd.f32 %v1456, %v1457
    %v1459 = vtanh.pop %v1458
    %v1460 = vmul.f32 %v1452, %v1459
    %vm1461 = vcmask 518146
    %1462 = vst.msk [vmem:[#allocation2 + $0x3] sm:$0x4] %vm1461, %v1460
    %vm1463 = vcmask 1042946
    %1464 = vst.msk [vmem:[#allocation2] sm:$0x4] %vm1463, %v1460
    %v1465 = vpack.c.bf16 %v1460, %v1460
    %v1467 = vrot.slane %v1465, 1
    %1469 = vmatpush.bf16.msra.mxu0 %v542
    %1470 = vmatpush.bf16.msra.mxu0 %v538
    %1471 = vmatpush.bf16.msra.mxu0 %v534
    %1472 = vmatpush.bf16.msra.mxu0 %v530
    %1473 = vmatpush.bf16.msra.mxu0 %v526
    %1474 = vmatpush.bf16.msra.mxu0 %v522
    %1475 = vmatpush.bf16.msra.mxu0 %v518
    %1476 = vmatpush.bf16.msra.mxu0 %v514
    %1477 = vmatmul.bf16.gmra.mxu0 %v1467
    %v1478 = vpop.f32.mrf.mxu0
    %v1479 = vadd.f32 0.0, %v1478
    %v1480 = vpop.f32.mrf.mxu0
    %1481 = vdwg.mxu0
    %1482 = vmatpush.bf16.msra.mxu0 %v543
    %1483 = vmatpush.bf16.msra.mxu0 %v539
    %1484 = vmatpush.bf16.msra.mxu0 %v535
    %1485 = vmatpush.bf16.msra.mxu0 %v531
    %1486 = vmatpush.bf16.msra.mxu0 %v527
    %1487 = vmatpush.bf16.msra.mxu0 %v523
    %1488 = vmatpush.bf16.msra.mxu0 %v519
    %1489 = vmatpush.bf16.msra.mxu0 %v515
    %1490 = vmatmul.bf16.gmra.mxu0 %v1467
    %v1491 = vpop.f32.mrf.mxu0
    %v1492 = vadd.f32 0.0, %v1491
    %v1493 = vpop.f32.mrf.mxu0
    %1494 = vdwg.mxu0
    %1495 = vmatpush.bf16.msra.mxu0 %v544
    %1496 = vmatpush.bf16.msra.mxu0 %v540
    %1497 = vmatpush.bf16.msra.mxu0 %v536
    %1498 = vmatpush.bf16.msra.mxu0 %v532
    %1499 = vmatpush.bf16.msra.mxu0 %v528
    %1500 = vmatpush.bf16.msra.mxu0 %v524
    %1501 = vmatpush.bf16.msra.mxu0 %v520
    %1502 = vmatpush.bf16.msra.mxu0 %v516
    %1503 = vmatmul.bf16.gmra.mxu0 %v1467
    %v1504 = vpop.f32.mrf.mxu0
    %v1505 = vadd.f32 0.0, %v1504
    %v1506 = vpop.f32.mrf.mxu0
    %1507 = vdwg.mxu0
    %1508 = vmatpush.bf16.msra.mxu0 %v545
    %1509 = vmatpush.bf16.msra.mxu0 %v541
    %1510 = vmatpush.bf16.msra.mxu0 %v537
    %1511 = vmatpush.bf16.msra.mxu0 %v533
    %1512 = vmatpush.bf16.msra.mxu0 %v529
    %1513 = vmatpush.bf16.msra.mxu0 %v525
    %1514 = vmatpush.bf16.msra.mxu0 %v521
    %1515 = vmatpush.bf16.msra.mxu0 %v517
    %1516 = vmatmul.bf16.gmra.mxu0 %v1467
    %v1517 = vpop.f32.mrf.mxu0
    %v1518 = vadd.f32 0.0, %v1517
    %v1519 = vpop.f32.mrf.mxu0
    %1520 = vdwg.mxu0
    %v1525 = vrot.slane %v1479, 7
    %v1526 = vrot.slane %v1492, 7
    %v1527 = vrot.slane %v1505, 7
    %v1528 = vrot.slane %v1518, 7
    %v1533 = vadd.f32 %v877, %v1525
    %v1534 = vadd.f32 %v878, %v1526
    %v1535 = vadd.f32 %v879, %v1527
    %v1536 = vadd.f32 %v880, %v1528
    %v1537 = vxor.u32 %v1533, 2147483648
    %v1538 = vmul.f32 %v1537, 1.442695
    %v1539 = vpow.pop %v1538
    %v1540 = vadd.f32 %v1539, 1.0
    %v1541 = vrcp.pop %v1540
    %v1542 = vmul.f32 %v1540, %v1541
    %v1543 = vsub.f32 1.0, %v1542
    %v1544 = vmul.f32 %v1541, %v1543
    %v1545 = vadd.f32 %v1541, %v1544
    %vm1546 = vweird.f32 %v1540
    %vm1547 = vweird.f32 %v1541
    %vm1548 = vmor %vm1546, %vm1547
    %v1549 = vsel %vm1548, %v1541, %v1545
    %v1550 = vand.u32 2147483647, %v1540
    %vm1551 = vcmp.eq.f32.partialorder %v1550, 8.507059e+37
    %v1552 = vand.u32 %v1540, 2147483648
    %v1553 = vor.u32 1.1754944e-38, %v1552
    %v1554 = vsel %vm1551, %v1553, %v1549
    %v1555 = vmul.f32 1.0, %v1554
    %v1556 = vxor.u32 %v1534, 2147483648
    %v1557 = vmul.f32 %v1556, 1.442695
    %v1558 = vpow.pop %v1557
    %v1559 = vadd.f32 %v1558, 1.0
    %v1560 = vrcp.pop %v1559
    %v1561 = vmul.f32 %v1559, %v1560
    %v1562 = vsub.f32 1.0, %v1561
    %v1563 = vmul.f32 %v1560, %v1562
    %v1564 = vadd.f32 %v1560, %v1563
    %vm1565 = vweird.f32 %v1559
    %vm1566 = vweird.f32 %v1560
    %vm1567 = vmor %vm1565, %vm1566
    %v1568 = vsel %vm1567, %v1560, %v1564
    %v1569 = vand.u32 2147483647, %v1559
    %vm1570 = vcmp.eq.f32.partialorder %v1569, 8.507059e+37
    %v1571 = vand.u32 %v1559, 2147483648
    %v1572 = vor.u32 1.1754944e-38, %v1571
    %v1573 = vsel %vm1570, %v1572, %v1568
    %v1574 = vmul.f32 1.0, %v1573
    %v1575 = vtanh.pop %v1535
    %v1576 = vxor.u32 %v1536, 2147483648
    %v1577 = vmul.f32 %v1576, 1.442695
    %v1578 = vpow.pop %v1577
    %v1579 = vadd.f32 %v1578, 1.0
    %v1580 = vrcp.pop %v1579
    %v1581 = vmul.f32 %v1579, %v1580
    %v1582 = vsub.f32 1.0, %v1581
    %v1583 = vmul.f32 %v1580, %v1582
    %v1584 = vadd.f32 %v1580, %v1583
    %vm1585 = vweird.f32 %v1579
    %vm1586 = vweird.f32 %v1580
    %vm1587 = vmor %vm1585, %vm1586
    %v1588 = vsel %vm1587, %v1580, %v1584
    %v1589 = vand.u32 2147483647, %v1579
    %vm1590 = vcmp.eq.f32.partialorder %v1589, 8.507059e+37
    %v1591 = vand.u32 %v1579, 2147483648
    %v1592 = vor.u32 1.1754944e-38, %v1591
    %v1593 = vsel %vm1590, %v1592, %v1588
    %v1594 = vmul.f32 1.0, %v1593
    %v1596 = vrot.slane %v1458, 1
    %v1598 = vmul.f32 %v1574, %v1596
    %v1599 = vmul.f32 %v1555, %v1575
    %v1600 = vadd.f32 %v1598, %v1599
    %v1601 = vtanh.pop %v1600
    %v1602 = vmul.f32 %v1594, %v1601
    %vm1603 = vcmask 517121
    %1604 = vst.msk [vmem:[#allocation2 + $0x5] sm:$0x2] %vm1603, %v1602
    %vm1605 = vcmask 1041921
    %1606 = vst.msk [vmem:[#allocation2] sm:$0x2] %vm1605, %v1602
    %v1607 = vpack.c.bf16 %v1602, %v1602
    %v1609 = vshrl.u32 %v1607, 16
    %1612 = vmatpush.bf16.msra.mxu0 %v542
    %1613 = vmatpush.bf16.msra.mxu0 %v538
    %1614 = vmatpush.bf16.msra.mxu0 %v534
    %1615 = vmatpush.bf16.msra.mxu0 %v530
    %1616 = vmatpush.bf16.msra.mxu0 %v526
    %1617 = vmatpush.bf16.msra.mxu0 %v522
    %1618 = vmatpush.bf16.msra.mxu0 %v518
    %1619 = vmatpush.bf16.msra.mxu0 %v514
    %1620 = vmatmul.bf16.gmra.mxu0 %v1609
    %v1621 = vpop.f32.mrf.mxu0
    %v1622 = vadd.f32 0.0, %v1621
    %v1623 = vpop.f32.mrf.mxu0
    %1624 = vdwg.mxu0
    %1625 = vmatpush.bf16.msra.mxu0 %v543
    %1626 = vmatpush.bf16.msra.mxu0 %v539
    %1627 = vmatpush.bf16.msra.mxu0 %v535
    %1628 = vmatpush.bf16.msra.mxu0 %v531
    %1629 = vmatpush.bf16.msra.mxu0 %v527
    %1630 = vmatpush.bf16.msra.mxu0 %v523
    %1631 = vmatpush.bf16.msra.mxu0 %v519
    %1632 = vmatpush.bf16.msra.mxu0 %v515
    %1633 = vmatmul.bf16.gmra.mxu0 %v1609
    %v1634 = vpop.f32.mrf.mxu0
    %v1635 = vadd.f32 0.0, %v1634
    %v1636 = vpop.f32.mrf.mxu0
    %1637 = vdwg.mxu0
    %1638 = vmatpush.bf16.msra.mxu0 %v544
    %1639 = vmatpush.bf16.msra.mxu0 %v540
    %1640 = vmatpush.bf16.msra.mxu0 %v536
    %1641 = vmatpush.bf16.msra.mxu0 %v532
    %1642 = vmatpush.bf16.msra.mxu0 %v528
    %1643 = vmatpush.bf16.msra.mxu0 %v524
    %1644 = vmatpush.bf16.msra.mxu0 %v520
    %1645 = vmatpush.bf16.msra.mxu0 %v516
    %1646 = vmatmul.bf16.gmra.mxu0 %v1609
    %v1647 = vpop.f32.mrf.mxu0
    %v1648 = vadd.f32 0.0, %v1647
    %v1649 = vpop.f32.mrf.mxu0
    %1650 = vdwg.mxu0
    %1651 = vmatpush.bf16.msra.mxu0 %v545
    %1652 = vmatpush.bf16.msra.mxu0 %v541
    %1653 = vmatpush.bf16.msra.mxu0 %v537
    %1654 = vmatpush.bf16.msra.mxu0 %v533
    %1655 = vmatpush.bf16.msra.mxu0 %v529
    %1656 = vmatpush.bf16.msra.mxu0 %v525
    %1657 = vmatpush.bf16.msra.mxu0 %v521
    %1658 = vmatpush.bf16.msra.mxu0 %v517
    %1659 = vmatmul.bf16.gmra.mxu0 %v1609
    %v1660 = vpop.f32.mrf.mxu0
    %v1661 = vadd.f32 0.0, %v1660
    %v1662 = vpop.f32.mrf.mxu0
    %1663 = vdwg.mxu0
    %v1664 = vadd.f32 %v1031, %v1622
    %v1665 = vadd.f32 %v1032, %v1635
    %v1666 = vadd.f32 %v1033, %v1648
    %v1667 = vadd.f32 %v1034, %v1661
    %v1668 = vxor.u32 %v1664, 2147483648
    %v1669 = vmul.f32 %v1668, 1.442695
    %v1670 = vpow.pop %v1669
    %v1671 = vadd.f32 %v1670, 1.0
    %v1672 = vrcp.pop %v1671
    %v1673 = vmul.f32 %v1671, %v1672
    %v1674 = vsub.f32 1.0, %v1673
    %v1675 = vmul.f32 %v1672, %v1674
    %v1676 = vadd.f32 %v1672, %v1675
    %vm1677 = vweird.f32 %v1671
    %vm1678 = vweird.f32 %v1672
    %vm1679 = vmor %vm1677, %vm1678
    %v1680 = vsel %vm1679, %v1672, %v1676
    %v1681 = vand.u32 2147483647, %v1671
    %vm1682 = vcmp.eq.f32.partialorder %v1681, 8.507059e+37
    %v1683 = vand.u32 %v1671, 2147483648
    %v1684 = vor.u32 1.1754944e-38, %v1683
    %v1685 = vsel %vm1682, %v1684, %v1680
    %v1686 = vmul.f32 1.0, %v1685
    %v1687 = vxor.u32 %v1665, 2147483648
    %v1688 = vmul.f32 %v1687, 1.442695
    %v1689 = vpow.pop %v1688
    %v1690 = vadd.f32 %v1689, 1.0
    %v1691 = vrcp.pop %v1690
    %v1692 = vmul.f32 %v1690, %v1691
    %v1693 = vsub.f32 1.0, %v1692
    %v1694 = vmul.f32 %v1691, %v1693
    %v1695 = vadd.f32 %v1691, %v1694
    %vm1696 = vweird.f32 %v1690
    %vm1697 = vweird.f32 %v1691
    %vm1698 = vmor %vm1696, %vm1697
    %v1699 = vsel %vm1698, %v1691, %v1695
    %v1700 = vand.u32 2147483647, %v1690
    %vm1701 = vcmp.eq.f32.partialorder %v1700, 8.507059e+37
    %v1702 = vand.u32 %v1690, 2147483648
    %v1703 = vor.u32 1.1754944e-38, %v1702
    %v1704 = vsel %vm1701, %v1703, %v1699
    %v1705 = vmul.f32 1.0, %v1704
    %v1706 = vtanh.pop %v1666
    %v1707 = vxor.u32 %v1667, 2147483648
    %v1708 = vmul.f32 %v1707, 1.442695
    %v1709 = vpow.pop %v1708
    %v1710 = vadd.f32 %v1709, 1.0
    %v1711 = vrcp.pop %v1710
    %v1712 = vmul.f32 %v1710, %v1711
    %v1713 = vsub.f32 1.0, %v1712
    %v1714 = vmul.f32 %v1711, %v1713
    %v1715 = vadd.f32 %v1711, %v1714
    %vm1716 = vweird.f32 %v1710
    %vm1717 = vweird.f32 %v1711
    %vm1718 = vmor %vm1716, %vm1717
    %v1719 = vsel %vm1718, %v1711, %v1715
    %v1720 = vand.u32 2147483647, %v1710
    %vm1721 = vcmp.eq.f32.partialorder %v1720, 8.507059e+37
    %v1722 = vand.u32 %v1710, 2147483648
    %v1723 = vor.u32 1.1754944e-38, %v1722
    %v1724 = vsel %vm1721, %v1723, %v1719
    %v1725 = vmul.f32 1.0, %v1724
    %v1727 = vrot.slane %v1600, 1
    %v1729 = vmul.f32 %v1705, %v1727
    %v1730 = vmul.f32 %v1686, %v1706
    %v1731 = vadd.f32 %v1729, %v1730
    %v1732 = vtanh.pop %v1731
    %v1733 = vmul.f32 %v1725, %v1732
    %vm1734 = vcmask 516096
    %1735 = vst.msk [vmem:[#allocation2 + $0x7] sm:$0x1] %vm1734, %v1733
    %vm1736 = vcmask 1040896
    %1737 = vst.msk [vmem:[#allocation2] sm:$0x1] %vm1736, %v1733
    %v1738 = vld [vmem:[#allocation2] sm:$0xff]
    %s1739 = scalar_lea.vmem [#allocation3], 256
    %v1740 = vld [vmem:[%s1739] sm:$0xff]
    %v1741 = vld [vmem:[%s1739 + $0x8] sm:$0xff]
    %v1742 = vld [vmem:[%s1739 + $0x10] sm:$0xff]
    %v1743 = vld [vmem:[%s1739 + $0x18] sm:$0xff]
    %v1744 = vld [vmem:[%s1739 + $0x20] sm:$0xff]
    %v1745 = vld [vmem:[%s1739 + $0x28] sm:$0xff]
    %v1746 = vld [vmem:[%s1739 + $0x30] sm:$0xff]
    %v1747 = vld [vmem:[%s1739 + $0x38] sm:$0xff]
    %v1748 = vld [vmem:[%s1739 + $0x40] sm:$0xff]
    %v1749 = vld [vmem:[%s1739 + $0x48] sm:$0xff]
    %v1750 = vld [vmem:[%s1739 + $0x50] sm:$0xff]
    %v1751 = vld [vmem:[%s1739 + $0x58] sm:$0xff]
    %v1752 = vld [vmem:[%s1739 + $0x60] sm:$0xff]
    %v1753 = vld [vmem:[%s1739 + $0x68] sm:$0xff]
    %v1754 = vld [vmem:[%s1739 + $0x70] sm:$0xff]
    %v1755 = vld [vmem:[%s1739 + $0x78] sm:$0xff]
    %v1756 = vld [vmem:[%s1739 + $0x80] sm:$0xff]
    %v1757 = vld [vmem:[%s1739 + $0x88] sm:$0xff]
    %v1758 = vld [vmem:[%s1739 + $0x90] sm:$0xff]
    %v1759 = vld [vmem:[%s1739 + $0x98] sm:$0xff]
    %v1760 = vld [vmem:[%s1739 + $0xa0] sm:$0xff]
    %v1761 = vld [vmem:[%s1739 + $0xa8] sm:$0xff]
    %v1762 = vld [vmem:[%s1739 + $0xb0] sm:$0xff]
    %v1763 = vld [vmem:[%s1739 + $0xb8] sm:$0xff]
    %v1764 = vld [vmem:[%s1739 + $0xc0] sm:$0xff]
    %v1765 = vld [vmem:[%s1739 + $0xc8] sm:$0xff]
    %v1766 = vld [vmem:[%s1739 + $0xd0] sm:$0xff]
    %v1767 = vld [vmem:[%s1739 + $0xd8] sm:$0xff]
    %v1768 = vld [vmem:[%s1739 + $0xe0] sm:$0xff]
    %v1769 = vld [vmem:[%s1739 + $0xe8] sm:$0xff]
    %v1770 = vld [vmem:[%s1739 + $0xf0] sm:$0xff]
    %v1771 = vld [vmem:[%s1739 + $0xf8] sm:$0xff]
    %s1772 = scalar_lea.vmem [#allocation6], 256
    %v1773 = vld [vmem:[%s1772] sm:$0xff]
    %v1774 = vld [vmem:[%s1772 + $0x8] sm:$0xff]
    %v1775 = vld [vmem:[%s1772 + $0x10] sm:$0xff]
    %v1776 = vld [vmem:[%s1772 + $0x18] sm:$0xff]
    %v1777 = vld [vmem:[%s1772 + $0x20] sm:$0xff]
    %v1778 = vld [vmem:[%s1772 + $0x28] sm:$0xff]
    %v1779 = vld [vmem:[%s1772 + $0x30] sm:$0xff]
    %v1780 = vld [vmem:[%s1772 + $0x38] sm:$0xff]
    %v1781 = vld [vmem:[%s1772 + $0x40] sm:$0xff]
    %v1782 = vld [vmem:[%s1772 + $0x48] sm:$0xff]
    %v1783 = vld [vmem:[%s1772 + $0x50] sm:$0xff]
    %v1784 = vld [vmem:[%s1772 + $0x58] sm:$0xff]
    %v1785 = vld [vmem:[%s1772 + $0x60] sm:$0xff]
    %v1786 = vld [vmem:[%s1772 + $0x68] sm:$0xff]
    %v1787 = vld [vmem:[%s1772 + $0x70] sm:$0xff]
    %v1788 = vld [vmem:[%s1772 + $0x78] sm:$0xff]
    %v1789 = vld [vmem:[%s1772 + $0x80] sm:$0xff]
    %v1790 = vld [vmem:[%s1772 + $0x88] sm:$0xff]
    %v1791 = vld [vmem:[%s1772 + $0x90] sm:$0xff]
    %v1792 = vld [vmem:[%s1772 + $0x98] sm:$0xff]
    %v1793 = vld [vmem:[%s1772 + $0xa0] sm:$0xff]
    %v1794 = vld [vmem:[%s1772 + $0xa8] sm:$0xff]
    %v1795 = vld [vmem:[%s1772 + $0xb0] sm:$0xff]
    %v1796 = vld [vmem:[%s1772 + $0xb8] sm:$0xff]
    %v1797 = vld [vmem:[%s1772 + $0xc0] sm:$0xff]
    %v1798 = vld [vmem:[%s1772 + $0xc8] sm:$0xff]
    %v1799 = vld [vmem:[%s1772 + $0xd0] sm:$0xff]
    %v1800 = vld [vmem:[%s1772 + $0xd8] sm:$0xff]
    %v1801 = vld [vmem:[%s1772 + $0xe0] sm:$0xff]
    %v1802 = vld [vmem:[%s1772 + $0xe8] sm:$0xff]
    %v1803 = vld [vmem:[%s1772 + $0xf0] sm:$0xff]
    %v1804 = vld [vmem:[%s1772 + $0xf8] sm:$0xff]
    %s1805 = scalar_lea.vmem %s3, 4
    %v1806 = vld [vmem:[%s1805] sm:$0xf]
    %v1807 = vpack.c.bf16 %v1738, %v1738
    %v1809 = vperm.slane %v1806, 0
    %v1810 = vperm.slane %v1806, 1
    %v1811 = vperm.slane %v1806, 2
    %v1812 = vperm.slane %v1806, 3
    %v1849 = vunpack.c.l.b16 %v1740
    %v1850 = vunpack.c.h.b16 %v1740
    %v1851 = vunpack.c.l.b16 %v1741
    %v1852 = vunpack.c.h.b16 %v1741
    %v1853 = vunpack.c.l.b16 %v1742
    %v1854 = vunpack.c.h.b16 %v1742
    %v1855 = vunpack.c.l.b16 %v1743
    %v1856 = vunpack.c.h.b16 %v1743
    %v1857 = vunpack.c.l.b16 %v1744
    %v1858 = vunpack.c.h.b16 %v1744
    %v1859 = vunpack.c.l.b16 %v1745
    %v1860 = vunpack.c.h.b16 %v1745
    %v1861 = vunpack.c.l.b16 %v1746
    %v1862 = vunpack.c.h.b16 %v1746
    %v1863 = vunpack.c.l.b16 %v1747
    %v1864 = vunpack.c.h.b16 %v1747
    %v1865 = vunpack.c.l.b16 %v1748
    %v1866 = vunpack.c.h.b16 %v1748
    %v1867 = vunpack.c.l.b16 %v1749
    %v1868 = vunpack.c.h.b16 %v1749
    %v1869 = vunpack.c.l.b16 %v1750
    %v1870 = vunpack.c.h.b16 %v1750
    %v1871 = vunpack.c.l.b16 %v1751
    %v1872 = vunpack.c.h.b16 %v1751
    %v1873 = vunpack.c.l.b16 %v1752
    %v1874 = vunpack.c.h.b16 %v1752
    %v1875 = vunpack.c.l.b16 %v1753
    %v1876 = vunpack.c.h.b16 %v1753
    %v1877 = vunpack.c.l.b16 %v1754
    %v1878 = vunpack.c.h.b16 %v1754
    %v1879 = vunpack.c.l.b16 %v1755
    %v1880 = vunpack.c.h.b16 %v1755
    %v1881 = vunpack.c.l.b16 %v1756
    %v1882 = vunpack.c.h.b16 %v1756
    %v1883 = vunpack.c.l.b16 %v1757
    %v1884 = vunpack.c.h.b16 %v1757
    %v1885 = vunpack.c.l.b16 %v1758
    %v1886 = vunpack.c.h.b16 %v1758
    %v1887 = vunpack.c.l.b16 %v1759
    %v1888 = vunpack.c.h.b16 %v1759
    %v1889 = vunpack.c.l.b16 %v1760
    %v1890 = vunpack.c.h.b16 %v1760
    %v1891 = vunpack.c.l.b16 %v1761
    %v1892 = vunpack.c.h.b16 %v1761
    %v1893 = vunpack.c.l.b16 %v1762
    %v1894 = vunpack.c.h.b16 %v1762
    %v1895 = vunpack.c.l.b16 %v1763
    %v1896 = vunpack.c.h.b16 %v1763
    %v1897 = vunpack.c.l.b16 %v1764
    %v1898 = vunpack.c.h.b16 %v1764
    %v1899 = vunpack.c.l.b16 %v1765
    %v1900 = vunpack.c.h.b16 %v1765
    %v1901 = vunpack.c.l.b16 %v1766
    %v1902 = vunpack.c.h.b16 %v1766
    %v1903 = vunpack.c.l.b16 %v1767
    %v1904 = vunpack.c.h.b16 %v1767
    %v1905 = vunpack.c.l.b16 %v1768
    %v1906 = vunpack.c.h.b16 %v1768
    %v1907 = vunpack.c.l.b16 %v1769
    %v1908 = vunpack.c.h.b16 %v1769
    %v1909 = vunpack.c.l.b16 %v1770
    %v1910 = vunpack.c.h.b16 %v1770
    %v1911 = vunpack.c.l.b16 %v1771
    %v1912 = vunpack.c.h.b16 %v1771
    %v1913 = vpack.c.b16 %v1853, %v1849
    %v1914 = vpack.c.b16 %v1854, %v1850
    %v1915 = vpack.c.b16 %v1855, %v1851
    %v1916 = vpack.c.b16 %v1856, %v1852
    %v1917 = vpack.c.b16 %v1861, %v1857
    %v1918 = vpack.c.b16 %v1862, %v1858
    %v1919 = vpack.c.b16 %v1863, %v1859
    %v1920 = vpack.c.b16 %v1864, %v1860
    %v1921 = vpack.c.b16 %v1869, %v1865
    %v1922 = vpack.c.b16 %v1870, %v1866
    %v1923 = vpack.c.b16 %v1871, %v1867
    %v1924 = vpack.c.b16 %v1872, %v1868
    %v1925 = vpack.c.b16 %v1877, %v1873
    %v1926 = vpack.c.b16 %v1878, %v1874
    %v1927 = vpack.c.b16 %v1879, %v1875
    %v1928 = vpack.c.b16 %v1880, %v1876
    %v1929 = vpack.c.b16 %v1885, %v1881
    %v1930 = vpack.c.b16 %v1886, %v1882
    %v1931 = vpack.c.b16 %v1887, %v1883
    %v1932 = vpack.c.b16 %v1888, %v1884
    %v1933 = vpack.c.b16 %v1893, %v1889
    %v1934 = vpack.c.b16 %v1894, %v1890
    %v1935 = vpack.c.b16 %v1895, %v1891
    %v1936 = vpack.c.b16 %v1896, %v1892
    %v1937 = vpack.c.b16 %v1901, %v1897
    %v1938 = vpack.c.b16 %v1902, %v1898
    %v1939 = vpack.c.b16 %v1903, %v1899
    %v1940 = vpack.c.b16 %v1904, %v1900
    %v1941 = vpack.c.b16 %v1909, %v1905
    %v1942 = vpack.c.b16 %v1910, %v1906
    %v1943 = vpack.c.b16 %v1911, %v1907
    %v1944 = vpack.c.b16 %v1912, %v1908
    %1977 = vmatpush.bf16.msra.mxu0 %v1941
    %1978 = vmatpush.bf16.msra.mxu0 %v1937
    %1979 = vmatpush.bf16.msra.mxu0 %v1933
    %1980 = vmatpush.bf16.msra.mxu0 %v1929
    %1981 = vmatpush.bf16.msra.mxu0 %v1925
    %1982 = vmatpush.bf16.msra.mxu0 %v1921
    %1983 = vmatpush.bf16.msra.mxu0 %v1917
    %1984 = vmatpush.bf16.msra.mxu0 %v1913
    %1985 = vmatmul.bf16.gmra.mxu0 %v1807
    %v1986 = vpop.f32.mrf.mxu0
    %v1987 = vadd.f32 %v1809, %v1986
    %v1988 = vpop.f32.mrf.mxu0
    %1989 = vdwg.mxu0
    %1990 = vmatpush.bf16.msra.mxu0 %v1942
    %1991 = vmatpush.bf16.msra.mxu0 %v1938
    %1992 = vmatpush.bf16.msra.mxu0 %v1934
    %1993 = vmatpush.bf16.msra.mxu0 %v1930
    %1994 = vmatpush.bf16.msra.mxu0 %v1926
    %1995 = vmatpush.bf16.msra.mxu0 %v1922
    %1996 = vmatpush.bf16.msra.mxu0 %v1918
    %1997 = vmatpush.bf16.msra.mxu0 %v1914
    %1998 = vmatmul.bf16.gmra.mxu0 %v1807
    %v1999 = vpop.f32.mrf.mxu0
    %v2000 = vadd.f32 %v1810, %v1999
    %v2001 = vpop.f32.mrf.mxu0
    %2002 = vdwg.mxu0
    %2003 = vmatpush.bf16.msra.mxu0 %v1943
    %2004 = vmatpush.bf16.msra.mxu0 %v1939
    %2005 = vmatpush.bf16.msra.mxu0 %v1935
    %2006 = vmatpush.bf16.msra.mxu0 %v1931
    %2007 = vmatpush.bf16.msra.mxu0 %v1927
    %2008 = vmatpush.bf16.msra.mxu0 %v1923
    %2009 = vmatpush.bf16.msra.mxu0 %v1919
    %2010 = vmatpush.bf16.msra.mxu0 %v1915
    %2011 = vmatmul.bf16.gmra.mxu0 %v1807
    %v2012 = vpop.f32.mrf.mxu0
    %v2013 = vadd.f32 %v1811, %v2012
    %v2014 = vpop.f32.mrf.mxu0
    %2015 = vdwg.mxu0
    %2016 = vmatpush.bf16.msra.mxu0 %v1944
    %2017 = vmatpush.bf16.msra.mxu0 %v1940
    %2018 = vmatpush.bf16.msra.mxu0 %v1936
    %2019 = vmatpush.bf16.msra.mxu0 %v1932
    %2020 = vmatpush.bf16.msra.mxu0 %v1928
    %2021 = vmatpush.bf16.msra.mxu0 %v1924
    %2022 = vmatpush.bf16.msra.mxu0 %v1920
    %2023 = vmatpush.bf16.msra.mxu0 %v1916
    %2024 = vmatmul.bf16.gmra.mxu0 %v1807
    %v2025 = vpop.f32.mrf.mxu0
    %v2026 = vadd.f32 %v1812, %v2025
    %v2027 = vpop.f32.mrf.mxu0
    %2028 = vdwg.mxu0
    %v2033 = vrot.slane %v1987, 1
    %v2034 = vrot.slane %v2000, 1
    %v2035 = vrot.slane %v2013, 1
    %v2036 = vrot.slane %v2026, 1
    %v2041 = vsel %vm111, %v1987, %v2033
    %v2042 = vsel %vm112, %v2000, %v2034
    %v2043 = vsel %vm113, %v2013, %v2035
    %v2044 = vsel %vm114, %v2026, %v2036
    %v2077 = vunpack.c.l.b16 %v1773
    %v2078 = vunpack.c.h.b16 %v1773
    %v2079 = vunpack.c.l.b16 %v1774
    %v2080 = vunpack.c.h.b16 %v1774
    %v2081 = vunpack.c.l.b16 %v1775
    %v2082 = vunpack.c.h.b16 %v1775
    %v2083 = vunpack.c.l.b16 %v1776
    %v2084 = vunpack.c.h.b16 %v1776
    %v2085 = vunpack.c.l.b16 %v1777
    %v2086 = vunpack.c.h.b16 %v1777
    %v2087 = vunpack.c.l.b16 %v1778
    %v2088 = vunpack.c.h.b16 %v1778
    %v2089 = vunpack.c.l.b16 %v1779
    %v2090 = vunpack.c.h.b16 %v1779
    %v2091 = vunpack.c.l.b16 %v1780
    %v2092 = vunpack.c.h.b16 %v1780
    %v2093 = vunpack.c.l.b16 %v1781
    %v2094 = vunpack.c.h.b16 %v1781
    %v2095 = vunpack.c.l.b16 %v1782
    %v2096 = vunpack.c.h.b16 %v1782
    %v2097 = vunpack.c.l.b16 %v1783
    %v2098 = vunpack.c.h.b16 %v1783
    %v2099 = vunpack.c.l.b16 %v1784
    %v2100 = vunpack.c.h.b16 %v1784
    %v2101 = vunpack.c.l.b16 %v1785
    %v2102 = vunpack.c.h.b16 %v1785
    %v2103 = vunpack.c.l.b16 %v1786
    %v2104 = vunpack.c.h.b16 %v1786
    %v2105 = vunpack.c.l.b16 %v1787
    %v2106 = vunpack.c.h.b16 %v1787
    %v2107 = vunpack.c.l.b16 %v1788
    %v2108 = vunpack.c.h.b16 %v1788
    %v2109 = vunpack.c.l.b16 %v1789
    %v2110 = vunpack.c.h.b16 %v1789
    %v2111 = vunpack.c.l.b16 %v1790
    %v2112 = vunpack.c.h.b16 %v1790
    %v2113 = vunpack.c.l.b16 %v1791
    %v2114 = vunpack.c.h.b16 %v1791
    %v2115 = vunpack.c.l.b16 %v1792
    %v2116 = vunpack.c.h.b16 %v1792
    %v2117 = vunpack.c.l.b16 %v1793
    %v2118 = vunpack.c.h.b16 %v1793
    %v2119 = vunpack.c.l.b16 %v1794
    %v2120 = vunpack.c.h.b16 %v1794
    %v2121 = vunpack.c.l.b16 %v1795
    %v2122 = vunpack.c.h.b16 %v1795
    %v2123 = vunpack.c.l.b16 %v1796
    %v2124 = vunpack.c.h.b16 %v1796
    %v2125 = vunpack.c.l.b16 %v1797
    %v2126 = vunpack.c.h.b16 %v1797
    %v2127 = vunpack.c.l.b16 %v1798
    %v2128 = vunpack.c.h.b16 %v1798
    %v2129 = vunpack.c.l.b16 %v1799
    %v2130 = vunpack.c.h.b16 %v1799
    %v2131 = vunpack.c.l.b16 %v1800
    %v2132 = vunpack.c.h.b16 %v1800
    %v2133 = vunpack.c.l.b16 %v1801
    %v2134 = vunpack.c.h.b16 %v1801
    %v2135 = vunpack.c.l.b16 %v1802
    %v2136 = vunpack.c.h.b16 %v1802
    %v2137 = vunpack.c.l.b16 %v1803
    %v2138 = vunpack.c.h.b16 %v1803
    %v2139 = vunpack.c.l.b16 %v1804
    %v2140 = vunpack.c.h.b16 %v1804
    %v2141 = vpack.c.b16 %v2081, %v2077
    %v2142 = vpack.c.b16 %v2082, %v2078
    %v2143 = vpack.c.b16 %v2083, %v2079
    %v2144 = vpack.c.b16 %v2084, %v2080
    %v2145 = vpack.c.b16 %v2089, %v2085
    %v2146 = vpack.c.b16 %v2090, %v2086
    %v2147 = vpack.c.b16 %v2091, %v2087
    %v2148 = vpack.c.b16 %v2092, %v2088
    %v2149 = vpack.c.b16 %v2097, %v2093
    %v2150 = vpack.c.b16 %v2098, %v2094
    %v2151 = vpack.c.b16 %v2099, %v2095
    %v2152 = vpack.c.b16 %v2100, %v2096
    %v2153 = vpack.c.b16 %v2105, %v2101
    %v2154 = vpack.c.b16 %v2106, %v2102
    %v2155 = vpack.c.b16 %v2107, %v2103
    %v2156 = vpack.c.b16 %v2108, %v2104
    %v2157 = vpack.c.b16 %v2113, %v2109
    %v2158 = vpack.c.b16 %v2114, %v2110
    %v2159 = vpack.c.b16 %v2115, %v2111
    %v2160 = vpack.c.b16 %v2116, %v2112
    %v2161 = vpack.c.b16 %v2121, %v2117
    %v2162 = vpack.c.b16 %v2122, %v2118
    %v2163 = vpack.c.b16 %v2123, %v2119
    %v2164 = vpack.c.b16 %v2124, %v2120
    %v2165 = vpack.c.b16 %v2129, %v2125
    %v2166 = vpack.c.b16 %v2130, %v2126
    %v2167 = vpack.c.b16 %v2131, %v2127
    %v2168 = vpack.c.b16 %v2132, %v2128
    %v2169 = vpack.c.b16 %v2137, %v2133
    %v2170 = vpack.c.b16 %v2138, %v2134
    %v2171 = vpack.c.b16 %v2139, %v2135
    %v2172 = vpack.c.b16 %v2140, %v2136
    %2205 = vmatpush.bf16.msra.mxu0 %v2169
    %2206 = vmatpush.bf16.msra.mxu0 %v2165
    %2207 = vmatpush.bf16.msra.mxu0 %v2161
    %2208 = vmatpush.bf16.msra.mxu0 %v2157
    %2209 = vmatpush.bf16.msra.mxu0 %v2153
    %2210 = vmatpush.bf16.msra.mxu0 %v2149
    %2211 = vmatpush.bf16.msra.mxu0 %v2145
    %2212 = vmatpush.bf16.msra.mxu0 %v2141
    %2213 = vmatmul.bf16.gmra.mxu0 0
    %v2214 = vpop.f32.mrf.mxu0
    %v2215 = vadd.f32 0.0, %v2214
    %v2216 = vpop.f32.mrf.mxu0
    %2217 = vdwg.mxu0
    %2218 = vmatpush.bf16.msra.mxu0 %v2170
    %2219 = vmatpush.bf16.msra.mxu0 %v2166
    %2220 = vmatpush.bf16.msra.mxu0 %v2162
    %2221 = vmatpush.bf16.msra.mxu0 %v2158
    %2222 = vmatpush.bf16.msra.mxu0 %v2154
    %2223 = vmatpush.bf16.msra.mxu0 %v2150
    %2224 = vmatpush.bf16.msra.mxu0 %v2146
    %2225 = vmatpush.bf16.msra.mxu0 %v2142
    %2226 = vmatmul.bf16.gmra.mxu0 0
    %v2227 = vpop.f32.mrf.mxu0
    %v2228 = vadd.f32 0.0, %v2227
    %v2229 = vpop.f32.mrf.mxu0
    %2230 = vdwg.mxu0
    %2231 = vmatpush.bf16.msra.mxu0 %v2171
    %2232 = vmatpush.bf16.msra.mxu0 %v2167
    %2233 = vmatpush.bf16.msra.mxu0 %v2163
    %2234 = vmatpush.bf16.msra.mxu0 %v2159
    %2235 = vmatpush.bf16.msra.mxu0 %v2155
    %2236 = vmatpush.bf16.msra.mxu0 %v2151
    %2237 = vmatpush.bf16.msra.mxu0 %v2147
    %2238 = vmatpush.bf16.msra.mxu0 %v2143
    %2239 = vmatmul.bf16.gmra.mxu0 0
    %v2240 = vpop.f32.mrf.mxu0
    %v2241 = vadd.f32 0.0, %v2240
    %v2242 = vpop.f32.mrf.mxu0
    %2243 = vdwg.mxu0
    %2244 = vmatpush.bf16.msra.mxu0 %v2172
    %2245 = vmatpush.bf16.msra.mxu0 %v2168
    %2246 = vmatpush.bf16.msra.mxu0 %v2164
    %2247 = vmatpush.bf16.msra.mxu0 %v2160
    %2248 = vmatpush.bf16.msra.mxu0 %v2156
    %2249 = vmatpush.bf16.msra.mxu0 %v2152
    %2250 = vmatpush.bf16.msra.mxu0 %v2148
    %2251 = vmatpush.bf16.msra.mxu0 %v2144
    %2252 = vmatmul.bf16.gmra.mxu0 0
    %v2253 = vpop.f32.mrf.mxu0
    %v2254 = vadd.f32 0.0, %v2253
    %v2255 = vpop.f32.mrf.mxu0
    %2256 = vdwg.mxu0
    %v2261 = vrot.slane %v2215, 1
    %v2262 = vrot.slane %v2228, 1
    %v2263 = vrot.slane %v2241, 1
    %v2264 = vrot.slane %v2254, 1
    %v2269 = vadd.f32 %v2041, %v2261
    %v2270 = vadd.f32 %v2042, %v2262
    %v2271 = vadd.f32 %v2043, %v2263
    %v2272 = vadd.f32 %v2044, %v2264
    %v2273 = vxor.u32 %v2269, 2147483648
    %v2274 = vmul.f32 %v2273, 1.442695
    %v2275 = vpow.pop %v2274
    %v2276 = vadd.f32 %v2275, 1.0
    %v2277 = vrcp.pop %v2276
    %v2278 = vmul.f32 %v2276, %v2277
    %v2279 = vsub.f32 1.0, %v2278
    %v2280 = vmul.f32 %v2277, %v2279
    %v2281 = vadd.f32 %v2277, %v2280
    %vm2282 = vweird.f32 %v2276
    %vm2283 = vweird.f32 %v2277
    %vm2284 = vmor %vm2282, %vm2283
    %v2285 = vsel %vm2284, %v2277, %v2281
    %v2286 = vand.u32 2147483647, %v2276
    %vm2287 = vcmp.eq.f32.partialorder %v2286, 8.507059e+37
    %v2288 = vand.u32 %v2276, 2147483648
    %v2289 = vor.u32 1.1754944e-38, %v2288
    %v2290 = vsel %vm2287, %v2289, %v2285
    %v2291 = vmul.f32 1.0, %v2290
    %v2292 = vxor.u32 %v2270, 2147483648
    %v2293 = vmul.f32 %v2292, 1.442695
    %v2294 = vpow.pop %v2293
    %v2295 = vadd.f32 %v2294, 1.0
    %v2296 = vrcp.pop %v2295
    %v2297 = vmul.f32 %v2295, %v2296
    %v2298 = vsub.f32 1.0, %v2297
    %v2299 = vmul.f32 %v2296, %v2298
    %v2300 = vadd.f32 %v2296, %v2299
    %vm2301 = vweird.f32 %v2295
    %vm2302 = vweird.f32 %v2296
    %vm2303 = vmor %vm2301, %vm2302
    %v2304 = vsel %vm2303, %v2296, %v2300
    %v2305 = vand.u32 2147483647, %v2295
    %vm2306 = vcmp.eq.f32.partialorder %v2305, 8.507059e+37
    %v2307 = vand.u32 %v2295, 2147483648
    %v2308 = vor.u32 1.1754944e-38, %v2307
    %v2309 = vsel %vm2306, %v2308, %v2304
    %v2310 = vmul.f32 1.0, %v2309
    %v2311 = vtanh.pop %v2271
    %v2312 = vxor.u32 %v2272, 2147483648
    %v2313 = vmul.f32 %v2312, 1.442695
    %v2314 = vpow.pop %v2313
    %v2315 = vadd.f32 %v2314, 1.0
    %v2316 = vrcp.pop %v2315
    %v2317 = vmul.f32 %v2315, %v2316
    %v2318 = vsub.f32 1.0, %v2317
    %v2319 = vmul.f32 %v2316, %v2318
    %v2320 = vadd.f32 %v2316, %v2319
    %vm2321 = vweird.f32 %v2315
    %vm2322 = vweird.f32 %v2316
    %vm2323 = vmor %vm2321, %vm2322
    %v2324 = vsel %vm2323, %v2316, %v2320
    %v2325 = vand.u32 2147483647, %v2315
    %vm2326 = vcmp.eq.f32.partialorder %v2325, 8.507059e+37
    %v2327 = vand.u32 %v2315, 2147483648
    %v2328 = vor.u32 1.1754944e-38, %v2327
    %v2329 = vsel %vm2326, %v2328, %v2324
    %v2330 = vmul.f32 1.0, %v2329
    %v2331 = vmul.f32 %v2310, 0.0
    %v2332 = vmul.f32 %v2291, %v2311
    %v2333 = vadd.f32 %v2331, %v2332
    %v2334 = vtanh.pop %v2333
    %v2335 = vmul.f32 %v2330, %v2334
    %s2336 = scalar_lea.vmem [#allocation2], 8
    %2337 = vst.msk [vmem:[%s2336 - $0x7] sm:$0x80] %vm709, %v2335
    %2338 = vst.msk [vmem:[%s2336] sm:$0x80] %vm711, %v2335
    %v2339 = vrot.slane %v1987, 3
    %v2340 = vrot.slane %v2000, 3
    %v2341 = vrot.slane %v2013, 3
    %v2342 = vrot.slane %v2026, 3
    %v2347 = vsel %vm111, %v1987, %v2339
    %v2348 = vsel %vm112, %v2000, %v2340
    %v2349 = vsel %vm113, %v2013, %v2341
    %v2350 = vsel %vm114, %v2026, %v2342
    %v2351 = vpack.c.bf16 %v2335, %v2335
    %v2353 = vshrl.u32 %v2351, 16
    %v2355 = vrot.slane %v2353, 3
    %2357 = vmatpush.bf16.msra.mxu0 %v2169
    %2358 = vmatpush.bf16.msra.mxu0 %v2165
    %2359 = vmatpush.bf16.msra.mxu0 %v2161
    %2360 = vmatpush.bf16.msra.mxu0 %v2157
    %2361 = vmatpush.bf16.msra.mxu0 %v2153
    %2362 = vmatpush.bf16.msra.mxu0 %v2149
    %2363 = vmatpush.bf16.msra.mxu0 %v2145
    %2364 = vmatpush.bf16.msra.mxu0 %v2141
    %2365 = vmatmul.bf16.gmra.mxu0 %v2355
    %v2366 = vpop.f32.mrf.mxu0
    %v2367 = vadd.f32 0.0, %v2366
    %v2368 = vpop.f32.mrf.mxu0
    %2369 = vdwg.mxu0
    %2370 = vmatpush.bf16.msra.mxu0 %v2170
    %2371 = vmatpush.bf16.msra.mxu0 %v2166
    %2372 = vmatpush.bf16.msra.mxu0 %v2162
    %2373 = vmatpush.bf16.msra.mxu0 %v2158
    %2374 = vmatpush.bf16.msra.mxu0 %v2154
    %2375 = vmatpush.bf16.msra.mxu0 %v2150
    %2376 = vmatpush.bf16.msra.mxu0 %v2146
    %2377 = vmatpush.bf16.msra.mxu0 %v2142
    %2378 = vmatmul.bf16.gmra.mxu0 %v2355
    %v2379 = vpop.f32.mrf.mxu0
    %v2380 = vadd.f32 0.0, %v2379
    %v2381 = vpop.f32.mrf.mxu0
    %2382 = vdwg.mxu0
    %2383 = vmatpush.bf16.msra.mxu0 %v2171
    %2384 = vmatpush.bf16.msra.mxu0 %v2167
    %2385 = vmatpush.bf16.msra.mxu0 %v2163
    %2386 = vmatpush.bf16.msra.mxu0 %v2159
    %2387 = vmatpush.bf16.msra.mxu0 %v2155
    %2388 = vmatpush.bf16.msra.mxu0 %v2151
    %2389 = vmatpush.bf16.msra.mxu0 %v2147
    %2390 = vmatpush.bf16.msra.mxu0 %v2143
    %2391 = vmatmul.bf16.gmra.mxu0 %v2355
    %v2392 = vpop.f32.mrf.mxu0
    %v2393 = vadd.f32 0.0, %v2392
    %v2394 = vpop.f32.mrf.mxu0
    %2395 = vdwg.mxu0
    %2396 = vmatpush.bf16.msra.mxu0 %v2172
    %2397 = vmatpush.bf16.msra.mxu0 %v2168
    %2398 = vmatpush.bf16.msra.mxu0 %v2164
    %2399 = vmatpush.bf16.msra.mxu0 %v2160
    %2400 = vmatpush.bf16.msra.mxu0 %v2156
    %2401 = vmatpush.bf16.msra.mxu0 %v2152
    %2402 = vmatpush.bf16.msra.mxu0 %v2148
    %2403 = vmatpush.bf16.msra.mxu0 %v2144
    %2404 = vmatmul.bf16.gmra.mxu0 %v2355
    %v2405 = vpop.f32.mrf.mxu0
    %v2406 = vadd.f32 0.0, %v2405
    %v2407 = vpop.f32.mrf.mxu0
    %2408 = vdwg.mxu0
    %v2413 = vrot.slane %v2367, 2
    %v2414 = vrot.slane %v2380, 2
    %v2415 = vrot.slane %v2393, 2
    %v2416 = vrot.slane %v2406, 2
    %v2421 = vadd.f32 %v2347, %v2413
    %v2422 = vadd.f32 %v2348, %v2414
    %v2423 = vadd.f32 %v2349, %v2415
    %v2424 = vadd.f32 %v2350, %v2416
    %v2425 = vxor.u32 %v2421, 2147483648
    %v2426 = vmul.f32 %v2425, 1.442695
    %v2427 = vpow.pop %v2426
    %v2428 = vadd.f32 %v2427, 1.0
    %v2429 = vrcp.pop %v2428
    %v2430 = vmul.f32 %v2428, %v2429
    %v2431 = vsub.f32 1.0, %v2430
    %v2432 = vmul.f32 %v2429, %v2431
    %v2433 = vadd.f32 %v2429, %v2432
    %vm2434 = vweird.f32 %v2428
    %vm2435 = vweird.f32 %v2429
    %vm2436 = vmor %vm2434, %vm2435
    %v2437 = vsel %vm2436, %v2429, %v2433
    %v2438 = vand.u32 2147483647, %v2428
    %vm2439 = vcmp.eq.f32.partialorder %v2438, 8.507059e+37
    %v2440 = vand.u32 %v2428, 2147483648
    %v2441 = vor.u32 1.1754944e-38, %v2440
    %v2442 = vsel %vm2439, %v2441, %v2437
    %v2443 = vmul.f32 1.0, %v2442
    %v2444 = vxor.u32 %v2422, 2147483648
    %v2445 = vmul.f32 %v2444, 1.442695
    %v2446 = vpow.pop %v2445
    %v2447 = vadd.f32 %v2446, 1.0
    %v2448 = vrcp.pop %v2447
    %v2449 = vmul.f32 %v2447, %v2448
    %v2450 = vsub.f32 1.0, %v2449
    %v2451 = vmul.f32 %v2448, %v2450
    %v2452 = vadd.f32 %v2448, %v2451
    %vm2453 = vweird.f32 %v2447
    %vm2454 = vweird.f32 %v2448
    %vm2455 = vmor %vm2453, %vm2454
    %v2456 = vsel %vm2455, %v2448, %v2452
    %v2457 = vand.u32 2147483647, %v2447
    %vm2458 = vcmp.eq.f32.partialorder %v2457, 8.507059e+37
    %v2459 = vand.u32 %v2447, 2147483648
    %v2460 = vor.u32 1.1754944e-38, %v2459
    %v2461 = vsel %vm2458, %v2460, %v2456
    %v2462 = vmul.f32 1.0, %v2461
    %v2463 = vtanh.pop %v2423
    %v2464 = vxor.u32 %v2424, 2147483648
    %v2465 = vmul.f32 %v2464, 1.442695
    %v2466 = vpow.pop %v2465
    %v2467 = vadd.f32 %v2466, 1.0
    %v2468 = vrcp.pop %v2467
    %v2469 = vmul.f32 %v2467, %v2468
    %v2470 = vsub.f32 1.0, %v2469
    %v2471 = vmul.f32 %v2468, %v2470
    %v2472 = vadd.f32 %v2468, %v2471
    %vm2473 = vweird.f32 %v2467
    %vm2474 = vweird.f32 %v2468
    %vm2475 = vmor %vm2473, %vm2474
    %v2476 = vsel %vm2475, %v2468, %v2472
    %v2477 = vand.u32 2147483647, %v2467
    %vm2478 = vcmp.eq.f32.partialorder %v2477, 8.507059e+37
    %v2479 = vand.u32 %v2467, 2147483648
    %v2480 = vor.u32 1.1754944e-38, %v2479
    %v2481 = vsel %vm2478, %v2480, %v2476
    %v2482 = vmul.f32 1.0, %v2481
    %v2484 = vrot.slane %v2333, 1
    %v2486 = vmul.f32 %v2462, %v2484
    %v2487 = vmul.f32 %v2443, %v2463
    %v2488 = vadd.f32 %v2486, %v2487
    %v2489 = vtanh.pop %v2488
    %v2490 = vmul.f32 %v2482, %v2489
    %2491 = vst.msk [vmem:[%s2336 - $0x5] sm:$0x40] %vm865, %v2490
    %2492 = vst.msk [vmem:[%s2336] sm:$0x40] %vm867, %v2490
    %v2493 = vrot.slane %v1987, 5
    %v2494 = vrot.slane %v2000, 5
    %v2495 = vrot.slane %v2013, 5
    %v2496 = vrot.slane %v2026, 5
    %v2501 = vsel %vm111, %v1987, %v2493
    %v2502 = vsel %vm112, %v2000, %v2494
    %v2503 = vsel %vm113, %v2013, %v2495
    %v2504 = vsel %vm114, %v2026, %v2496
    %v2505 = vpack.c.bf16 %v2490, %v2490
    %v2507 = vrot.slane %v2505, 3
    %2509 = vmatpush.bf16.msra.mxu0 %v2169
    %2510 = vmatpush.bf16.msra.mxu0 %v2165
    %2511 = vmatpush.bf16.msra.mxu0 %v2161
    %2512 = vmatpush.bf16.msra.mxu0 %v2157
    %2513 = vmatpush.bf16.msra.mxu0 %v2153
    %2514 = vmatpush.bf16.msra.mxu0 %v2149
    %2515 = vmatpush.bf16.msra.mxu0 %v2145
    %2516 = vmatpush.bf16.msra.mxu0 %v2141
    %2517 = vmatmul.bf16.gmra.mxu0 %v2507
    %v2518 = vpop.f32.mrf.mxu0
    %v2519 = vadd.f32 0.0, %v2518
    %v2520 = vpop.f32.mrf.mxu0
    %2521 = vdwg.mxu0
    %2522 = vmatpush.bf16.msra.mxu0 %v2170
    %2523 = vmatpush.bf16.msra.mxu0 %v2166
    %2524 = vmatpush.bf16.msra.mxu0 %v2162
    %2525 = vmatpush.bf16.msra.mxu0 %v2158
    %2526 = vmatpush.bf16.msra.mxu0 %v2154
    %2527 = vmatpush.bf16.msra.mxu0 %v2150
    %2528 = vmatpush.bf16.msra.mxu0 %v2146
    %2529 = vmatpush.bf16.msra.mxu0 %v2142
    %2530 = vmatmul.bf16.gmra.mxu0 %v2507
    %v2531 = vpop.f32.mrf.mxu0
    %v2532 = vadd.f32 0.0, %v2531
    %v2533 = vpop.f32.mrf.mxu0
    %2534 = vdwg.mxu0
    %2535 = vmatpush.bf16.msra.mxu0 %v2171
    %2536 = vmatpush.bf16.msra.mxu0 %v2167
    %2537 = vmatpush.bf16.msra.mxu0 %v2163
    %2538 = vmatpush.bf16.msra.mxu0 %v2159
    %2539 = vmatpush.bf16.msra.mxu0 %v2155
    %2540 = vmatpush.bf16.msra.mxu0 %v2151
    %2541 = vmatpush.bf16.msra.mxu0 %v2147
    %2542 = vmatpush.bf16.msra.mxu0 %v2143
    %2543 = vmatmul.bf16.gmra.mxu0 %v2507
    %v2544 = vpop.f32.mrf.mxu0
    %v2545 = vadd.f32 0.0, %v2544
    %v2546 = vpop.f32.mrf.mxu0
    %2547 = vdwg.mxu0
    %2548 = vmatpush.bf16.msra.mxu0 %v2172
    %2549 = vmatpush.bf16.msra.mxu0 %v2168
    %2550 = vmatpush.bf16.msra.mxu0 %v2164
    %2551 = vmatpush.bf16.msra.mxu0 %v2160
    %2552 = vmatpush.bf16.msra.mxu0 %v2156
    %2553 = vmatpush.bf16.msra.mxu0 %v2152
    %2554 = vmatpush.bf16.msra.mxu0 %v2148
    %2555 = vmatpush.bf16.msra.mxu0 %v2144
    %2556 = vmatmul.bf16.gmra.mxu0 %v2507
    %v2557 = vpop.f32.mrf.mxu0
    %v2558 = vadd.f32 0.0, %v2557
    %v2559 = vpop.f32.mrf.mxu0
    %2560 = vdwg.mxu0
    %v2565 = vrot.slane %v2519, 3
    %v2566 = vrot.slane %v2532, 3
    %v2567 = vrot.slane %v2545, 3
    %v2568 = vrot.slane %v2558, 3
    %v2573 = vadd.f32 %v2501, %v2565
    %v2574 = vadd.f32 %v2502, %v2566
    %v2575 = vadd.f32 %v2503, %v2567
    %v2576 = vadd.f32 %v2504, %v2568
    %v2577 = vxor.u32 %v2573, 2147483648
    %v2578 = vmul.f32 %v2577, 1.442695
    %v2579 = vpow.pop %v2578
    %v2580 = vadd.f32 %v2579, 1.0
    %v2581 = vrcp.pop %v2580
    %v2582 = vmul.f32 %v2580, %v2581
    %v2583 = vsub.f32 1.0, %v2582
    %v2584 = vmul.f32 %v2581, %v2583
    %v2585 = vadd.f32 %v2581, %v2584
    %vm2586 = vweird.f32 %v2580
    %vm2587 = vweird.f32 %v2581
    %vm2588 = vmor %vm2586, %vm2587
    %v2589 = vsel %vm2588, %v2581, %v2585
    %v2590 = vand.u32 2147483647, %v2580
    %vm2591 = vcmp.eq.f32.partialorder %v2590, 8.507059e+37
    %v2592 = vand.u32 %v2580, 2147483648
    %v2593 = vor.u32 1.1754944e-38, %v2592
    %v2594 = vsel %vm2591, %v2593, %v2589
    %v2595 = vmul.f32 1.0, %v2594
    %v2596 = vxor.u32 %v2574, 2147483648
    %v2597 = vmul.f32 %v2596, 1.442695
    %v2598 = vpow.pop %v2597
    %v2599 = vadd.f32 %v2598, 1.0
    %v2600 = vrcp.pop %v2599
    %v2601 = vmul.f32 %v2599, %v2600
    %v2602 = vsub.f32 1.0, %v2601
    %v2603 = vmul.f32 %v2600, %v2602
    %v2604 = vadd.f32 %v2600, %v2603
    %vm2605 = vweird.f32 %v2599
    %vm2606 = vweird.f32 %v2600
    %vm2607 = vmor %vm2605, %vm2606
    %v2608 = vsel %vm2607, %v2600, %v2604
    %v2609 = vand.u32 2147483647, %v2599
    %vm2610 = vcmp.eq.f32.partialorder %v2609, 8.507059e+37
    %v2611 = vand.u32 %v2599, 2147483648
    %v2612 = vor.u32 1.1754944e-38, %v2611
    %v2613 = vsel %vm2610, %v2612, %v2608
    %v2614 = vmul.f32 1.0, %v2613
    %v2615 = vtanh.pop %v2575
    %v2616 = vxor.u32 %v2576, 2147483648
    %v2617 = vmul.f32 %v2616, 1.442695
    %v2618 = vpow.pop %v2617
    %v2619 = vadd.f32 %v2618, 1.0
    %v2620 = vrcp.pop %v2619
    %v2621 = vmul.f32 %v2619, %v2620
    %v2622 = vsub.f32 1.0, %v2621
    %v2623 = vmul.f32 %v2620, %v2622
    %v2624 = vadd.f32 %v2620, %v2623
    %vm2625 = vweird.f32 %v2619
    %vm2626 = vweird.f32 %v2620
    %vm2627 = vmor %vm2625, %vm2626
    %v2628 = vsel %vm2627, %v2620, %v2624
    %v2629 = vand.u32 2147483647, %v2619
    %vm2630 = vcmp.eq.f32.partialorder %v2629, 8.507059e+37
    %v2631 = vand.u32 %v2619, 2147483648
    %v2632 = vor.u32 1.1754944e-38, %v2631
    %v2633 = vsel %vm2630, %v2632, %v2628
    %v2634 = vmul.f32 1.0, %v2633
    %v2636 = vrot.slane %v2488, 1
    %v2638 = vmul.f32 %v2614, %v2636
    %v2639 = vmul.f32 %v2595, %v2615
    %v2640 = vadd.f32 %v2638, %v2639
    %v2641 = vtanh.pop %v2640
    %v2642 = vmul.f32 %v2634, %v2641
    %2643 = vst.msk [vmem:[%s2336 - $0x3] sm:$0x20] %vm1019, %v2642
    %2644 = vst.msk [vmem:[%s2336] sm:$0x20] %vm1021, %v2642
    %v2645 = vrot.slane %v1987, 7
    %v2646 = vrot.slane %v2000, 7
    %v2647 = vrot.slane %v2013, 7
    %v2648 = vrot.slane %v2026, 7
    %v2653 = vsel %vm111, %v1987, %v2645
    %v2654 = vsel %vm112, %v2000, %v2646
    %v2655 = vsel %vm113, %v2013, %v2647
    %v2656 = vsel %vm114, %v2026, %v2648
    %v2657 = vpack.c.bf16 %v2642, %v2642
    %v2659 = vshrl.u32 %v2657, 16
    %v2661 = vrot.slane %v2659, 2
    %2663 = vmatpush.bf16.msra.mxu0 %v2169
    %2664 = vmatpush.bf16.msra.mxu0 %v2165
    %2665 = vmatpush.bf16.msra.mxu0 %v2161
    %2666 = vmatpush.bf16.msra.mxu0 %v2157
    %2667 = vmatpush.bf16.msra.mxu0 %v2153
    %2668 = vmatpush.bf16.msra.mxu0 %v2149
    %2669 = vmatpush.bf16.msra.mxu0 %v2145
    %2670 = vmatpush.bf16.msra.mxu0 %v2141
    %2671 = vmatmul.bf16.gmra.mxu0 %v2661
    %v2672 = vpop.f32.mrf.mxu0
    %v2673 = vadd.f32 0.0, %v2672
    %v2674 = vpop.f32.mrf.mxu0
    %2675 = vdwg.mxu0
    %2676 = vmatpush.bf16.msra.mxu0 %v2170
    %2677 = vmatpush.bf16.msra.mxu0 %v2166
    %2678 = vmatpush.bf16.msra.mxu0 %v2162
    %2679 = vmatpush.bf16.msra.mxu0 %v2158
    %2680 = vmatpush.bf16.msra.mxu0 %v2154
    %2681 = vmatpush.bf16.msra.mxu0 %v2150
    %2682 = vmatpush.bf16.msra.mxu0 %v2146
    %2683 = vmatpush.bf16.msra.mxu0 %v2142
    %2684 = vmatmul.bf16.gmra.mxu0 %v2661
    %v2685 = vpop.f32.mrf.mxu0
    %v2686 = vadd.f32 0.0, %v2685
    %v2687 = vpop.f32.mrf.mxu0
    %2688 = vdwg.mxu0
    %2689 = vmatpush.bf16.msra.mxu0 %v2171
    %2690 = vmatpush.bf16.msra.mxu0 %v2167
    %2691 = vmatpush.bf16.msra.mxu0 %v2163
    %2692 = vmatpush.bf16.msra.mxu0 %v2159
    %2693 = vmatpush.bf16.msra.mxu0 %v2155
    %2694 = vmatpush.bf16.msra.mxu0 %v2151
    %2695 = vmatpush.bf16.msra.mxu0 %v2147
    %2696 = vmatpush.bf16.msra.mxu0 %v2143
    %2697 = vmatmul.bf16.gmra.mxu0 %v2661
    %v2698 = vpop.f32.mrf.mxu0
    %v2699 = vadd.f32 0.0, %v2698
    %v2700 = vpop.f32.mrf.mxu0
    %2701 = vdwg.mxu0
    %2702 = vmatpush.bf16.msra.mxu0 %v2172
    %2703 = vmatpush.bf16.msra.mxu0 %v2168
    %2704 = vmatpush.bf16.msra.mxu0 %v2164
    %2705 = vmatpush.bf16.msra.mxu0 %v2160
    %2706 = vmatpush.bf16.msra.mxu0 %v2156
    %2707 = vmatpush.bf16.msra.mxu0 %v2152
    %2708 = vmatpush.bf16.msra.mxu0 %v2148
    %2709 = vmatpush.bf16.msra.mxu0 %v2144
    %2710 = vmatmul.bf16.gmra.mxu0 %v2661
    %v2711 = vpop.f32.mrf.mxu0
    %v2712 = vadd.f32 0.0, %v2711
    %v2713 = vpop.f32.mrf.mxu0
    %2714 = vdwg.mxu0
    %v2719 = vrot.slane %v2673, 4
    %v2720 = vrot.slane %v2686, 4
    %v2721 = vrot.slane %v2699, 4
    %v2722 = vrot.slane %v2712, 4
    %v2727 = vadd.f32 %v2653, %v2719
    %v2728 = vadd.f32 %v2654, %v2720
    %v2729 = vadd.f32 %v2655, %v2721
    %v2730 = vadd.f32 %v2656, %v2722
    %v2731 = vxor.u32 %v2727, 2147483648
    %v2732 = vmul.f32 %v2731, 1.442695
    %v2733 = vpow.pop %v2732
    %v2734 = vadd.f32 %v2733, 1.0
    %v2735 = vrcp.pop %v2734
    %v2736 = vmul.f32 %v2734, %v2735
    %v2737 = vsub.f32 1.0, %v2736
    %v2738 = vmul.f32 %v2735, %v2737
    %v2739 = vadd.f32 %v2735, %v2738
    %vm2740 = vweird.f32 %v2734
    %vm2741 = vweird.f32 %v2735
    %vm2742 = vmor %vm2740, %vm2741
    %v2743 = vsel %vm2742, %v2735, %v2739
    %v2744 = vand.u32 2147483647, %v2734
    %vm2745 = vcmp.eq.f32.partialorder %v2744, 8.507059e+37
    %v2746 = vand.u32 %v2734, 2147483648
    %v2747 = vor.u32 1.1754944e-38, %v2746
    %v2748 = vsel %vm2745, %v2747, %v2743
    %v2749 = vmul.f32 1.0, %v2748
    %v2750 = vxor.u32 %v2728, 2147483648
    %v2751 = vmul.f32 %v2750, 1.442695
    %v2752 = vpow.pop %v2751
    %v2753 = vadd.f32 %v2752, 1.0
    %v2754 = vrcp.pop %v2753
    %v2755 = vmul.f32 %v2753, %v2754
    %v2756 = vsub.f32 1.0, %v2755
    %v2757 = vmul.f32 %v2754, %v2756
    %v2758 = vadd.f32 %v2754, %v2757
    %vm2759 = vweird.f32 %v2753
    %vm2760 = vweird.f32 %v2754
    %vm2761 = vmor %vm2759, %vm2760
    %v2762 = vsel %vm2761, %v2754, %v2758
    %v2763 = vand.u32 2147483647, %v2753
    %vm2764 = vcmp.eq.f32.partialorder %v2763, 8.507059e+37
    %v2765 = vand.u32 %v2753, 2147483648
    %v2766 = vor.u32 1.1754944e-38, %v2765
    %v2767 = vsel %vm2764, %v2766, %v2762
    %v2768 = vmul.f32 1.0, %v2767
    %v2769 = vtanh.pop %v2729
    %v2770 = vxor.u32 %v2730, 2147483648
    %v2771 = vmul.f32 %v2770, 1.442695
    %v2772 = vpow.pop %v2771
    %v2773 = vadd.f32 %v2772, 1.0
    %v2774 = vrcp.pop %v2773
    %v2775 = vmul.f32 %v2773, %v2774
    %v2776 = vsub.f32 1.0, %v2775
    %v2777 = vmul.f32 %v2774, %v2776
    %v2778 = vadd.f32 %v2774, %v2777
    %vm2779 = vweird.f32 %v2773
    %vm2780 = vweird.f32 %v2774
    %vm2781 = vmor %vm2779, %vm2780
    %v2782 = vsel %vm2781, %v2774, %v2778
    %v2783 = vand.u32 2147483647, %v2773
    %vm2784 = vcmp.eq.f32.partialorder %v2783, 8.507059e+37
    %v2785 = vand.u32 %v2773, 2147483648
    %v2786 = vor.u32 1.1754944e-38, %v2785
    %v2787 = vsel %vm2784, %v2786, %v2782
    %v2788 = vmul.f32 1.0, %v2787
    %v2790 = vrot.slane %v2640, 1
    %v2792 = vmul.f32 %v2768, %v2790
    %v2793 = vmul.f32 %v2749, %v2769
    %v2794 = vadd.f32 %v2792, %v2793
    %v2795 = vtanh.pop %v2794
    %v2796 = vmul.f32 %v2788, %v2795
    %2797 = vst.msk [vmem:[%s2336 - $0x1] sm:$0x10] %vm1175, %v2796
    %2798 = vst.msk [vmem:[%s2336] sm:$0x10] %vm1177, %v2796
    %v2799 = vpack.c.bf16 %v2796, %v2796
    %v2801 = vrot.slane %v2799, 2
    %2803 = vmatpush.bf16.msra.mxu0 %v2169
    %2804 = vmatpush.bf16.msra.mxu0 %v2165
    %2805 = vmatpush.bf16.msra.mxu0 %v2161
    %2806 = vmatpush.bf16.msra.mxu0 %v2157
    %2807 = vmatpush.bf16.msra.mxu0 %v2153
    %2808 = vmatpush.bf16.msra.mxu0 %v2149
    %2809 = vmatpush.bf16.msra.mxu0 %v2145
    %2810 = vmatpush.bf16.msra.mxu0 %v2141
    %2811 = vmatmul.bf16.gmra.mxu0 %v2801
    %v2812 = vpop.f32.mrf.mxu0
    %v2813 = vadd.f32 0.0, %v2812
    %v2814 = vpop.f32.mrf.mxu0
    %2815 = vdwg.mxu0
    %2816 = vmatpush.bf16.msra.mxu0 %v2170
    %2817 = vmatpush.bf16.msra.mxu0 %v2166
    %2818 = vmatpush.bf16.msra.mxu0 %v2162
    %2819 = vmatpush.bf16.msra.mxu0 %v2158
    %2820 = vmatpush.bf16.msra.mxu0 %v2154
    %2821 = vmatpush.bf16.msra.mxu0 %v2150
    %2822 = vmatpush.bf16.msra.mxu0 %v2146
    %2823 = vmatpush.bf16.msra.mxu0 %v2142
    %2824 = vmatmul.bf16.gmra.mxu0 %v2801
    %v2825 = vpop.f32.mrf.mxu0
    %v2826 = vadd.f32 0.0, %v2825
    %v2827 = vpop.f32.mrf.mxu0
    %2828 = vdwg.mxu0
    %2829 = vmatpush.bf16.msra.mxu0 %v2171
    %2830 = vmatpush.bf16.msra.mxu0 %v2167
    %2831 = vmatpush.bf16.msra.mxu0 %v2163
    %2832 = vmatpush.bf16.msra.mxu0 %v2159
    %2833 = vmatpush.bf16.msra.mxu0 %v2155
    %2834 = vmatpush.bf16.msra.mxu0 %v2151
    %2835 = vmatpush.bf16.msra.mxu0 %v2147
    %2836 = vmatpush.bf16.msra.mxu0 %v2143
    %2837 = vmatmul.bf16.gmra.mxu0 %v2801
    %v2838 = vpop.f32.mrf.mxu0
    %v2839 = vadd.f32 0.0, %v2838
    %v2840 = vpop.f32.mrf.mxu0
    %2841 = vdwg.mxu0
    %2842 = vmatpush.bf16.msra.mxu0 %v2172
    %2843 = vmatpush.bf16.msra.mxu0 %v2168
    %2844 = vmatpush.bf16.msra.mxu0 %v2164
    %2845 = vmatpush.bf16.msra.mxu0 %v2160
    %2846 = vmatpush.bf16.msra.mxu0 %v2156
    %2847 = vmatpush.bf16.msra.mxu0 %v2152
    %2848 = vmatpush.bf16.msra.mxu0 %v2148
    %2849 = vmatpush.bf16.msra.mxu0 %v2144
    %2850 = vmatmul.bf16.gmra.mxu0 %v2801
    %v2851 = vpop.f32.mrf.mxu0
    %v2852 = vadd.f32 0.0, %v2851
    %v2853 = vpop.f32.mrf.mxu0
    %2854 = vdwg.mxu0
    %v2859 = vrot.slane %v2813, 5
    %v2860 = vrot.slane %v2826, 5
    %v2861 = vrot.slane %v2839, 5
    %v2862 = vrot.slane %v2852, 5
    %v2867 = vadd.f32 %v2041, %v2859
    %v2868 = vadd.f32 %v2042, %v2860
    %v2869 = vadd.f32 %v2043, %v2861
    %v2870 = vadd.f32 %v2044, %v2862
    %v2871 = vxor.u32 %v2867, 2147483648
    %v2872 = vmul.f32 %v2871, 1.442695
    %v2873 = vpow.pop %v2872
    %v2874 = vadd.f32 %v2873, 1.0
    %v2875 = vrcp.pop %v2874
    %v2876 = vmul.f32 %v2874, %v2875
    %v2877 = vsub.f32 1.0, %v2876
    %v2878 = vmul.f32 %v2875, %v2877
    %v2879 = vadd.f32 %v2875, %v2878
    %vm2880 = vweird.f32 %v2874
    %vm2881 = vweird.f32 %v2875
    %vm2882 = vmor %vm2880, %vm2881
    %v2883 = vsel %vm2882, %v2875, %v2879
    %v2884 = vand.u32 2147483647, %v2874
    %vm2885 = vcmp.eq.f32.partialorder %v2884, 8.507059e+37
    %v2886 = vand.u32 %v2874, 2147483648
    %v2887 = vor.u32 1.1754944e-38, %v2886
    %v2888 = vsel %vm2885, %v2887, %v2883
    %v2889 = vmul.f32 1.0, %v2888
    %v2890 = vxor.u32 %v2868, 2147483648
    %v2891 = vmul.f32 %v2890, 1.442695
    %v2892 = vpow.pop %v2891
    %v2893 = vadd.f32 %v2892, 1.0
    %v2894 = vrcp.pop %v2893
    %v2895 = vmul.f32 %v2893, %v2894
    %v2896 = vsub.f32 1.0, %v2895
    %v2897 = vmul.f32 %v2894, %v2896
    %v2898 = vadd.f32 %v2894, %v2897
    %vm2899 = vweird.f32 %v2893
    %vm2900 = vweird.f32 %v2894
    %vm2901 = vmor %vm2899, %vm2900
    %v2902 = vsel %vm2901, %v2894, %v2898
    %v2903 = vand.u32 2147483647, %v2893
    %vm2904 = vcmp.eq.f32.partialorder %v2903, 8.507059e+37
    %v2905 = vand.u32 %v2893, 2147483648
    %v2906 = vor.u32 1.1754944e-38, %v2905
    %v2907 = vsel %vm2904, %v2906, %v2902
    %v2908 = vmul.f32 1.0, %v2907
    %v2909 = vtanh.pop %v2869
    %v2910 = vxor.u32 %v2870, 2147483648
    %v2911 = vmul.f32 %v2910, 1.442695
    %v2912 = vpow.pop %v2911
    %v2913 = vadd.f32 %v2912, 1.0
    %v2914 = vrcp.pop %v2913
    %v2915 = vmul.f32 %v2913, %v2914
    %v2916 = vsub.f32 1.0, %v2915
    %v2917 = vmul.f32 %v2914, %v2916
    %v2918 = vadd.f32 %v2914, %v2917
    %vm2919 = vweird.f32 %v2913
    %vm2920 = vweird.f32 %v2914
    %vm2921 = vmor %vm2919, %vm2920
    %v2922 = vsel %vm2921, %v2914, %v2918
    %v2923 = vand.u32 2147483647, %v2913
    %vm2924 = vcmp.eq.f32.partialorder %v2923, 8.507059e+37
    %v2925 = vand.u32 %v2913, 2147483648
    %v2926 = vor.u32 1.1754944e-38, %v2925
    %v2927 = vsel %vm2924, %v2926, %v2922
    %v2928 = vmul.f32 1.0, %v2927
    %v2930 = vrot.slane %v2794, 1
    %v2932 = vmul.f32 %v2908, %v2930
    %v2933 = vmul.f32 %v2889, %v2909
    %v2934 = vadd.f32 %v2932, %v2933
    %v2935 = vtanh.pop %v2934
    %v2936 = vmul.f32 %v2928, %v2935
    %2937 = vst.msk [vmem:[%s2336 + $0x1] sm:$0x8] %vm1317, %v2936
    %2938 = vst.msk [vmem:[%s2336] sm:$0x8] %vm1319, %v2936
    %v2939 = vpack.c.bf16 %v2936, %v2936
    %v2941 = vshrl.u32 %v2939, 16
    %v2943 = vrot.slane %v2941, 1
    %2945 = vmatpush.bf16.msra.mxu0 %v2169
    %2946 = vmatpush.bf16.msra.mxu0 %v2165
    %2947 = vmatpush.bf16.msra.mxu0 %v2161
    %2948 = vmatpush.bf16.msra.mxu0 %v2157
    %2949 = vmatpush.bf16.msra.mxu0 %v2153
    %2950 = vmatpush.bf16.msra.mxu0 %v2149
    %2951 = vmatpush.bf16.msra.mxu0 %v2145
    %2952 = vmatpush.bf16.msra.mxu0 %v2141
    %2953 = vmatmul.bf16.gmra.mxu0 %v2943
    %v2954 = vpop.f32.mrf.mxu0
    %v2955 = vadd.f32 0.0, %v2954
    %v2956 = vpop.f32.mrf.mxu0
    %2957 = vdwg.mxu0
    %2958 = vmatpush.bf16.msra.mxu0 %v2170
    %2959 = vmatpush.bf16.msra.mxu0 %v2166
    %2960 = vmatpush.bf16.msra.mxu0 %v2162
    %2961 = vmatpush.bf16.msra.mxu0 %v2158
    %2962 = vmatpush.bf16.msra.mxu0 %v2154
    %2963 = vmatpush.bf16.msra.mxu0 %v2150
    %2964 = vmatpush.bf16.msra.mxu0 %v2146
    %2965 = vmatpush.bf16.msra.mxu0 %v2142
    %2966 = vmatmul.bf16.gmra.mxu0 %v2943
    %v2967 = vpop.f32.mrf.mxu0
    %v2968 = vadd.f32 0.0, %v2967
    %v2969 = vpop.f32.mrf.mxu0
    %2970 = vdwg.mxu0
    %2971 = vmatpush.bf16.msra.mxu0 %v2171
    %2972 = vmatpush.bf16.msra.mxu0 %v2167
    %2973 = vmatpush.bf16.msra.mxu0 %v2163
    %2974 = vmatpush.bf16.msra.mxu0 %v2159
    %2975 = vmatpush.bf16.msra.mxu0 %v2155
    %2976 = vmatpush.bf16.msra.mxu0 %v2151
    %2977 = vmatpush.bf16.msra.mxu0 %v2147
    %2978 = vmatpush.bf16.msra.mxu0 %v2143
    %2979 = vmatmul.bf16.gmra.mxu0 %v2943
    %v2980 = vpop.f32.mrf.mxu0
    %v2981 = vadd.f32 0.0, %v2980
    %v2982 = vpop.f32.mrf.mxu0
    %2983 = vdwg.mxu0
    %2984 = vmatpush.bf16.msra.mxu0 %v2172
    %2985 = vmatpush.bf16.msra.mxu0 %v2168
    %2986 = vmatpush.bf16.msra.mxu0 %v2164
    %2987 = vmatpush.bf16.msra.mxu0 %v2160
    %2988 = vmatpush.bf16.msra.mxu0 %v2156
    %2989 = vmatpush.bf16.msra.mxu0 %v2152
    %2990 = vmatpush.bf16.msra.mxu0 %v2148
    %2991 = vmatpush.bf16.msra.mxu0 %v2144
    %2992 = vmatmul.bf16.gmra.mxu0 %v2943
    %v2993 = vpop.f32.mrf.mxu0
    %v2994 = vadd.f32 0.0, %v2993
    %v2995 = vpop.f32.mrf.mxu0
    %2996 = vdwg.mxu0
    %v3001 = vrot.slane %v2955, 6
    %v3002 = vrot.slane %v2968, 6
    %v3003 = vrot.slane %v2981, 6
    %v3004 = vrot.slane %v2994, 6
    %v3009 = vadd.f32 %v2347, %v3001
    %v3010 = vadd.f32 %v2348, %v3002
    %v3011 = vadd.f32 %v2349, %v3003
    %v3012 = vadd.f32 %v2350, %v3004
    %v3013 = vxor.u32 %v3009, 2147483648
    %v3014 = vmul.f32 %v3013, 1.442695
    %v3015 = vpow.pop %v3014
    %v3016 = vadd.f32 %v3015, 1.0
    %v3017 = vrcp.pop %v3016
    %v3018 = vmul.f32 %v3016, %v3017
    %v3019 = vsub.f32 1.0, %v3018
    %v3020 = vmul.f32 %v3017, %v3019
    %v3021 = vadd.f32 %v3017, %v3020
    %vm3022 = vweird.f32 %v3016
    %vm3023 = vweird.f32 %v3017
    %vm3024 = vmor %vm3022, %vm3023
    %v3025 = vsel %vm3024, %v3017, %v3021
    %v3026 = vand.u32 2147483647, %v3016
    %vm3027 = vcmp.eq.f32.partialorder %v3026, 8.507059e+37
    %v3028 = vand.u32 %v3016, 2147483648
    %v3029 = vor.u32 1.1754944e-38, %v3028
    %v3030 = vsel %vm3027, %v3029, %v3025
    %v3031 = vmul.f32 1.0, %v3030
    %v3032 = vxor.u32 %v3010, 2147483648
    %v3033 = vmul.f32 %v3032, 1.442695
    %v3034 = vpow.pop %v3033
    %v3035 = vadd.f32 %v3034, 1.0
    %v3036 = vrcp.pop %v3035
    %v3037 = vmul.f32 %v3035, %v3036
    %v3038 = vsub.f32 1.0, %v3037
    %v3039 = vmul.f32 %v3036, %v3038
    %v3040 = vadd.f32 %v3036, %v3039
    %vm3041 = vweird.f32 %v3035
    %vm3042 = vweird.f32 %v3036
    %vm3043 = vmor %vm3041, %vm3042
    %v3044 = vsel %vm3043, %v3036, %v3040
    %v3045 = vand.u32 2147483647, %v3035
    %vm3046 = vcmp.eq.f32.partialorder %v3045, 8.507059e+37
    %v3047 = vand.u32 %v3035, 2147483648
    %v3048 = vor.u32 1.1754944e-38, %v3047
    %v3049 = vsel %vm3046, %v3048, %v3044
    %v3050 = vmul.f32 1.0, %v3049
    %v3051 = vtanh.pop %v3011
    %v3052 = vxor.u32 %v3012, 2147483648
    %v3053 = vmul.f32 %v3052, 1.442695
    %v3054 = vpow.pop %v3053
    %v3055 = vadd.f32 %v3054, 1.0
    %v3056 = vrcp.pop %v3055
    %v3057 = vmul.f32 %v3055, %v3056
    %v3058 = vsub.f32 1.0, %v3057
    %v3059 = vmul.f32 %v3056, %v3058
    %v3060 = vadd.f32 %v3056, %v3059
    %vm3061 = vweird.f32 %v3055
    %vm3062 = vweird.f32 %v3056
    %vm3063 = vmor %vm3061, %vm3062
    %v3064 = vsel %vm3063, %v3056, %v3060
    %v3065 = vand.u32 2147483647, %v3055
    %vm3066 = vcmp.eq.f32.partialorder %v3065, 8.507059e+37
    %v3067 = vand.u32 %v3055, 2147483648
    %v3068 = vor.u32 1.1754944e-38, %v3067
    %v3069 = vsel %vm3066, %v3068, %v3064
    %v3070 = vmul.f32 1.0, %v3069
    %v3072 = vrot.slane %v2934, 1
    %v3074 = vmul.f32 %v3050, %v3072
    %v3075 = vmul.f32 %v3031, %v3051
    %v3076 = vadd.f32 %v3074, %v3075
    %v3077 = vtanh.pop %v3076
    %v3078 = vmul.f32 %v3070, %v3077
    %3079 = vst.msk [vmem:[%s2336 + $0x3] sm:$0x4] %vm1461, %v3078
    %3080 = vst.msk [vmem:[%s2336] sm:$0x4] %vm1463, %v3078
    %v3081 = vpack.c.bf16 %v3078, %v3078
    %v3083 = vrot.slane %v3081, 1
    %3085 = vmatpush.bf16.msra.mxu0 %v2169
    %3086 = vmatpush.bf16.msra.mxu0 %v2165
    %3087 = vmatpush.bf16.msra.mxu0 %v2161
    %3088 = vmatpush.bf16.msra.mxu0 %v2157
    %3089 = vmatpush.bf16.msra.mxu0 %v2153
    %3090 = vmatpush.bf16.msra.mxu0 %v2149
    %3091 = vmatpush.bf16.msra.mxu0 %v2145
    %3092 = vmatpush.bf16.msra.mxu0 %v2141
    %3093 = vmatmul.bf16.gmra.mxu0 %v3083
    %v3094 = vpop.f32.mrf.mxu0
    %v3095 = vadd.f32 0.0, %v3094
    %v3096 = vpop.f32.mrf.mxu0
    %3097 = vdwg.mxu0
    %3098 = vmatpush.bf16.msra.mxu0 %v2170
    %3099 = vmatpush.bf16.msra.mxu0 %v2166
    %3100 = vmatpush.bf16.msra.mxu0 %v2162
    %3101 = vmatpush.bf16.msra.mxu0 %v2158
    %3102 = vmatpush.bf16.msra.mxu0 %v2154
    %3103 = vmatpush.bf16.msra.mxu0 %v2150
    %3104 = vmatpush.bf16.msra.mxu0 %v2146
    %3105 = vmatpush.bf16.msra.mxu0 %v2142
    %3106 = vmatmul.bf16.gmra.mxu0 %v3083
    %v3107 = vpop.f32.mrf.mxu0
    %v3108 = vadd.f32 0.0, %v3107
    %v3109 = vpop.f32.mrf.mxu0
    %3110 = vdwg.mxu0
    %3111 = vmatpush.bf16.msra.mxu0 %v2171
    %3112 = vmatpush.bf16.msra.mxu0 %v2167
    %3113 = vmatpush.bf16.msra.mxu0 %v2163
    %3114 = vmatpush.bf16.msra.mxu0 %v2159
    %3115 = vmatpush.bf16.msra.mxu0 %v2155
    %3116 = vmatpush.bf16.msra.mxu0 %v2151
    %3117 = vmatpush.bf16.msra.mxu0 %v2147
    %3118 = vmatpush.bf16.msra.mxu0 %v2143
    %3119 = vmatmul.bf16.gmra.mxu0 %v3083
    %v3120 = vpop.f32.mrf.mxu0
    %v3121 = vadd.f32 0.0, %v3120
    %v3122 = vpop.f32.mrf.mxu0
    %3123 = vdwg.mxu0
    %3124 = vmatpush.bf16.msra.mxu0 %v2172
    %3125 = vmatpush.bf16.msra.mxu0 %v2168
    %3126 = vmatpush.bf16.msra.mxu0 %v2164
    %3127 = vmatpush.bf16.msra.mxu0 %v2160
    %3128 = vmatpush.bf16.msra.mxu0 %v2156
    %3129 = vmatpush.bf16.msra.mxu0 %v2152
    %3130 = vmatpush.bf16.msra.mxu0 %v2148
    %3131 = vmatpush.bf16.msra.mxu0 %v2144
    %3132 = vmatmul.bf16.gmra.mxu0 %v3083
    %v3133 = vpop.f32.mrf.mxu0
    %v3134 = vadd.f32 0.0, %v3133
    %v3135 = vpop.f32.mrf.mxu0
    %3136 = vdwg.mxu0
    %v3141 = vrot.slane %v3095, 7
    %v3142 = vrot.slane %v3108, 7
    %v3143 = vrot.slane %v3121, 7
    %v3144 = vrot.slane %v3134, 7
    %v3149 = vadd.f32 %v2501, %v3141
    %v3150 = vadd.f32 %v2502, %v3142
    %v3151 = vadd.f32 %v2503, %v3143
    %v3152 = vadd.f32 %v2504, %v3144
    %v3153 = vxor.u32 %v3149, 2147483648
    %v3154 = vmul.f32 %v3153, 1.442695
    %v3155 = vpow.pop %v3154
    %v3156 = vadd.f32 %v3155, 1.0
    %v3157 = vrcp.pop %v3156
    %v3158 = vmul.f32 %v3156, %v3157
    %v3159 = vsub.f32 1.0, %v3158
    %v3160 = vmul.f32 %v3157, %v3159
    %v3161 = vadd.f32 %v3157, %v3160
    %vm3162 = vweird.f32 %v3156
    %vm3163 = vweird.f32 %v3157
    %vm3164 = vmor %vm3162, %vm3163
    %v3165 = vsel %vm3164, %v3157, %v3161
    %v3166 = vand.u32 2147483647, %v3156
    %vm3167 = vcmp.eq.f32.partialorder %v3166, 8.507059e+37
    %v3168 = vand.u32 %v3156, 2147483648
    %v3169 = vor.u32 1.1754944e-38, %v3168
    %v3170 = vsel %vm3167, %v3169, %v3165
    %v3171 = vmul.f32 1.0, %v3170
    %v3172 = vxor.u32 %v3150, 2147483648
    %v3173 = vmul.f32 %v3172, 1.442695
    %v3174 = vpow.pop %v3173
    %v3175 = vadd.f32 %v3174, 1.0
    %v3176 = vrcp.pop %v3175
    %v3177 = vmul.f32 %v3175, %v3176
    %v3178 = vsub.f32 1.0, %v3177
    %v3179 = vmul.f32 %v3176, %v3178
    %v3180 = vadd.f32 %v3176, %v3179
    %vm3181 = vweird.f32 %v3175
    %vm3182 = vweird.f32 %v3176
    %vm3183 = vmor %vm3181, %vm3182
    %v3184 = vsel %vm3183, %v3176, %v3180
    %v3185 = vand.u32 2147483647, %v3175
    %vm3186 = vcmp.eq.f32.partialorder %v3185, 8.507059e+37
    %v3187 = vand.u32 %v3175, 2147483648
    %v3188 = vor.u32 1.1754944e-38, %v3187
    %v3189 = vsel %vm3186, %v3188, %v3184
    %v3190 = vmul.f32 1.0, %v3189
    %v3191 = vtanh.pop %v3151
    %v3192 = vxor.u32 %v3152, 2147483648
    %v3193 = vmul.f32 %v3192, 1.442695
    %v3194 = vpow.pop %v3193
    %v3195 = vadd.f32 %v3194, 1.0
    %v3196 = vrcp.pop %v3195
    %v3197 = vmul.f32 %v3195, %v3196
    %v3198 = vsub.f32 1.0, %v3197
    %v3199 = vmul.f32 %v3196, %v3198
    %v3200 = vadd.f32 %v3196, %v3199
    %vm3201 = vweird.f32 %v3195
    %vm3202 = vweird.f32 %v3196
    %vm3203 = vmor %vm3201, %vm3202
    %v3204 = vsel %vm3203, %v3196, %v3200
    %v3205 = vand.u32 2147483647, %v3195
    %vm3206 = vcmp.eq.f32.partialorder %v3205, 8.507059e+37
    %v3207 = vand.u32 %v3195, 2147483648
    %v3208 = vor.u32 1.1754944e-38, %v3207
    %v3209 = vsel %vm3206, %v3208, %v3204
    %v3210 = vmul.f32 1.0, %v3209
    %v3212 = vrot.slane %v3076, 1
    %v3214 = vmul.f32 %v3190, %v3212
    %v3215 = vmul.f32 %v3171, %v3191
    %v3216 = vadd.f32 %v3214, %v3215
    %v3217 = vtanh.pop %v3216
    %v3218 = vmul.f32 %v3210, %v3217
    %3219 = vst.msk [vmem:[%s2336 + $0x5] sm:$0x2] %vm1603, %v3218
    %3220 = vst.msk [vmem:[%s2336] sm:$0x2] %vm1605, %v3218
    %v3221 = vpack.c.bf16 %v3218, %v3218
    %v3223 = vshrl.u32 %v3221, 16
    %3226 = vmatpush.bf16.msra.mxu0 %v2169
    %3227 = vmatpush.bf16.msra.mxu0 %v2165
    %3228 = vmatpush.bf16.msra.mxu0 %v2161
    %3229 = vmatpush.bf16.msra.mxu0 %v2157
    %3230 = vmatpush.bf16.msra.mxu0 %v2153
    %3231 = vmatpush.bf16.msra.mxu0 %v2149
    %3232 = vmatpush.bf16.msra.mxu0 %v2145
    %3233 = vmatpush.bf16.msra.mxu0 %v2141
    %3234 = vmatmul.bf16.gmra.mxu0 %v3223
    %v3235 = vpop.f32.mrf.mxu0
    %v3236 = vadd.f32 0.0, %v3235
    %v3237 = vpop.f32.mrf.mxu0
    %3238 = vdwg.mxu0
    %3239 = vmatpush.bf16.msra.mxu0 %v2170
    %3240 = vmatpush.bf16.msra.mxu0 %v2166
    %3241 = vmatpush.bf16.msra.mxu0 %v2162
    %3242 = vmatpush.bf16.msra.mxu0 %v2158
    %3243 = vmatpush.bf16.msra.mxu0 %v2154
    %3244 = vmatpush.bf16.msra.mxu0 %v2150
    %3245 = vmatpush.bf16.msra.mxu0 %v2146
    %3246 = vmatpush.bf16.msra.mxu0 %v2142
    %3247 = vmatmul.bf16.gmra.mxu0 %v3223
    %v3248 = vpop.f32.mrf.mxu0
    %v3249 = vadd.f32 0.0, %v3248
    %v3250 = vpop.f32.mrf.mxu0
    %3251 = vdwg.mxu0
    %3252 = vmatpush.bf16.msra.mxu0 %v2171
    %3253 = vmatpush.bf16.msra.mxu0 %v2167
    %3254 = vmatpush.bf16.msra.mxu0 %v2163
    %3255 = vmatpush.bf16.msra.mxu0 %v2159
    %3256 = vmatpush.bf16.msra.mxu0 %v2155
    %3257 = vmatpush.bf16.msra.mxu0 %v2151
    %3258 = vmatpush.bf16.msra.mxu0 %v2147
    %3259 = vmatpush.bf16.msra.mxu0 %v2143
    %3260 = vmatmul.bf16.gmra.mxu0 %v3223
    %v3261 = vpop.f32.mrf.mxu0
    %v3262 = vadd.f32 0.0, %v3261
    %v3263 = vpop.f32.mrf.mxu0
    %3264 = vdwg.mxu0
    %3265 = vmatpush.bf16.msra.mxu0 %v2172
    %3266 = vmatpush.bf16.msra.mxu0 %v2168
    %3267 = vmatpush.bf16.msra.mxu0 %v2164
    %3268 = vmatpush.bf16.msra.mxu0 %v2160
    %3269 = vmatpush.bf16.msra.mxu0 %v2156
    %3270 = vmatpush.bf16.msra.mxu0 %v2152
    %3271 = vmatpush.bf16.msra.mxu0 %v2148
    %3272 = vmatpush.bf16.msra.mxu0 %v2144
    %3273 = vmatmul.bf16.gmra.mxu0 %v3223
    %v3274 = vpop.f32.mrf.mxu0
    %v3275 = vadd.f32 0.0, %v3274
    %v3276 = vpop.f32.mrf.mxu0
    %3277 = vdwg.mxu0
    %v3278 = vadd.f32 %v2653, %v3236
    %v3279 = vadd.f32 %v2654, %v3249
    %v3280 = vadd.f32 %v2655, %v3262
    %v3281 = vadd.f32 %v2656, %v3275
    %v3282 = vxor.u32 %v3278, 2147483648
    %v3283 = vmul.f32 %v3282, 1.442695
    %v3284 = vpow.pop %v3283
    %v3285 = vadd.f32 %v3284, 1.0
    %v3286 = vrcp.pop %v3285
    %v3287 = vmul.f32 %v3285, %v3286
    %v3288 = vsub.f32 1.0, %v3287
    %v3289 = vmul.f32 %v3286, %v3288
    %v3290 = vadd.f32 %v3286, %v3289
    %vm3291 = vweird.f32 %v3285
    %vm3292 = vweird.f32 %v3286
    %vm3293 = vmor %vm3291, %vm3292
    %v3294 = vsel %vm3293, %v3286, %v3290
    %v3295 = vand.u32 2147483647, %v3285
    %vm3296 = vcmp.eq.f32.partialorder %v3295, 8.507059e+37
    %v3297 = vand.u32 %v3285, 2147483648
    %v3298 = vor.u32 1.1754944e-38, %v3297
    %v3299 = vsel %vm3296, %v3298, %v3294
    %v3300 = vmul.f32 1.0, %v3299
    %v3301 = vxor.u32 %v3279, 2147483648
    %v3302 = vmul.f32 %v3301, 1.442695
    %v3303 = vpow.pop %v3302
    %v3304 = vadd.f32 %v3303, 1.0
    %v3305 = vrcp.pop %v3304
    %v3306 = vmul.f32 %v3304, %v3305
    %v3307 = vsub.f32 1.0, %v3306
    %v3308 = vmul.f32 %v3305, %v3307
    %v3309 = vadd.f32 %v3305, %v3308
    %vm3310 = vweird.f32 %v3304
    %vm3311 = vweird.f32 %v3305
    %vm3312 = vmor %vm3310, %vm3311
    %v3313 = vsel %vm3312, %v3305, %v3309
    %v3314 = vand.u32 2147483647, %v3304
    %vm3315 = vcmp.eq.f32.partialorder %v3314, 8.507059e+37
    %v3316 = vand.u32 %v3304, 2147483648
    %v3317 = vor.u32 1.1754944e-38, %v3316
    %v3318 = vsel %vm3315, %v3317, %v3313
    %v3319 = vmul.f32 1.0, %v3318
    %v3320 = vtanh.pop %v3280
    %v3321 = vxor.u32 %v3281, 2147483648
    %v3322 = vmul.f32 %v3321, 1.442695
    %v3323 = vpow.pop %v3322
    %v3324 = vadd.f32 %v3323, 1.0
    %v3325 = vrcp.pop %v3324
    %v3326 = vmul.f32 %v3324, %v3325
    %v3327 = vsub.f32 1.0, %v3326
    %v3328 = vmul.f32 %v3325, %v3327
    %v3329 = vadd.f32 %v3325, %v3328
    %vm3330 = vweird.f32 %v3324
    %vm3331 = vweird.f32 %v3325
    %vm3332 = vmor %vm3330, %vm3331
    %v3333 = vsel %vm3332, %v3325, %v3329
    %v3334 = vand.u32 2147483647, %v3324
    %vm3335 = vcmp.eq.f32.partialorder %v3334, 8.507059e+37
    %v3336 = vand.u32 %v3324, 2147483648
    %v3337 = vor.u32 1.1754944e-38, %v3336
    %v3338 = vsel %vm3335, %v3337, %v3333
    %v3339 = vmul.f32 1.0, %v3338
    %v3341 = vrot.slane %v3216, 1
    %v3343 = vmul.f32 %v3319, %v3341
    %v3344 = vmul.f32 %v3300, %v3320
    %v3345 = vadd.f32 %v3343, %v3344
    %v3346 = vtanh.pop %v3345
    %v3347 = vmul.f32 %v3339, %v3346
    %3348 = vst.msk [vmem:[%s2336 + $0x7] sm:$0x1] %vm1734, %v3347
    %3349 = vst.msk [vmem:[%s2336] sm:$0x1] %vm1736, %v3347
    %v3350 = vld [vmem:[%s2336] sm:$0xff]
    %v3351 = vadd.f32 %v3350, %v57
    %v3352 = vld [vmem:[%s4] sm:$0x1]
    %v3353 = vld [vmem:[%s4 + $0x1] sm:$0x1]
    %v3354 = vld [vmem:[%s4 + $0x2] sm:$0x1]
    %v3355 = vld [vmem:[%s4 + $0x3] sm:$0x1]
    %3356 = vst [vmem:[#allocation8] sm:$0x1] %v3352
    %3357 = vst [vmem:[#allocation8 + $0x18] sm:$0x1] %v3353
    %3358 = vst [vmem:[#allocation8 + $0x30] sm:$0x1] %v3354
    %3359 = vst [vmem:[#allocation8 + $0x48] sm:$0x1] %v3355
    %3360 = vst [vmem:[#allocation8 + $0x1] sm:$0xff] %v3351
    %3361 = vst [vmem:[#allocation8 + $0x19] sm:$0xff] %v3351
    %3362 = vst [vmem:[#allocation8 + $0x31] sm:$0xff] %v3351
    %3363 = vst [vmem:[#allocation8 + $0x49] sm:$0xff] %v3351
    %v3364 = vld [vmem:[%s5] sm:$0xff]
    %v3365 = vld [vmem:[%s5 + $0x8] sm:$0x7f]
    %v3366 = vld [vmem:[%s5 + $0x10] sm:$0xff]
    %v3367 = vld [vmem:[%s5 + $0x18] sm:$0x7f]
    %v3368 = vld [vmem:[%s5 + $0x20] sm:$0xff]
    %v3369 = vld [vmem:[%s5 + $0x28] sm:$0x7f]
    %v3370 = vld [vmem:[%s5 + $0x30] sm:$0xff]
    %v3371 = vld [vmem:[%s5 + $0x38] sm:$0x7f]
    %3372 = vst [vmem:[#allocation8 + $0x9] sm:$0xff] %v3364
    %3373 = vst [vmem:[#allocation8 + $0x11] sm:$0x7f] %v3365
    %3374 = vst [vmem:[#allocation8 + $0x21] sm:$0xff] %v3366
    %3375 = vst [vmem:[#allocation8 + $0x29] sm:$0x7f] %v3367
    %3376 = vst [vmem:[#allocation8 + $0x39] sm:$0xff] %v3368
    %3377 = vst [vmem:[#allocation8 + $0x41] sm:$0x7f] %v3369
    %3378 = vst [vmem:[#allocation8 + $0x51] sm:$0xff] %v3370
    %3379 = vst [vmem:[#allocation8 + $0x59] sm:$0x7f] %v3371
    // Predicated region
    $region34: #{tpu_custom_call.1} parent=1 // pred_check
      _
    $region35: #{tpu_custom_call.1} parent=1 // pred_check_branch
      %3381 = sbr.rel (0) target = $region37
    $region36: #{tpu_custom_call.1} parent=1 // pred_region
      %3383 = vsyncadd [#allocation5], 0
      %s3384 = sshll.u32 [#allocation8], 4
      %s3385 = int_to_ptr.vmem [resolvable:$true] %s3384
      %s3386 = sshll.u32 %s6, 4
      %s3387 = int_to_ptr.hbm [resolvable:$true] %s3386
      %3392 = dma.vmem_to_hbm [thread:$0]  %s3385, 1536, %s3387, [#allocation5], 128, 128, 8
    $region37: #{tpu_custom_call.1} parent=1 // pred_fallthru
      _
    // Predicated region
    $region38: #{tpu_custom_call.1} parent=1 // pred_check
      _
    $region39: #{tpu_custom_call.1} parent=1 // pred_check_branch
      %3394 = sbr.rel (0) target = $region41
    $region40: #{tpu_custom_call.1} parent=1 // pred_region
      %3396 = dma.done [#allocation5], 1536
    $region41: #{tpu_custom_call.1} parent=1 // pred_fallthru
      _
    %3397 = vsyncpa [#allocation4], 1
    %3398 = vsyncpa [#allocation7], 1
    %3399 = vsyncpa [#allocation5], 1

</llo_original>
